<compile_context>
chip_gen: v7x
topology: tpu7x:2x2x1
jax: 0.10.0
libtpu: 0.0.40
codegen_flags: <defaults>
</compile_context>

<pallas_src>
import jax
import jax.numpy as jnp
import numpy as np
from jax.experimental import pallas as pl
from jax.experimental.pallas import tpu as pltpu

EPS = 1e-4


def _elu(x):
    return jnp.where(x > 0, x, jnp.exp(jnp.minimum(x, 0.0)) - 1.0)


# ----------------------------- fused Pallas kernel -----------------------------

def _make_res_up_kernel(*, K, Ho, Wo, M, Ch, Cout):
    """Whole ResUp block in one kernel; layout is (channels, N*Ho*Wo positions)."""

    def kernel(pt_ref, w31_ref, b31_ref, g1_ref, bt1_ref,
               w2_ref, b2_ref, g2_ref, bt2_ref, xy_ref, o_ref):
        # --- conv3 & conv1 fused: one bf16 MXU matmul over the shared patches ---
        y13 = jnp.dot(w31_ref[...], pt_ref[...],
                      preferred_element_type=jnp.float32) + b31_ref[...]
        skip = y13[:Cout, :]              # conv3 rows   (Cout, M) - stays in VMEM
        h = y13[Cout:Cout + Ch, :]        # conv1 rows   (Ch, M)

        # --- bn1 (batch stats, one-pass E[h^2]-mu^2, biased var) + ELU ---
        mu1 = jnp.mean(h, axis=1, keepdims=True)
        var1 = jnp.mean(h * h, axis=1, keepdims=True) - mu1 * mu1
        h = (h - mu1) * jax.lax.rsqrt(var1 + EPS) * g1_ref[...] + bt1_ref[...]
        h = _elu(h)

        # --- conv2: stride-1 transposed conv == "same" conv w/ flipped kernel.
        # Build its im2col in-register: 9 shifted slices of a zero-haloed flat
        # copy of h, border-masked via precomputed (x, y) coordinates. ---
        halo = Wo + 1
        zero = jnp.zeros((Ch, halo), jnp.float32)
        h_ext = jnp.concatenate([zero, h, zero], axis=1)       # (Ch, M + 2*halo)
        xi = xy_ref[0:1, :]                                    # (1, M) x coord
        yi = xy_ref[1:2, :]                                    # (1, M) y coord
        taps = []
        for kh in range(K):
            dy = kh - K // 2
            ym = (yi + dy >= 0) & (yi + dy < Ho)
            for kw in range(K):
                dx = kw - K // 2
                xm = (xi + dx >= 0) & (xi + dx < Wo)
                valid = ym & xm                                # (1, M)
                s = dy * Wo + dx
                h_s = jax.lax.slice(h_ext, (0, halo + s), (Ch, halo + s + M))
                taps.append(jnp.where(valid, h_s, 0.0))
        p2 = jnp.concatenate(taps, axis=0).astype(jnp.bfloat16)  # (K*K*Ch, M)

        y2 = (jnp.dot(w2_ref[...], p2, preferred_element_type=jnp.float32)
              + b2_ref[...] + skip)

        # --- bn2 + ELU, lane-dense store of the (Cout, M) slab ---
        mu2 = jnp.mean(y2, axis=1, keepdims=True)
        var2 = jnp.mean(y2 * y2, axis=1, keepdims=True) - mu2 * mu2
        z = (y2 - mu2) * jax.lax.rsqrt(var2 + EPS) * g2_ref[...] + bt2_ref[...]
        o_ref[...] = _elu(z)

    return kernel


# --------------------------- plain-JAX glue (layout only) ---------------------------

def _convT_weight_rows(w_t):
    """ConvTranspose2d weight (Ci, Co, K, K) -> (Co, K*K*Ci) rows of the
    equivalent regular conv (spatially flipped kernel); columns ordered
    (kh, kw, ci) to match the patch-matrix row order."""
    Ci, Co, K, _ = w_t.shape
    w_flip = w_t[:, :, ::-1, ::-1]
    return jnp.transpose(w_flip, (1, 2, 3, 0)).reshape(Co, K * K * Ci)


def res_up_forward(x_nchw, params):
    """ResUp.forward (kernel_size=3, scale=2, padding=0 -> output_padding=0)."""
    N, Cin, H, W = x_nchw.shape
    K = 3
    Ch = params["w1"].shape[1]       # channel_out // 2
    Cout = params["w3"].shape[1]     # channel_out
    Ho, Wo = 2 * H - 1, 2 * W - 1
    M = N * Ho * Wo

    x = jnp.transpose(x_nchw, (0, 2, 3, 1)).astype(jnp.float32)      # NHWC

    # stride-2 transposed conv == dilate by 2, pad by K-1-(K//2)=1, flipped conv.
    xd = jnp.zeros((N, Ho, Wo, Cin), jnp.float32).at[:, ::2, ::2, :].set(x)
    xp = jnp.pad(xd, ((0, 0), (1, 1), (1, 1), (0, 0)))
    # shared im2col for conv1 AND conv3, transposed: positions land on lanes.
    cols = [xp[:, kh:kh + Ho, kw:kw + Wo, :] for kh in range(K) for kw in range(K)]
    patches = jnp.stack(cols, axis=3)                                # (N,Ho,Wo,K*K,Cin)
    ptT = patches.transpose(3, 4, 0, 1, 2).reshape(K * K * Cin, M)   # (K*K*Cin, M)

    # concatenated [conv3; conv1] weight rows -> one matmul; split at row Cout.
    w31T = jnp.concatenate([_convT_weight_rows(params["w3"]),
                            _convT_weight_rows(params["w1"])], axis=0)
    b31 = jnp.concatenate([params["b3"], params["b1"]]).reshape(-1, 1)
    w2T = _convT_weight_rows(params["w2"])                           # (Cout, K*K*Ch)

    # per-position (x, y) coordinates for conv2 border masking inside the kernel.
    xi = jnp.tile(jnp.arange(Wo, dtype=jnp.int32), N * Ho)
    yi = jnp.tile(jnp.repeat(jnp.arange(Ho, dtype=jnp.int32), Wo), N)
    xy = jnp.stack([xi, yi], axis=0)                                 # (2, M) int32

    kd13 = K * K * Cin
    kd2 = K * K * Ch
    flops = 2 * M * (kd13 * (Cout + Ch) + kd2 * Cout) + 16 * M * (Cout + Ch)
    bytes_accessed = 2 * kd13 * M + 8 * M + 4 * Cout * M + 4096

    kernel = _make_res_up_kernel(K=K, Ho=Ho, Wo=Wo, M=M, Ch=Ch, Cout=Cout)
    full = lambda shape: pl.BlockSpec(shape, lambda i: (0,) * len(shape))

    out_t = pl.pallas_call(
        kernel,
        out_shape=jax.ShapeDtypeStruct((Cout, M), jnp.float32),
        grid=(1,),
        in_specs=[
            full((kd13, M)),                 # shared stride-2 patches (bf16)
            full((Cout + Ch, kd13)),         # [W3; W1] (bf16)
            full((Cout + Ch, 1)),            # [b3; b1]
            full((Ch, 1)), full((Ch, 1)),    # gamma1, beta1
            full((Cout, kd2)),               # W2 (bf16)
            full((Cout, 1)), full((Cout, 1)), full((Cout, 1)),  # b2, gamma2, beta2
            full((2, M)),                    # (x, y) coords
        ],
        out_specs=full((Cout, M)),
        compiler_params=pltpu.CompilerParams(dimension_semantics=("arbitrary",)),
        cost_estimate=pl.CostEstimate(flops=int(flops),
                                      transcendentals=int(M * (Ch + Cout)),
                                      bytes_accessed=int(bytes_accessed)),
    )(
        ptT.astype(jnp.bfloat16),
        w31T.astype(jnp.bfloat16),
        b31.astype(jnp.float32),
        params["g1"].reshape(-1, 1).astype(jnp.float32),
        params["bt1"].reshape(-1, 1).astype(jnp.float32),
        w2T.astype(jnp.bfloat16),
        params["b2"].reshape(-1, 1).astype(jnp.float32),
        params["g2"].reshape(-1, 1).astype(jnp.float32),
        params["bt2"].reshape(-1, 1).astype(jnp.float32),
        xy,
    )
    return out_t.reshape(Cout, N, Ho, Wo).transpose(1, 0, 2, 3)      # back to NCHW


# --------------------------- pure-JAX references (sanity) ---------------------------

def _convT_ref(x, w, b, stride, padding, *, cast_bf16):
    Kk = w.shape[2]
    w_conv = jnp.transpose(w, (1, 0, 2, 3))[:, :, ::-1, ::-1]        # OIHW, flipped
    p = Kk - 1 - padding
    lhs = x.astype(jnp.bfloat16) if cast_bf16 else x
    rhs = w_conv.astype(jnp.bfloat16) if cast_bf16 else w_conv
    y = jax.lax.conv_general_dilated(
        lhs, rhs, window_strides=(1, 1),
        padding=[(p, p), (p, p)], lhs_dilation=(stride, stride),
        dimension_numbers=("NCHW", "OIHW", "NCHW"),
        preferred_element_type=jnp.float32)
    return y + b.reshape(1, -1, 1, 1)


def _bn_ref(x, g, b):
    mu = jnp.mean(x, axis=(0, 2, 3), keepdims=True)
    var = jnp.mean((x - mu) ** 2, axis=(0, 2, 3), keepdims=True)
    return (x - mu) * jax.lax.rsqrt(var + EPS) * g.reshape(1, -1, 1, 1) + b.reshape(1, -1, 1, 1)


def res_up_ref(x, params, *, cast_bf16=False):
    skip = _convT_ref(x, params["w3"], params["b3"], 2, 1, cast_bf16=cast_bf16)
    h = _elu(_bn_ref(_convT_ref(x, params["w1"], params["b1"], 2, 1, cast_bf16=cast_bf16),
                     params["g1"], params["bt1"]))
    h2 = _convT_ref(h, params["w2"], params["b2"], 1, 1, cast_bf16=cast_bf16)
    return _elu(_bn_ref(h2 + skip, params["g2"], params["bt2"]))


# ------------------------------------ main ------------------------------------

if __name__ == "__main__":
    key = jax.random.PRNGKey(0)
    N, Cin, H, W = 2, 4, 16, 16
    Cout, K = 8, 3
    ks = jax.random.split(key, 10)

    x = jax.random.normal(ks[0], (N, Cin, H, W), jnp.float32)
    params = {
        "w1": 0.2 * jax.random.normal(ks[1], (Cin, Cout // 2, K, K), jnp.float32),
        "b1": 0.1 * jax.random.normal(ks[2], (Cout // 2,), jnp.float32),
        "w2": 0.2 * jax.random.normal(ks[3], (Cout // 2, Cout, K, K), jnp.float32),
        "b2": 0.1 * jax.random.normal(ks[4], (Cout,), jnp.float32),
        "w3": 0.2 * jax.random.normal(ks[5], (Cin, Cout, K, K), jnp.float32),
        "b3": 0.1 * jax.random.normal(ks[6], (Cout,), jnp.float32),
        "g1": 1.0 + 0.1 * jax.random.normal(ks[7], (Cout // 2,), jnp.float32),
        "bt1": 0.1 * jax.random.normal(ks[8], (Cout // 2,), jnp.float32),
        "g2": 1.0 + 0.1 * jax.random.normal(ks[9], (Cout,), jnp.float32),
        "bt2": jnp.zeros((Cout,), jnp.float32),
    }
    # TODO(synk): BatchNorm running-mean/var buffer update (training-time state
    # mutation) is not reproduced; it does not affect the forward output.

    out = jax.block_until_ready(jax.jit(res_up_forward)(x, params))
    assert out.shape == (N, Cout, 2 * H - 1, 2 * W - 1), out.shape

    # Matched-precision reference (bf16 MXU operands, f32 accumulate/BN/ELU):
    # validates the fused kernel structure tightly.
    ref_bf16 = jax.block_until_ready(res_up_ref(x, params, cast_bf16=True))
    np.testing.assert_allclose(np.asarray(out), np.asarray(ref_bf16),
                               rtol=1e-2, atol=1e-2)
    # Pure-f32 module semantics: only difference is bf16 rounding of MXU operands.
    ref_f32 = jax.block_until_ready(res_up_ref(x, params, cast_bf16=False))
    np.testing.assert_allclose(np.asarray(out), np.asarray(ref_f32),
                               rtol=5e-2, atol=5e-2)

    print("KERNEL_OK")
</pallas_src>

<mosaic_0001>
module attributes {stable_mosaic.version = 11 : i64} {
  func.func @kernel(%arg0: i32, %arg1: memref<36x1922xbf16, #tpu.memory_space<vmem>>, %arg2: memref<12x36xbf16, #tpu.memory_space<vmem>>, %arg3: memref<12x1xf32, #tpu.memory_space<vmem>>, %arg4: memref<4x1xf32, #tpu.memory_space<vmem>>, %arg5: memref<4x1xf32, #tpu.memory_space<vmem>>, %arg6: memref<8x36xbf16, #tpu.memory_space<vmem>>, %arg7: memref<8x1xf32, #tpu.memory_space<vmem>>, %arg8: memref<8x1xf32, #tpu.memory_space<vmem>>, %arg9: memref<8x1xf32, #tpu.memory_space<vmem>>, %arg10: memref<2x1922xi32, #tpu.memory_space<vmem>>, %arg11: memref<8x1922xf32, #tpu.memory_space<vmem>>) attributes {dimension_semantics = [#tpu.dimension_semantics<arbitrary>], iteration_bounds = array<i64: 1>, scalar_prefetch = 0 : i64, scratch_operands = 0 : i64, tpu.core_type = #tpu.core_type<tc>, window_params = [{pipeline_mode = #tpu.pipeline_mode<synchronous>, transform_indices = @transform_0, window_bounds = array<i64: 36, 1922>}, {pipeline_mode = #tpu.pipeline_mode<synchronous>, transform_indices = @transform_1, window_bounds = array<i64: 12, 36>}, {pipeline_mode = #tpu.pipeline_mode<synchronous>, transform_indices = @transform_2, window_bounds = array<i64: 12, 1>}, {pipeline_mode = #tpu.pipeline_mode<synchronous>, transform_indices = @transform_3, window_bounds = array<i64: 4, 1>}, {pipeline_mode = #tpu.pipeline_mode<synchronous>, transform_indices = @transform_4, window_bounds = array<i64: 4, 1>}, {pipeline_mode = #tpu.pipeline_mode<synchronous>, transform_indices = @transform_5, window_bounds = array<i64: 8, 36>}, {pipeline_mode = #tpu.pipeline_mode<synchronous>, transform_indices = @transform_6, window_bounds = array<i64: 8, 1>}, {pipeline_mode = #tpu.pipeline_mode<synchronous>, transform_indices = @transform_7, window_bounds = array<i64: 8, 1>}, {pipeline_mode = #tpu.pipeline_mode<synchronous>, transform_indices = @transform_8, window_bounds = array<i64: 8, 1>}, {pipeline_mode = #tpu.pipeline_mode<synchronous>, transform_indices = @transform_9, window_bounds = array<i64: 2, 1922>}, {pipeline_mode = #tpu.pipeline_mode<synchronous>, transform_indices = @transform_10, window_bounds = array<i64: 8, 1922>}]} {
    %c0 = arith.constant 0 : index
    %c0_0 = arith.constant 0 : index
    %0 = vector.load %arg2[%c0, %c0_0] : memref<12x36xbf16, #tpu.memory_space<vmem>>, vector<12x36xbf16>
    %c0_1 = arith.constant 0 : index
    %c0_2 = arith.constant 0 : index
    %1 = vector.load %arg1[%c0_1, %c0_2] : memref<36x1922xbf16, #tpu.memory_space<vmem>>, vector<36x1922xbf16>
    %cst = arith.constant dense<0.000000e+00> : vector<12x1922xf32>
    %2 = tpu.matmul %0, %1, %cst {dimension_numbers = #tpu.dot_dimension_numbers<[1], [0], [0], [1], [0, 0, 1, 1], [], []>} : vector<12x36xbf16>, vector<36x1922xbf16>, vector<12x1922xf32> -> vector<12x1922xf32>
    %c0_3 = arith.constant 0 : index
    %c0_4 = arith.constant 0 : index
    %3 = vector.load %arg3[%c0_3, %c0_4] : memref<12x1xf32, #tpu.memory_space<vmem>>, vector<12x1xf32>
    %4 = vector.broadcast %3 : vector<12x1xf32> to vector<12x1922xf32>
    %5 = arith.addf %2, %4 : vector<12x1922xf32>
    %6 = vector.extract_strided_slice %5 {offsets = [0, 0], sizes = [8, 1922], strides = [1, 1]} : vector<12x1922xf32> to vector<8x1922xf32>
    %7 = vector.extract_strided_slice %5 {offsets = [8, 0], sizes = [4, 1922], strides = [1, 1]} : vector<12x1922xf32> to vector<4x1922xf32>
    %cst_5 = arith.constant dense<0.000000e+00> : vector<4xf32>
    %8 = vector.multi_reduction <add>, %7, %cst_5 [1] : vector<4x1922xf32> to vector<4xf32>
    %9 = vector.shape_cast %8 : vector<4xf32> to vector<4x1xf32>
    %cst_6 = arith.constant 1.922000e+03 : f32
    %10 = vector.broadcast %cst_6 : f32 to vector<4x1xf32>
    %11 = arith.divf %9, %10 : vector<4x1xf32>
    %12 = arith.mulf %7, %7 : vector<4x1922xf32>
    %cst_7 = arith.constant dense<0.000000e+00> : vector<4xf32>
    %13 = vector.multi_reduction <add>, %12, %cst_7 [1] : vector<4x1922xf32> to vector<4xf32>
    %14 = vector.shape_cast %13 : vector<4xf32> to vector<4x1xf32>
    %cst_8 = arith.constant 1.922000e+03 : f32
    %15 = vector.broadcast %cst_8 : f32 to vector<4x1xf32>
    %16 = arith.divf %14, %15 : vector<4x1xf32>
    %17 = arith.mulf %11, %11 : vector<4x1xf32>
    %18 = arith.subf %16, %17 : vector<4x1xf32>
    %19 = vector.broadcast %11 : vector<4x1xf32> to vector<4x1922xf32>
    %20 = arith.subf %7, %19 : vector<4x1922xf32>
    %cst_9 = arith.constant 9.99999974E-5 : f32
    %21 = vector.broadcast %cst_9 : f32 to vector<4x1xf32>
    %22 = arith.addf %18, %21 : vector<4x1xf32>
    %23 = math.rsqrt %22 : vector<4x1xf32>
    %24 = vector.broadcast %23 : vector<4x1xf32> to vector<4x1922xf32>
    %25 = arith.mulf %20, %24 : vector<4x1922xf32>
    %c0_10 = arith.constant 0 : index
    %c0_11 = arith.constant 0 : index
    %26 = vector.load %arg4[%c0_10, %c0_11] : memref<4x1xf32, #tpu.memory_space<vmem>>, vector<4x1xf32>
    %27 = vector.broadcast %26 : vector<4x1xf32> to vector<4x1922xf32>
    %28 = arith.mulf %25, %27 : vector<4x1922xf32>
    %c0_12 = arith.constant 0 : index
    %c0_13 = arith.constant 0 : index
    %29 = vector.load %arg5[%c0_12, %c0_13] : memref<4x1xf32, #tpu.memory_space<vmem>>, vector<4x1xf32>
    %30 = vector.broadcast %29 : vector<4x1xf32> to vector<4x1922xf32>
    %31 = arith.addf %28, %30 : vector<4x1922xf32>
    %cst_14 = arith.constant 0.000000e+00 : f32
    %32 = vector.broadcast %cst_14 : f32 to vector<4x1922xf32>
    %33 = arith.cmpf ogt, %31, %32 : vector<4x1922xf32>
    %cst_15 = arith.constant 0.000000e+00 : f32
    %34 = vector.broadcast %cst_15 : f32 to vector<4x1922xf32>
    %35 = arith.minimumf %31, %34 : vector<4x1922xf32>
    %36 = math.exp %35 : vector<4x1922xf32>
    %cst_16 = arith.constant 1.000000e+00 : f32
    %37 = vector.broadcast %cst_16 : f32 to vector<4x1922xf32>
    %38 = arith.subf %36, %37 : vector<4x1922xf32>
    %39 = arith.select %33, %31, %38 : vector<4x1922xi1>, vector<4x1922xf32>
    %cst_17 = arith.constant 0.000000e+00 : f32
    %40 = vector.broadcast %cst_17 : f32 to vector<4x32xf32>
    %41 = tpu.concatenate %40, %39, %40 in 1 : vector<4x32xf32>, vector<4x1922xf32>, vector<4x32xf32> -> vector<4x1986xf32>
    %c0_18 = arith.constant 0 : index
    %c0_19 = arith.constant 0 : index
    %42 = vector.load %arg10[%c0_18, %c0_19] : memref<2x1922xi32, #tpu.memory_space<vmem>>, vector<1x1922xi32>
    %c1 = arith.constant 1 : index
    %c0_20 = arith.constant 0 : index
    %43 = vector.load %arg10[%c1, %c0_20] : memref<2x1922xi32, #tpu.memory_space<vmem>>, vector<1x1922xi32>
    %c-1_i32 = arith.constant -1 : i32
    %44 = vector.broadcast %c-1_i32 : i32 to vector<1x1922xi32>
    %45 = arith.addi %43, %44 : vector<1x1922xi32>
    %c0_i32 = arith.constant 0 : i32
    %46 = vector.broadcast %c0_i32 : i32 to vector<1x1922xi32>
    %47 = arith.cmpi sge, %45, %46 : vector<1x1922xi32>
    %c-1_i32_21 = arith.constant -1 : i32
    %48 = vector.broadcast %c-1_i32_21 : i32 to vector<1x1922xi32>
    %49 = arith.addi %43, %48 : vector<1x1922xi32>
    %c31_i32 = arith.constant 31 : i32
    %50 = vector.broadcast %c31_i32 : i32 to vector<1x1922xi32>
    %51 = arith.cmpi slt, %49, %50 : vector<1x1922xi32>
    %52 = arith.andi %47, %51 : vector<1x1922xi1>
    %c-1_i32_22 = arith.constant -1 : i32
    %53 = vector.broadcast %c-1_i32_22 : i32 to vector<1x1922xi32>
    %54 = arith.addi %42, %53 : vector<1x1922xi32>
    %c0_i32_23 = arith.constant 0 : i32
    %55 = vector.broadcast %c0_i32_23 : i32 to vector<1x1922xi32>
    %56 = arith.cmpi sge, %54, %55 : vector<1x1922xi32>
    %c-1_i32_24 = arith.constant -1 : i32
    %57 = vector.broadcast %c-1_i32_24 : i32 to vector<1x1922xi32>
    %58 = arith.addi %42, %57 : vector<1x1922xi32>
    %c31_i32_25 = arith.constant 31 : i32
    %59 = vector.broadcast %c31_i32_25 : i32 to vector<1x1922xi32>
    %60 = arith.cmpi slt, %58, %59 : vector<1x1922xi32>
    %61 = arith.andi %56, %60 : vector<1x1922xi1>
    %62 = arith.andi %52, %61 : vector<1x1922xi1>
    %63 = vector.extract_strided_slice %41 {offsets = [0, 0], sizes = [4, 1922], strides = [1, 1]} : vector<4x1986xf32> to vector<4x1922xf32>
    %cst_26 = arith.constant 0.000000e+00 : f32
    %64 = vector.shape_cast %62 : vector<1x1922xi1> to vector<1x1922xi1>
    %65 = vector.broadcast %64 : vector<1x1922xi1> to vector<4x1922xi1>
    %66 = vector.broadcast %cst_26 : f32 to vector<4x1922xf32>
    %67 = arith.select %65, %63, %66 : vector<4x1922xi1>, vector<4x1922xf32>
    %c0_i32_27 = arith.constant 0 : i32
    %68 = vector.broadcast %c0_i32_27 : i32 to vector<1x1922xi32>
    %69 = arith.addi %42, %68 : vector<1x1922xi32>
    %c0_i32_28 = arith.constant 0 : i32
    %70 = vector.broadcast %c0_i32_28 : i32 to vector<1x1922xi32>
    %71 = arith.cmpi sge, %69, %70 : vector<1x1922xi32>
    %c0_i32_29 = arith.constant 0 : i32
    %72 = vector.broadcast %c0_i32_29 : i32 to vector<1x1922xi32>
    %73 = arith.addi %42, %72 : vector<1x1922xi32>
    %c31_i32_30 = arith.constant 31 : i32
    %74 = vector.broadcast %c31_i32_30 : i32 to vector<1x1922xi32>
    %75 = arith.cmpi slt, %73, %74 : vector<1x1922xi32>
    %76 = arith.andi %71, %75 : vector<1x1922xi1>
    %77 = arith.andi %52, %76 : vector<1x1922xi1>
    %78 = vector.extract_strided_slice %41 {offsets = [0, 1], sizes = [4, 1922], strides = [1, 1]} : vector<4x1986xf32> to vector<4x1922xf32>
    %cst_31 = arith.constant 0.000000e+00 : f32
    %79 = vector.shape_cast %77 : vector<1x1922xi1> to vector<1x1922xi1>
    %80 = vector.broadcast %79 : vector<1x1922xi1> to vector<4x1922xi1>
    %81 = vector.broadcast %cst_31 : f32 to vector<4x1922xf32>
    %82 = arith.select %80, %78, %81 : vector<4x1922xi1>, vector<4x1922xf32>
    %c1_i32 = arith.constant 1 : i32
    %83 = vector.broadcast %c1_i32 : i32 to vector<1x1922xi32>
    %84 = arith.addi %42, %83 : vector<1x1922xi32>
    %c0_i32_32 = arith.constant 0 : i32
    %85 = vector.broadcast %c0_i32_32 : i32 to vector<1x1922xi32>
    %86 = arith.cmpi sge, %84, %85 : vector<1x1922xi32>
    %c1_i32_33 = arith.constant 1 : i32
    %87 = vector.broadcast %c1_i32_33 : i32 to vector<1x1922xi32>
    %88 = arith.addi %42, %87 : vector<1x1922xi32>
    %c31_i32_34 = arith.constant 31 : i32
    %89 = vector.broadcast %c31_i32_34 : i32 to vector<1x1922xi32>
    %90 = arith.cmpi slt, %88, %89 : vector<1x1922xi32>
    %91 = arith.andi %86, %90 : vector<1x1922xi1>
    %92 = arith.andi %52, %91 : vector<1x1922xi1>
    %93 = vector.extract_strided_slice %41 {offsets = [0, 2], sizes = [4, 1922], strides = [1, 1]} : vector<4x1986xf32> to vector<4x1922xf32>
    %cst_35 = arith.constant 0.000000e+00 : f32
    %94 = vector.shape_cast %92 : vector<1x1922xi1> to vector<1x1922xi1>
    %95 = vector.broadcast %94 : vector<1x1922xi1> to vector<4x1922xi1>
    %96 = vector.broadcast %cst_35 : f32 to vector<4x1922xf32>
    %97 = arith.select %95, %93, %96 : vector<4x1922xi1>, vector<4x1922xf32>
    %c0_i32_36 = arith.constant 0 : i32
    %98 = vector.broadcast %c0_i32_36 : i32 to vector<1x1922xi32>
    %99 = arith.addi %43, %98 : vector<1x1922xi32>
    %c0_i32_37 = arith.constant 0 : i32
    %100 = vector.broadcast %c0_i32_37 : i32 to vector<1x1922xi32>
    %101 = arith.cmpi sge, %99, %100 : vector<1x1922xi32>
    %c0_i32_38 = arith.constant 0 : i32
    %102 = vector.broadcast %c0_i32_38 : i32 to vector<1x1922xi32>
    %103 = arith.addi %43, %102 : vector<1x1922xi32>
    %c31_i32_39 = arith.constant 31 : i32
    %104 = vector.broadcast %c31_i32_39 : i32 to vector<1x1922xi32>
    %105 = arith.cmpi slt, %103, %104 : vector<1x1922xi32>
    %106 = arith.andi %101, %105 : vector<1x1922xi1>
    %c-1_i32_40 = arith.constant -1 : i32
    %107 = vector.broadcast %c-1_i32_40 : i32 to vector<1x1922xi32>
    %108 = arith.addi %42, %107 : vector<1x1922xi32>
    %c0_i32_41 = arith.constant 0 : i32
    %109 = vector.broadcast %c0_i32_41 : i32 to vector<1x1922xi32>
    %110 = arith.cmpi sge, %108, %109 : vector<1x1922xi32>
    %c-1_i32_42 = arith.constant -1 : i32
    %111 = vector.broadcast %c-1_i32_42 : i32 to vector<1x1922xi32>
    %112 = arith.addi %42, %111 : vector<1x1922xi32>
    %c31_i32_43 = arith.constant 31 : i32
    %113 = vector.broadcast %c31_i32_43 : i32 to vector<1x1922xi32>
    %114 = arith.cmpi slt, %112, %113 : vector<1x1922xi32>
    %115 = arith.andi %110, %114 : vector<1x1922xi1>
    %116 = arith.andi %106, %115 : vector<1x1922xi1>
    %117 = vector.extract_strided_slice %41 {offsets = [0, 31], sizes = [4, 1922], strides = [1, 1]} : vector<4x1986xf32> to vector<4x1922xf32>
    %cst_44 = arith.constant 0.000000e+00 : f32
    %118 = vector.shape_cast %116 : vector<1x1922xi1> to vector<1x1922xi1>
    %119 = vector.broadcast %118 : vector<1x1922xi1> to vector<4x1922xi1>
    %120 = vector.broadcast %cst_44 : f32 to vector<4x1922xf32>
    %121 = arith.select %119, %117, %120 : vector<4x1922xi1>, vector<4x1922xf32>
    %c0_i32_45 = arith.constant 0 : i32
    %122 = vector.broadcast %c0_i32_45 : i32 to vector<1x1922xi32>
    %123 = arith.addi %42, %122 : vector<1x1922xi32>
    %c0_i32_46 = arith.constant 0 : i32
    %124 = vector.broadcast %c0_i32_46 : i32 to vector<1x1922xi32>
    %125 = arith.cmpi sge, %123, %124 : vector<1x1922xi32>
    %c0_i32_47 = arith.constant 0 : i32
    %126 = vector.broadcast %c0_i32_47 : i32 to vector<1x1922xi32>
    %127 = arith.addi %42, %126 : vector<1x1922xi32>
    %c31_i32_48 = arith.constant 31 : i32
    %128 = vector.broadcast %c31_i32_48 : i32 to vector<1x1922xi32>
    %129 = arith.cmpi slt, %127, %128 : vector<1x1922xi32>
    %130 = arith.andi %125, %129 : vector<1x1922xi1>
    %131 = arith.andi %106, %130 : vector<1x1922xi1>
    %132 = vector.extract_strided_slice %41 {offsets = [0, 32], sizes = [4, 1922], strides = [1, 1]} : vector<4x1986xf32> to vector<4x1922xf32>
    %cst_49 = arith.constant 0.000000e+00 : f32
    %133 = vector.shape_cast %131 : vector<1x1922xi1> to vector<1x1922xi1>
    %134 = vector.broadcast %133 : vector<1x1922xi1> to vector<4x1922xi1>
    %135 = vector.broadcast %cst_49 : f32 to vector<4x1922xf32>
    %136 = arith.select %134, %132, %135 : vector<4x1922xi1>, vector<4x1922xf32>
    %c1_i32_50 = arith.constant 1 : i32
    %137 = vector.broadcast %c1_i32_50 : i32 to vector<1x1922xi32>
    %138 = arith.addi %42, %137 : vector<1x1922xi32>
    %c0_i32_51 = arith.constant 0 : i32
    %139 = vector.broadcast %c0_i32_51 : i32 to vector<1x1922xi32>
    %140 = arith.cmpi sge, %138, %139 : vector<1x1922xi32>
    %c1_i32_52 = arith.constant 1 : i32
    %141 = vector.broadcast %c1_i32_52 : i32 to vector<1x1922xi32>
    %142 = arith.addi %42, %141 : vector<1x1922xi32>
    %c31_i32_53 = arith.constant 31 : i32
    %143 = vector.broadcast %c31_i32_53 : i32 to vector<1x1922xi32>
    %144 = arith.cmpi slt, %142, %143 : vector<1x1922xi32>
    %145 = arith.andi %140, %144 : vector<1x1922xi1>
    %146 = arith.andi %106, %145 : vector<1x1922xi1>
    %147 = vector.extract_strided_slice %41 {offsets = [0, 33], sizes = [4, 1922], strides = [1, 1]} : vector<4x1986xf32> to vector<4x1922xf32>
    %cst_54 = arith.constant 0.000000e+00 : f32
    %148 = vector.shape_cast %146 : vector<1x1922xi1> to vector<1x1922xi1>
    %149 = vector.broadcast %148 : vector<1x1922xi1> to vector<4x1922xi1>
    %150 = vector.broadcast %cst_54 : f32 to vector<4x1922xf32>
    %151 = arith.select %149, %147, %150 : vector<4x1922xi1>, vector<4x1922xf32>
    %c1_i32_55 = arith.constant 1 : i32
    %152 = vector.broadcast %c1_i32_55 : i32 to vector<1x1922xi32>
    %153 = arith.addi %43, %152 : vector<1x1922xi32>
    %c0_i32_56 = arith.constant 0 : i32
    %154 = vector.broadcast %c0_i32_56 : i32 to vector<1x1922xi32>
    %155 = arith.cmpi sge, %153, %154 : vector<1x1922xi32>
    %c1_i32_57 = arith.constant 1 : i32
    %156 = vector.broadcast %c1_i32_57 : i32 to vector<1x1922xi32>
    %157 = arith.addi %43, %156 : vector<1x1922xi32>
    %c31_i32_58 = arith.constant 31 : i32
    %158 = vector.broadcast %c31_i32_58 : i32 to vector<1x1922xi32>
    %159 = arith.cmpi slt, %157, %158 : vector<1x1922xi32>
    %160 = arith.andi %155, %159 : vector<1x1922xi1>
    %c-1_i32_59 = arith.constant -1 : i32
    %161 = vector.broadcast %c-1_i32_59 : i32 to vector<1x1922xi32>
    %162 = arith.addi %42, %161 : vector<1x1922xi32>
    %c0_i32_60 = arith.constant 0 : i32
    %163 = vector.broadcast %c0_i32_60 : i32 to vector<1x1922xi32>
    %164 = arith.cmpi sge, %162, %163 : vector<1x1922xi32>
    %c-1_i32_61 = arith.constant -1 : i32
    %165 = vector.broadcast %c-1_i32_61 : i32 to vector<1x1922xi32>
    %166 = arith.addi %42, %165 : vector<1x1922xi32>
    %c31_i32_62 = arith.constant 31 : i32
    %167 = vector.broadcast %c31_i32_62 : i32 to vector<1x1922xi32>
    %168 = arith.cmpi slt, %166, %167 : vector<1x1922xi32>
    %169 = arith.andi %164, %168 : vector<1x1922xi1>
    %170 = arith.andi %160, %169 : vector<1x1922xi1>
    %171 = vector.extract_strided_slice %41 {offsets = [0, 62], sizes = [4, 1922], strides = [1, 1]} : vector<4x1986xf32> to vector<4x1922xf32>
    %cst_63 = arith.constant 0.000000e+00 : f32
    %172 = vector.shape_cast %170 : vector<1x1922xi1> to vector<1x1922xi1>
    %173 = vector.broadcast %172 : vector<1x1922xi1> to vector<4x1922xi1>
    %174 = vector.broadcast %cst_63 : f32 to vector<4x1922xf32>
    %175 = arith.select %173, %171, %174 : vector<4x1922xi1>, vector<4x1922xf32>
    %c0_i32_64 = arith.constant 0 : i32
    %176 = vector.broadcast %c0_i32_64 : i32 to vector<1x1922xi32>
    %177 = arith.addi %42, %176 : vector<1x1922xi32>
    %c0_i32_65 = arith.constant 0 : i32
    %178 = vector.broadcast %c0_i32_65 : i32 to vector<1x1922xi32>
    %179 = arith.cmpi sge, %177, %178 : vector<1x1922xi32>
    %c0_i32_66 = arith.constant 0 : i32
    %180 = vector.broadcast %c0_i32_66 : i32 to vector<1x1922xi32>
    %181 = arith.addi %42, %180 : vector<1x1922xi32>
    %c31_i32_67 = arith.constant 31 : i32
    %182 = vector.broadcast %c31_i32_67 : i32 to vector<1x1922xi32>
    %183 = arith.cmpi slt, %181, %182 : vector<1x1922xi32>
    %184 = arith.andi %179, %183 : vector<1x1922xi1>
    %185 = arith.andi %160, %184 : vector<1x1922xi1>
    %186 = vector.extract_strided_slice %41 {offsets = [0, 63], sizes = [4, 1922], strides = [1, 1]} : vector<4x1986xf32> to vector<4x1922xf32>
    %cst_68 = arith.constant 0.000000e+00 : f32
    %187 = vector.shape_cast %185 : vector<1x1922xi1> to vector<1x1922xi1>
    %188 = vector.broadcast %187 : vector<1x1922xi1> to vector<4x1922xi1>
    %189 = vector.broadcast %cst_68 : f32 to vector<4x1922xf32>
    %190 = arith.select %188, %186, %189 : vector<4x1922xi1>, vector<4x1922xf32>
    %c1_i32_69 = arith.constant 1 : i32
    %191 = vector.broadcast %c1_i32_69 : i32 to vector<1x1922xi32>
    %192 = arith.addi %42, %191 : vector<1x1922xi32>
    %c0_i32_70 = arith.constant 0 : i32
    %193 = vector.broadcast %c0_i32_70 : i32 to vector<1x1922xi32>
    %194 = arith.cmpi sge, %192, %193 : vector<1x1922xi32>
    %c1_i32_71 = arith.constant 1 : i32
    %195 = vector.broadcast %c1_i32_71 : i32 to vector<1x1922xi32>
    %196 = arith.addi %42, %195 : vector<1x1922xi32>
    %c31_i32_72 = arith.constant 31 : i32
    %197 = vector.broadcast %c31_i32_72 : i32 to vector<1x1922xi32>
    %198 = arith.cmpi slt, %196, %197 : vector<1x1922xi32>
    %199 = arith.andi %194, %198 : vector<1x1922xi1>
    %200 = arith.andi %160, %199 : vector<1x1922xi1>
    %201 = vector.extract_strided_slice %41 {offsets = [0, 64], sizes = [4, 1922], strides = [1, 1]} : vector<4x1986xf32> to vector<4x1922xf32>
    %cst_73 = arith.constant 0.000000e+00 : f32
    %202 = vector.shape_cast %200 : vector<1x1922xi1> to vector<1x1922xi1>
    %203 = vector.broadcast %202 : vector<1x1922xi1> to vector<4x1922xi1>
    %204 = vector.broadcast %cst_73 : f32 to vector<4x1922xf32>
    %205 = arith.select %203, %201, %204 : vector<4x1922xi1>, vector<4x1922xf32>
    %206 = tpu.concatenate %67, %82, %97, %121, %136, %151, %175, %190, %205 in 0 : vector<4x1922xf32>, vector<4x1922xf32>, vector<4x1922xf32>, vector<4x1922xf32>, vector<4x1922xf32>, vector<4x1922xf32>, vector<4x1922xf32>, vector<4x1922xf32>, vector<4x1922xf32> -> vector<36x1922xf32>
    %207 = arith.truncf %206 : vector<36x1922xf32> to vector<36x1922xbf16>
    %c0_74 = arith.constant 0 : index
    %c0_75 = arith.constant 0 : index
    %208 = vector.load %arg6[%c0_74, %c0_75] : memref<8x36xbf16, #tpu.memory_space<vmem>>, vector<8x36xbf16>
    %cst_76 = arith.constant dense<0.000000e+00> : vector<8x1922xf32>
    %209 = tpu.matmul %208, %207, %cst_76 {dimension_numbers = #tpu.dot_dimension_numbers<[1], [0], [0], [1], [0, 0, 1, 1], [], []>} : vector<8x36xbf16>, vector<36x1922xbf16>, vector<8x1922xf32> -> vector<8x1922xf32>
    %c0_77 = arith.constant 0 : index
    %c0_78 = arith.constant 0 : index
    %210 = vector.load %arg7[%c0_77, %c0_78] : memref<8x1xf32, #tpu.memory_space<vmem>>, vector<8x1xf32>
    %211 = vector.broadcast %210 : vector<8x1xf32> to vector<8x1922xf32>
    %212 = arith.addf %209, %211 : vector<8x1922xf32>
    %213 = arith.addf %212, %6 : vector<8x1922xf32>
    %cst_79 = arith.constant dense<0.000000e+00> : vector<8xf32>
    %214 = vector.multi_reduction <add>, %213, %cst_79 [1] : vector<8x1922xf32> to vector<8xf32>
    %215 = vector.shape_cast %214 : vector<8xf32> to vector<8x1xf32>
    %cst_80 = arith.constant 1.922000e+03 : f32
    %216 = vector.broadcast %cst_80 : f32 to vector<8x1xf32>
    %217 = arith.divf %215, %216 : vector<8x1xf32>
    %218 = arith.mulf %213, %213 : vector<8x1922xf32>
    %cst_81 = arith.constant dense<0.000000e+00> : vector<8xf32>
    %219 = vector.multi_reduction <add>, %218, %cst_81 [1] : vector<8x1922xf32> to vector<8xf32>
    %220 = vector.shape_cast %219 : vector<8xf32> to vector<8x1xf32>
    %cst_82 = arith.constant 1.922000e+03 : f32
    %221 = vector.broadcast %cst_82 : f32 to vector<8x1xf32>
    %222 = arith.divf %220, %221 : vector<8x1xf32>
    %223 = arith.mulf %217, %217 : vector<8x1xf32>
    %224 = arith.subf %222, %223 : vector<8x1xf32>
    %225 = vector.broadcast %217 : vector<8x1xf32> to vector<8x1922xf32>
    %226 = arith.subf %213, %225 : vector<8x1922xf32>
    %cst_83 = arith.constant 9.99999974E-5 : f32
    %227 = vector.broadcast %cst_83 : f32 to vector<8x1xf32>
    %228 = arith.addf %224, %227 : vector<8x1xf32>
    %229 = math.rsqrt %228 : vector<8x1xf32>
    %230 = vector.broadcast %229 : vector<8x1xf32> to vector<8x1922xf32>
    %231 = arith.mulf %226, %230 : vector<8x1922xf32>
    %c0_84 = arith.constant 0 : index
    %c0_85 = arith.constant 0 : index
    %232 = vector.load %arg8[%c0_84, %c0_85] : memref<8x1xf32, #tpu.memory_space<vmem>>, vector<8x1xf32>
    %233 = vector.broadcast %232 : vector<8x1xf32> to vector<8x1922xf32>
    %234 = arith.mulf %231, %233 : vector<8x1922xf32>
    %c0_86 = arith.constant 0 : index
    %c0_87 = arith.constant 0 : index
    %235 = vector.load %arg9[%c0_86, %c0_87] : memref<8x1xf32, #tpu.memory_space<vmem>>, vector<8x1xf32>
    %236 = vector.broadcast %235 : vector<8x1xf32> to vector<8x1922xf32>
    %237 = arith.addf %234, %236 : vector<8x1922xf32>
    %cst_88 = arith.constant 0.000000e+00 : f32
    %238 = vector.broadcast %cst_88 : f32 to vector<8x1922xf32>
    %239 = arith.cmpf ogt, %237, %238 : vector<8x1922xf32>
    %cst_89 = arith.constant 0.000000e+00 : f32
    %240 = vector.broadcast %cst_89 : f32 to vector<8x1922xf32>
    %241 = arith.minimumf %237, %240 : vector<8x1922xf32>
    %242 = math.exp %241 : vector<8x1922xf32>
    %cst_90 = arith.constant 1.000000e+00 : f32
    %243 = vector.broadcast %cst_90 : f32 to vector<8x1922xf32>
    %244 = arith.subf %242, %243 : vector<8x1922xf32>
    %245 = arith.select %239, %237, %244 : vector<8x1922xi1>, vector<8x1922xf32>
    %c0_91 = arith.constant 0 : index
    %c0_92 = arith.constant 0 : index
    %246 = vector.load %arg11[%c0_91, %c0_92] : memref<8x1922xf32, #tpu.memory_space<vmem>>, vector<8x1922xf32>
    tpu.vector_store %arg11[%c0_91, %c0_92], %245 {strides = array<i32>} : memref<8x1922xf32, #tpu.memory_space<vmem>>, vector<8x1922xf32>,
    return
  }
  func.func @transform_0(%arg0: i32) -> (i32, i32) {
    %c0_i32 = arith.constant 0 : i32
    %c0_i32_0 = arith.constant 0 : i32
    %c0_i32_1 = arith.constant 0 : i32
    return %c0_i32, %c0_i32_0 : i32, i32
  }
  func.func @transform_1(%arg0: i32) -> (i32, i32) {
    %c0_i32 = arith.constant 0 : i32
    %c0_i32_0 = arith.constant 0 : i32
    %c0_i32_1 = arith.constant 0 : i32
    return %c0_i32, %c0_i32_0 : i32, i32
  }
  func.func @transform_2(%arg0: i32) -> (i32, i32) {
    %c0_i32 = arith.constant 0 : i32
    %c0_i32_0 = arith.constant 0 : i32
    %c0_i32_1 = arith.constant 0 : i32
    return %c0_i32, %c0_i32_0 : i32, i32
  }
  func.func @transform_3(%arg0: i32) -> (i32, i32) {
    %c0_i32 = arith.constant 0 : i32
    %c0_i32_0 = arith.constant 0 : i32
    %c0_i32_1 = arith.constant 0 : i32
    return %c0_i32, %c0_i32_0 : i32, i32
  }
  func.func @transform_4(%arg0: i32) -> (i32, i32) {
    %c0_i32 = arith.constant 0 : i32
    %c0_i32_0 = arith.constant 0 : i32
    %c0_i32_1 = arith.constant 0 : i32
    return %c0_i32, %c0_i32_0 : i32, i32
  }
  func.func @transform_5(%arg0: i32) -> (i32, i32) {
    %c0_i32 = arith.constant 0 : i32
    %c0_i32_0 = arith.constant 0 : i32
    %c0_i32_1 = arith.constant 0 : i32
    return %c0_i32, %c0_i32_0 : i32, i32
  }
  func.func @transform_6(%arg0: i32) -> (i32, i32) {
    %c0_i32 = arith.constant 0 : i32
    %c0_i32_0 = arith.constant 0 : i32
    %c0_i32_1 = arith.constant 0 : i32
    return %c0_i32, %c0_i32_0 : i32, i32
  }
  func.func @transform_7(%arg0: i32) -> (i32, i32) {
    %c0_i32 = arith.constant 0 : i32
    %c0_i32_0 = arith.constant 0 : i32
    %c0_i32_1 = arith.constant 0 : i32
    return %c0_i32, %c0_i32_0 : i32, i32
  }
  func.func @transform_8(%arg0: i32) -> (i32, i32) {
    %c0_i32 = arith.constant 0 : i32
    %c0_i32_0 = arith.constant 0 : i32
    %c0_i32_1 = arith.constant 0 : i32
    return %c0_i32, %c0_i32_0 : i32, i32
  }
  func.func @transform_9(%arg0: i32) -> (i32, i32) {
    %c0_i32 = arith.constant 0 : i32
    %c0_i32_0 = arith.constant 0 : i32
    %c0_i32_1 = arith.constant 0 : i32
    return %c0_i32, %c0_i32_0 : i32, i32
  }
  func.func @transform_10(%arg0: i32) -> (i32, i32) {
    %c0_i32 = arith.constant 0 : i32
    %c0_i32_0 = arith.constant 0 : i32
    %c0_i32_1 = arith.constant 0 : i32
    return %c0_i32, %c0_i32_0 : i32, i32
  }
}

</mosaic_0001>

<llo_original>
// kernel: tile.14
$region0: #{tile.14}
  %s0 = inlined_call_operand.vmem [shape: s32[31,31], index: 0, kind: input, shape index: {}]
  %s1 = inlined_call_operand.vmem [shape: s32[961], index: 1, kind: output, shape index: {}]
  %v2 = vld [vmem:[%s0] sm:$0x1]
  %vm3 = vcmask 252928
  %4 = vst.msk [vmem:[%s1] sm:$0x1] %vm3, %v2
  %s5 = scalar_lea.vmem %s0, 4
  %v6 = vld [vmem:[%s5] sm:$0x1]
  %s7 = scalar_lea.vmem %s0, 4
  %v8 = vld [vmem:[%s7] sm:$0x1]
  %vm9 = vcmask 31744
  %v10 = vsel %vm9, %v8, %v6
  %11 = vrot.lane.b32.xlu0 %v10, 124
  %v12 = vpop.permute.xlu0 %11
  %vm13 = vcmask 220160
  %s14 = scalar_lea.vmem %s1, 1
  %15 = vst.msk [vmem:[%s14] sm:$0x1] %vm13, %v12
  %vm16 = vcmask 1048544
  %17 = vst.msk [vmem:[%s1] sm:$0x1] %vm16, %v12
  %s18 = scalar_lea.vmem %s0, 8
  %v19 = vld [vmem:[%s18] sm:$0x1]
  %s20 = scalar_lea.vmem %s0, 8
  %v21 = vld [vmem:[%s20] sm:$0x1]
  %vm22 = vcmask 64512
  %v23 = vsel %vm22, %v21, %v19
  %24 = vrot.lane.b32.xlu0 %v23, 120
  %v25 = vpop.permute.xlu0 %24
  %vm26 = vcmask 187392
  %s27 = scalar_lea.vmem %s1, 2
  %28 = vst.msk [vmem:[%s27] sm:$0x1] %vm26, %v25
  %vm29 = vcmask 1048512
  %s30 = scalar_lea.vmem %s1, 1
  %31 = vst.msk [vmem:[%s30] sm:$0x1] %vm29, %v25
  %s32 = scalar_lea.vmem %s0, 12
  %v33 = vld [vmem:[%s32] sm:$0x1]
  %s34 = scalar_lea.vmem %s0, 12
  %v35 = vld [vmem:[%s34] sm:$0x1]
  %vm36 = vcmask 97280
  %v37 = vsel %vm36, %v35, %v33
  %38 = vrot.lane.b32.xlu0 %v37, 116
  %v39 = vpop.permute.xlu0 %38
  %vm40 = vcmask 154624
  %s41 = scalar_lea.vmem %s1, 3
  %42 = vst.msk [vmem:[%s41] sm:$0x1] %vm40, %v39
  %vm43 = vcmask 1048480
  %s44 = scalar_lea.vmem %s1, 2
  %45 = vst.msk [vmem:[%s44] sm:$0x1] %vm43, %v39
  %s46 = scalar_lea.vmem %s0, 16
  %v47 = vld [vmem:[%s46] sm:$0x1]
  %s48 = scalar_lea.vmem %s0, 16
  %v49 = vld [vmem:[%s48] sm:$0x1]
  %vm50 = vcmask 130048
  %v51 = vsel %vm50, %v49, %v47
  %52 = vrot.lane.b32.xlu0 %v51, 112
  %v53 = vpop.permute.xlu0 %52
  %vm54 = vcmask 121856
  %s55 = scalar_lea.vmem %s1, 4
  %56 = vst.msk [vmem:[%s55] sm:$0x1] %vm54, %v53
  %vm57 = vcmask 1048448
  %s58 = scalar_lea.vmem %s1, 3
  %59 = vst.msk [vmem:[%s58] sm:$0x1] %vm57, %v53
  %s60 = scalar_lea.vmem %s0, 20
  %v61 = vld [vmem:[%s60] sm:$0x1]
  %s62 = scalar_lea.vmem %s0, 20
  %v63 = vld [vmem:[%s62] sm:$0x1]
  %vm64 = vcmask 162816
  %v65 = vsel %vm64, %v63, %v61
  %66 = vrot.lane.b32.xlu0 %v65, 108
  %v67 = vpop.permute.xlu0 %66
  %vm68 = vcmask 89088
  %s69 = scalar_lea.vmem %s1, 5
  %70 = vst.msk [vmem:[%s69] sm:$0x1] %vm68, %v67
  %vm71 = vcmask 1048416
  %s72 = scalar_lea.vmem %s1, 4
  %73 = vst.msk [vmem:[%s72] sm:$0x1] %vm71, %v67
  %s74 = scalar_lea.vmem %s0, 24
  %v75 = vld [vmem:[%s74] sm:$0x1]
  %s76 = scalar_lea.vmem %s0, 24
  %v77 = vld [vmem:[%s76] sm:$0x1]
  %vm78 = vcmask 195584
  %v79 = vsel %vm78, %v77, %v75
  %80 = vrot.lane.b32.xlu0 %v79, 104
  %v81 = vpop.permute.xlu0 %80
  %vm82 = vcmask 56320
  %s83 = scalar_lea.vmem %s1, 6
  %84 = vst.msk [vmem:[%s83] sm:$0x1] %vm82, %v81
  %vm85 = vcmask 1048384
  %s86 = scalar_lea.vmem %s1, 5
  %87 = vst.msk [vmem:[%s86] sm:$0x1] %vm85, %v81
  %s88 = scalar_lea.vmem %s0, 28
  %v89 = vld [vmem:[%s88] sm:$0x1]
  %s90 = scalar_lea.vmem %s0, 28
  %v91 = vld [vmem:[%s90] sm:$0x1]
  %vm92 = vcmask 228352
  %v93 = vsel %vm92, %v91, %v89
  %94 = vrot.lane.b32.xlu0 %v93, 100
  %v95 = vpop.permute.xlu0 %94
  %vm96 = vcmask 23552
  %s97 = scalar_lea.vmem %s1, 7
  %98 = vst.msk [vmem:[%s97] sm:$0x1] %vm96, %v95
  %vm99 = vcmask 1048352
  %s100 = scalar_lea.vmem %s1, 6
  %101 = vst.msk [vmem:[%s100] sm:$0x1] %vm99, %v95
  %s102 = scalar_lea.vmem %s0, 3
  %v103 = vld [vmem:[%s102] sm:$0x1]
  %104 = vrot.lane.b32.xlu0 %v103, 93
  %v105 = vpop.permute.xlu0 %104
  %vm106 = vcmask 1015528
  %107 = vst.msk [vmem:[%s1] sm:$0x1] %vm106, %v105
  %s108 = scalar_lea.vmem %s0, 7
  %v109 = vld [vmem:[%s108] sm:$0x1]
  %110 = vrot.lane.b32.xlu0 %v109, 89
  %v111 = vpop.permute.xlu0 %110
  %vm112 = vcmask 982728
  %s113 = scalar_lea.vmem %s1, 1
  %114 = vst.msk [vmem:[%s113] sm:$0x1] %vm112, %v111
  %s115 = scalar_lea.vmem %s0, 11
  %v116 = vld [vmem:[%s115] sm:$0x1]
  %117 = vrot.lane.b32.xlu0 %v116, 85
  %v118 = vpop.permute.xlu0 %117
  %vm119 = vcmask 949928
  %s120 = scalar_lea.vmem %s1, 2
  %121 = vst.msk [vmem:[%s120] sm:$0x1] %vm119, %v118
  %s122 = scalar_lea.vmem %s0, 15
  %v123 = vld [vmem:[%s122] sm:$0x1]
  %124 = vrot.lane.b32.xlu0 %v123, 81
  %v125 = vpop.permute.xlu0 %124
  %vm126 = vcmask 917128
  %s127 = scalar_lea.vmem %s1, 3
  %128 = vst.msk [vmem:[%s127] sm:$0x1] %vm126, %v125
  %s129 = scalar_lea.vmem %s0, 19
  %v130 = vld [vmem:[%s129] sm:$0x1]
  %131 = vrot.lane.b32.xlu0 %v130, 77
  %v132 = vpop.permute.xlu0 %131
  %vm133 = vcmask 884328
  %s134 = scalar_lea.vmem %s1, 4
  %135 = vst.msk [vmem:[%s134] sm:$0x1] %vm133, %v132
  %s136 = scalar_lea.vmem %s0, 23
  %v137 = vld [vmem:[%s136] sm:$0x1]
  %138 = vrot.lane.b32.xlu0 %v137, 73
  %v139 = vpop.permute.xlu0 %138
  %vm140 = vcmask 851528
  %s141 = scalar_lea.vmem %s1, 5
  %142 = vst.msk [vmem:[%s141] sm:$0x1] %vm140, %v139
  %s143 = scalar_lea.vmem %s0, 27
  %v144 = vld [vmem:[%s143] sm:$0x1]
  %145 = vrot.lane.b32.xlu0 %v144, 69
  %v146 = vpop.permute.xlu0 %145
  %vm147 = vcmask 818728
  %s148 = scalar_lea.vmem %s1, 6
  %149 = vst.msk [vmem:[%s148] sm:$0x1] %vm147, %v146
  %s150 = scalar_lea.vmem %s0, 2
  %v151 = vld [vmem:[%s150] sm:$0x1]
  %152 = vrot.lane.b32.xlu0 %v151, 62
  %v153 = vpop.permute.xlu0 %152
  %vm154 = vcmask 761328
  %155 = vst.msk [vmem:[%s1] sm:$0x1] %vm154, %v153
  %s156 = scalar_lea.vmem %s0, 6
  %v157 = vld [vmem:[%s156] sm:$0x1]
  %158 = vrot.lane.b32.xlu0 %v157, 58
  %v159 = vpop.permute.xlu0 %158
  %vm160 = vcmask 728528
  %s161 = scalar_lea.vmem %s1, 1
  %162 = vst.msk [vmem:[%s161] sm:$0x1] %vm160, %v159
  %s163 = scalar_lea.vmem %s0, 10
  %v164 = vld [vmem:[%s163] sm:$0x1]
  %165 = vrot.lane.b32.xlu0 %v164, 54
  %v166 = vpop.permute.xlu0 %165
  %vm167 = vcmask 695728
  %s168 = scalar_lea.vmem %s1, 2
  %169 = vst.msk [vmem:[%s168] sm:$0x1] %vm167, %v166
  %s170 = scalar_lea.vmem %s0, 14
  %v171 = vld [vmem:[%s170] sm:$0x1]
  %172 = vrot.lane.b32.xlu0 %v171, 50
  %v173 = vpop.permute.xlu0 %172
  %vm174 = vcmask 662928
  %s175 = scalar_lea.vmem %s1, 3
  %176 = vst.msk [vmem:[%s175] sm:$0x1] %vm174, %v173
  %s177 = scalar_lea.vmem %s0, 18
  %v178 = vld [vmem:[%s177] sm:$0x1]
  %179 = vrot.lane.b32.xlu0 %v178, 46
  %v180 = vpop.permute.xlu0 %179
  %vm181 = vcmask 630128
  %s182 = scalar_lea.vmem %s1, 4
  %183 = vst.msk [vmem:[%s182] sm:$0x1] %vm181, %v180
  %s184 = scalar_lea.vmem %s0, 22
  %v185 = vld [vmem:[%s184] sm:$0x1]
  %186 = vrot.lane.b32.xlu0 %v185, 42
  %v187 = vpop.permute.xlu0 %186
  %vm188 = vcmask 597328
  %s189 = scalar_lea.vmem %s1, 5
  %190 = vst.msk [vmem:[%s189] sm:$0x1] %vm188, %v187
  %s191 = scalar_lea.vmem %s0, 26
  %v192 = vld [vmem:[%s191] sm:$0x1]
  %193 = vrot.lane.b32.xlu0 %v192, 38
  %v194 = vpop.permute.xlu0 %193
  %vm195 = vcmask 564528
  %s196 = scalar_lea.vmem %s1, 6
  %197 = vst.msk [vmem:[%s196] sm:$0x1] %vm195, %v194
  %s198 = scalar_lea.vmem %s0, 30
  %v199 = vld [vmem:[%s198] sm:$0x1]
  %200 = vrot.lane.b32.xlu0 %v199, 34
  %v201 = vpop.permute.xlu0 %200
  %vm202 = vcmask 531728
  %s203 = scalar_lea.vmem %s1, 7
  %204 = vst.msk [vmem:[%s203] sm:$0x1] %vm202, %v201
  %s205 = scalar_lea.vmem %s0, 1
  %v206 = vld [vmem:[%s205] sm:$0x1]
  %207 = vrot.lane.b32.xlu0 %v206, 31
  %v208 = vpop.permute.xlu0 %207
  %vm209 = vcmask 507128
  %210 = vst.msk [vmem:[%s1] sm:$0x1] %vm209, %v208
  %s211 = scalar_lea.vmem %s0, 5
  %v212 = vld [vmem:[%s211] sm:$0x1]
  %213 = vrot.lane.b32.xlu0 %v212, 27
  %v214 = vpop.permute.xlu0 %213
  %vm215 = vcmask 474328
  %s216 = scalar_lea.vmem %s1, 1
  %217 = vst.msk [vmem:[%s216] sm:$0x1] %vm215, %v214
  %s218 = scalar_lea.vmem %s0, 9
  %v219 = vld [vmem:[%s218] sm:$0x1]
  %220 = vrot.lane.b32.xlu0 %v219, 23
  %v221 = vpop.permute.xlu0 %220
  %vm222 = vcmask 441528
  %s223 = scalar_lea.vmem %s1, 2
  %224 = vst.msk [vmem:[%s223] sm:$0x1] %vm222, %v221
  %s225 = scalar_lea.vmem %s0, 13
  %v226 = vld [vmem:[%s225] sm:$0x1]
  %227 = vrot.lane.b32.xlu0 %v226, 19
  %v228 = vpop.permute.xlu0 %227
  %vm229 = vcmask 408728
  %s230 = scalar_lea.vmem %s1, 3
  %231 = vst.msk [vmem:[%s230] sm:$0x1] %vm229, %v228
  %s232 = scalar_lea.vmem %s0, 17
  %v233 = vld [vmem:[%s232] sm:$0x1]
  %234 = vrot.lane.b32.xlu0 %v233, 15
  %v235 = vpop.permute.xlu0 %234
  %vm236 = vcmask 375928
  %s237 = scalar_lea.vmem %s1, 4
  %238 = vst.msk [vmem:[%s237] sm:$0x1] %vm236, %v235
  %s239 = scalar_lea.vmem %s0, 21
  %v240 = vld [vmem:[%s239] sm:$0x1]
  %241 = vrot.lane.b32.xlu0 %v240, 11
  %v242 = vpop.permute.xlu0 %241
  %vm243 = vcmask 343128
  %s244 = scalar_lea.vmem %s1, 5
  %245 = vst.msk [vmem:[%s244] sm:$0x1] %vm243, %v242
  %s246 = scalar_lea.vmem %s0, 25
  %v247 = vld [vmem:[%s246] sm:$0x1]
  %248 = vrot.lane.b32.xlu0 %v247, 7
  %v249 = vpop.permute.xlu0 %248
  %vm250 = vcmask 310328
  %s251 = scalar_lea.vmem %s1, 6
  %252 = vst.msk [vmem:[%s251] sm:$0x1] %vm250, %v249
  %s253 = scalar_lea.vmem %s0, 29
  %v254 = vld [vmem:[%s253] sm:$0x1]
  %255 = vrot.lane.b32.xlu0 %v254, 3
  %v256 = vpop.permute.xlu0 %255
  %vm257 = vcmask 277528
  %s258 = scalar_lea.vmem %s1, 7
  %259 = vst.msk [vmem:[%s258] sm:$0x1] %vm257, %v256

// kernel: tile.15
$region0: #{tile.15}
  #allocation0 [shape = 's32[1]{0}', space=sflag, size = 0x4, scoped, tag = 'scoped memory for tile.15']
  %s0 = inlined_call_operand.vmem [shape: s32[961], index: 0, kind: input, shape index: {}]
  %s1 = inlined_call_operand.vmem [shape: s32[2,961], index: 1, kind: output, shape index: {}]
  // Predicated region
  $region2: #{tile.15} parent=0 // pred_check
    _
  $region3: #{tile.15} parent=0 // pred_check_branch
    %3 = sbr.rel (0) target = $region5
  $region4: #{tile.15} parent=0 // pred_region
    _
  $region5: #{tile.15} parent=0 // pred_fallthru
    _
  %v4 = vld [vmem:[%s0] ss:$0 sm:$0xff]
  %5 = vst [vmem:[%s1] sm:$0x3] %v4
  %s6 = scalar_lea.vmem %s0, 1
  %v7 = vld [vmem:[%s6] ss:$0 sm:$0xff]
  %s8 = scalar_lea.vmem %s1, 2
  %9 = vst [vmem:[%s8] sm:$0x3] %v7
  %s10 = scalar_lea.vmem %s0, 2
  %v11 = vld [vmem:[%s10] ss:$0 sm:$0xff]
  %s12 = scalar_lea.vmem %s1, 4
  %13 = vst [vmem:[%s12] sm:$0x3] %v11
  %s14 = scalar_lea.vmem %s0, 3
  %v15 = vld [vmem:[%s14] ss:$0 sm:$0xff]
  %s16 = scalar_lea.vmem %s1, 6
  %17 = vst [vmem:[%s16] sm:$0x3] %v15
  %s18 = scalar_lea.vmem %s0, 4
  %v19 = vld [vmem:[%s18] ss:$0 sm:$0xff]
  %s20 = scalar_lea.vmem %s1, 8
  %21 = vst [vmem:[%s20] sm:$0x3] %v19
  %s22 = scalar_lea.vmem %s0, 5
  %v23 = vld [vmem:[%s22] ss:$0 sm:$0xff]
  %s24 = scalar_lea.vmem %s1, 10
  %25 = vst [vmem:[%s24] sm:$0x3] %v23
  %s26 = scalar_lea.vmem %s0, 6
  %v27 = vld [vmem:[%s26] ss:$0 sm:$0xff]
  %s28 = scalar_lea.vmem %s1, 12
  %29 = vst [vmem:[%s28] sm:$0x3] %v27
  %s30 = scalar_lea.vmem %s0, 7
  %v31 = vld [vmem:[%s30] ss:$0 sm:$0xff]
  %s32 = scalar_lea.vmem %s1, 14
  %33 = vst [vmem:[%s32] sm:$0x3] %v31

// kernel: tile.17
$region0: #{tile.17}
  %s0 = inlined_call_operand.vmem [shape: s32[2,961], index: 0, kind: input, shape index: {}]
  %s1 = inlined_call_operand.vmem [shape: s32[1,1922], index: 1, kind: output, shape index: {}]
  $region1: #{tile.17} parent=0
    #allocation0 [shape = 'u8[65536]{0}', space=vmem, size = 0x10000, scoped, tag = 'scoped mem for output reshape']
    #allocation1 [shape = 'u8[32768]{0}', space=vmem, size = 0x8000, scoped, tag = 'scoped mem for input reshape']
    %s3 = sshllo.u32 0, 2
    %s4 = smul.addr 2, 7
    %s5 = scalar_lea.vmem %s0, %s4
    %v6 = vld [vmem:[%s5] sm:%s3]
    %s7 = scalar_lea.vmem [#allocation1], 56
    %8 = vst [vmem:[%s7] sm:%s3] %v6
    %s9 = smul.addr 2, 6
    %s10 = scalar_lea.vmem %s0, %s9
    %v11 = vld [vmem:[%s10] sm:%s3]
    %s12 = scalar_lea.vmem [#allocation1], 48
    %13 = vst [vmem:[%s12] sm:%s3] %v11
    %s14 = smul.addr 2, 5
    %s15 = scalar_lea.vmem %s0, %s14
    %v16 = vld [vmem:[%s15] sm:%s3]
    %s17 = scalar_lea.vmem [#allocation1], 40
    %18 = vst [vmem:[%s17] sm:%s3] %v16
    %s19 = smul.addr 2, 4
    %s20 = scalar_lea.vmem %s0, %s19
    %v21 = vld [vmem:[%s20] sm:%s3]
    %s22 = scalar_lea.vmem [#allocation1], 32
    %23 = vst [vmem:[%s22] sm:%s3] %v21
    %s24 = smul.addr 2, 3
    %s25 = scalar_lea.vmem %s0, %s24
    %v26 = vld [vmem:[%s25] sm:%s3]
    %s27 = scalar_lea.vmem [#allocation1], 24
    %28 = vst [vmem:[%s27] sm:%s3] %v26
    %s29 = smul.addr 2, 2
    %s30 = scalar_lea.vmem %s0, %s29
    %v31 = vld [vmem:[%s30] sm:%s3]
    %s32 = scalar_lea.vmem [#allocation1], 16
    %33 = vst [vmem:[%s32] sm:%s3] %v31
    %s34 = scalar_lea.vmem %s0, 2
    %v35 = vld [vmem:[%s34] sm:%s3]
    %s36 = scalar_lea.vmem [#allocation1], 8
    %37 = vst [vmem:[%s36] sm:%s3] %v35
    %v38 = vld [vmem:[%s0] sm:%s3]
    %39 = vst [vmem:[#allocation1] sm:%s3] %v38
    %s40 = scalar_lea.vmem [#allocation1], 56
    %v41 = vld [vmem:[%s40] sm:$0x1]
    %vm42 = vcmask 531456
    %s43 = scalar_lea.vmem [#allocation0], 56
    %44 = vst.msk [vmem:[%s43] sm:$0x1] %vm42, %v41
    %v45 = vld [vmem:[#allocation1] ss:$8 sm:$0xf]
    %v46 = vld [vmem:[#allocation1] ss:$8 sm:$0x70]
    %vm47 = vcmask 1046532
    %v48 = vsel %vm47, %v46, %v45
    %49 = vst [vmem:[#allocation0] ss:$8 sm:$0xf] %v48
    %50 = vst [vmem:[#allocation0] ss:$8 sm:$0x70] %v48
    %s51 = scalar_lea.vmem [#allocation1], 57
    %v52 = vld [vmem:[%s51] sm:$0x1]
    %s53 = scalar_lea.vmem [#allocation1], 9
    %v54 = vld [vmem:[%s53] ss:$8 sm:$0x7]
    %s55 = scalar_lea.vmem [#allocation1], 4294967177
    %s56 = smov 24
    %v57 = vld [vmem:[%s55] ss:$40 sm:%s56]
    %vm58 = vcmask 1044483
    %v59 = vsel %vm58, %v57, %v54
    %s60 = scalar_lea.vmem [#allocation1], 9
    %s61 = smov 96
    %v62 = vld [vmem:[%s60] ss:$8 sm:%s61]
    %vm63 = vcmask 1046533
    %v64 = vsel %vm63, %v62, %v59
    %s65 = scalar_lea.vmem [#allocation1], 26
    %v66 = vld [vmem:[%s65] sm:$0x80]
    %vm67 = vcmask 1047559
    %v68 = vsel %vm67, %v66, %v64
    %vm69 = vcmask 515072
    %v70 = vsel %vm69, %v68, %v52
    %71 = vrot.lane.b32.xlu0 %v70, 65
    %v72 = vpop.permute.xlu0 %71
    %vm73 = vcmask 15360
    %s74 = scalar_lea.vmem [#allocation0], 120
    %75 = vst.msk [vmem:[%s74] sm:$0x1] %vm73, %v72
    %vm76 = vcmask 1048072
    %s77 = scalar_lea.vmem [#allocation0], 64
    %78 = vst.msk [vmem:[%s77] ss:$8 sm:$0x7] %vm76, %v72
    %s79 = scalar_lea.vmem [#allocation0], 4294967232
    %80 = vst.msk [vmem:[%s79] ss:$40 sm:$0x18] %vm76, %v72
    %s81 = scalar_lea.vmem [#allocation0], 64
    %82 = vst.msk [vmem:[%s81] ss:$8 sm:$0x60] %vm76, %v72
    %s83 = scalar_lea.vmem [#allocation0], 81
    %84 = vst.msk [vmem:[%s83] sm:$0x80] %vm76, %v72
    %s85 = scalar_lea.vmem [#allocation1], 1
    %v86 = vld [vmem:[%s85] ss:$8 sm:$0xf]
    %s87 = scalar_lea.vmem [#allocation1], 1
    %v88 = vld [vmem:[%s87] ss:$8 sm:$0x70]
    %vm89 = vcmask 1046532
    %v90 = vsel %vm89, %v88, %v86
    %91 = vrot.lane.b32.xlu0 %v90, 65
    %v92 = vpop.permute.xlu0 %91
    %vm93 = vcmask 531456
    %s94 = scalar_lea.vmem [#allocation0], 64
    %95 = vst.msk [vmem:[%s94] ss:$8 sm:$0xf] %vm93, %v92
    %s96 = scalar_lea.vmem [#allocation0], 64
    %97 = vst.msk [vmem:[%s96] ss:$8 sm:$0x70] %vm93, %v92
    %s99 = sshllo.u32 0, 1
    %v101 = vld [vmem:[#allocation0] sm:%s99]
    %s102 = sshllo.u32 0, 1
    %103 = vst [vmem:[%s1] sm:%s102] %v101
    %s104 = scalar_lea.vmem [#allocation0], 8
    %v105 = vld [vmem:[%s104] sm:%s99]
    %s106 = sshllo.u32 0, 1
    %s107 = scalar_lea.vmem %s1, 1
    %108 = vst [vmem:[%s107] sm:%s106] %v105
    %s109 = scalar_lea.vmem [#allocation0], 16
    %v110 = vld [vmem:[%s109] sm:%s99]
    %s111 = sshllo.u32 0, 1
    %s112 = smul.addr 1, 2
    %s113 = scalar_lea.vmem %s1, %s112
    %114 = vst [vmem:[%s113] sm:%s111] %v110
    %s115 = scalar_lea.vmem [#allocation0], 24
    %v116 = vld [vmem:[%s115] sm:%s99]
    %s117 = sshllo.u32 0, 1
    %s118 = smul.addr 1, 3
    %s119 = scalar_lea.vmem %s1, %s118
    %120 = vst [vmem:[%s119] sm:%s117] %v116
    %s121 = scalar_lea.vmem [#allocation0], 32
    %v122 = vld [vmem:[%s121] sm:%s99]
    %s123 = sshllo.u32 0, 1
    %s124 = smul.addr 1, 4
    %s125 = scalar_lea.vmem %s1, %s124
    %126 = vst [vmem:[%s125] sm:%s123] %v122
    %s127 = scalar_lea.vmem [#allocation0], 40
    %v128 = vld [vmem:[%s127] sm:%s99]
    %s129 = sshllo.u32 0, 1
    %s130 = smul.addr 1, 5
    %s131 = scalar_lea.vmem %s1, %s130
    %132 = vst [vmem:[%s131] sm:%s129] %v128
    %s133 = scalar_lea.vmem [#allocation0], 48
    %v134 = vld [vmem:[%s133] sm:%s99]
    %s135 = sshllo.u32 0, 1
    %s136 = smul.addr 1, 6
    %s137 = scalar_lea.vmem %s1, %s136
    %138 = vst [vmem:[%s137] sm:%s135] %v134
    %s139 = scalar_lea.vmem [#allocation0], 56
    %v140 = vld [vmem:[%s139] sm:%s99]
    %s141 = sshllo.u32 0, 1
    %s142 = smul.addr 1, 7
    %s143 = scalar_lea.vmem %s1, %s142
    %144 = vst [vmem:[%s143] sm:%s141] %v140
    %s145 = scalar_lea.vmem [#allocation0], 64
    %v146 = vld [vmem:[%s145] sm:%s99]
    %s147 = sshllo.u32 0, 1
    %s148 = smul.addr 1, 8
    %s149 = scalar_lea.vmem %s1, %s148
    %150 = vst [vmem:[%s149] sm:%s147] %v146
    %s151 = scalar_lea.vmem [#allocation0], 72
    %v152 = vld [vmem:[%s151] sm:%s99]
    %s153 = sshllo.u32 0, 1
    %s154 = smul.addr 1, 9
    %s155 = scalar_lea.vmem %s1, %s154
    %156 = vst [vmem:[%s155] sm:%s153] %v152
    %s157 = scalar_lea.vmem [#allocation0], 80
    %v158 = vld [vmem:[%s157] sm:%s99]
    %s159 = sshllo.u32 0, 1
    %s160 = smul.addr 1, 10
    %s161 = scalar_lea.vmem %s1, %s160
    %162 = vst [vmem:[%s161] sm:%s159] %v158
    %s163 = scalar_lea.vmem [#allocation0], 88
    %v164 = vld [vmem:[%s163] sm:%s99]
    %s165 = sshllo.u32 0, 1
    %s166 = smul.addr 1, 11
    %s167 = scalar_lea.vmem %s1, %s166
    %168 = vst [vmem:[%s167] sm:%s165] %v164
    %s169 = scalar_lea.vmem [#allocation0], 96
    %v170 = vld [vmem:[%s169] sm:%s99]
    %s171 = sshllo.u32 0, 1
    %s172 = smul.addr 1, 12
    %s173 = scalar_lea.vmem %s1, %s172
    %174 = vst [vmem:[%s173] sm:%s171] %v170
    %s175 = scalar_lea.vmem [#allocation0], 104
    %v176 = vld [vmem:[%s175] sm:%s99]
    %s177 = sshllo.u32 0, 1
    %s178 = smul.addr 1, 13
    %s179 = scalar_lea.vmem %s1, %s178
    %180 = vst [vmem:[%s179] sm:%s177] %v176
    %s181 = scalar_lea.vmem [#allocation0], 112
    %v182 = vld [vmem:[%s181] sm:%s99]
    %s183 = sshllo.u32 0, 1
    %s184 = smul.addr 1, 14
    %s185 = scalar_lea.vmem %s1, %s184
    %186 = vst [vmem:[%s185] sm:%s183] %v182
    %s187 = scalar_lea.vmem [#allocation0], 120
    %v188 = vld [vmem:[%s187] sm:%s99]
    %s189 = sshllo.u32 0, 1
    %s190 = smul.addr 1, 15
    %s191 = scalar_lea.vmem %s1, %s190
    %192 = vst [vmem:[%s191] sm:%s189] %v188

// kernel: tile.16
$region0: #{tile.16}
  %s0 = inlined_call_operand.vmem [shape: s32[62,31], index: 0, kind: input, shape index: {}]
  %s1 = inlined_call_operand.vmem [shape: s32[1,1922], index: 1, kind: output, shape index: {}]
  $region1: #{tile.16} parent=0
    #allocation0 [shape = 'u8[65536]{0}', space=vmem, size = 0x10000, scoped, tag = 'scoped mem for output reshape']
    %v2 = vld [vmem:[%s0] sm:$0x1]
    %vm3 = vcmask 252928
    %4 = vst.msk [vmem:[#allocation0] sm:$0x1] %vm3, %v2
    %s5 = scalar_lea.vmem %s0, 33
    %v6 = vld [vmem:[%s5] sm:$0x1]
    %s7 = scalar_lea.vmem %s0, 33
    %v8 = vld [vmem:[%s7] sm:$0x1]
    %vm9 = vcmask 7168
    %v10 = vsel %vm9, %v8, %v6
    %11 = vrot.lane.b32.xlu0 %v10, 127
    %v12 = vpop.permute.xlu0 %11
    %vm13 = vcmask 244736
    %s14 = scalar_lea.vmem [#allocation0], 64
    %15 = vst.msk [vmem:[%s14] sm:$0x1] %vm13, %v12
    %vm16 = vcmask 1048568
    %s17 = scalar_lea.vmem [#allocation0], 56
    %18 = vst.msk [vmem:[%s17] sm:$0x1] %vm16, %v12
    %s19 = scalar_lea.vmem %s0, 4
    %v20 = vld [vmem:[%s19] sm:$0x1]
    %s21 = scalar_lea.vmem %s0, 4
    %v22 = vld [vmem:[%s21] sm:$0x1]
    %vm23 = vcmask 31744
    %v24 = vsel %vm23, %v22, %v20
    %25 = vrot.lane.b32.xlu0 %v24, 124
    %v26 = vpop.permute.xlu0 %25
    %vm27 = vcmask 220160
    %s28 = scalar_lea.vmem [#allocation0], 8
    %29 = vst.msk [vmem:[%s28] sm:$0x1] %vm27, %v26
    %vm30 = vcmask 1048544
    %31 = vst.msk [vmem:[#allocation0] sm:$0x1] %vm30, %v26
    %s32 = scalar_lea.vmem %s0, 37
    %v33 = vld [vmem:[%s32] sm:$0x1]
    %s34 = scalar_lea.vmem %s0, 37
    %v35 = vld [vmem:[%s34] sm:$0x1]
    %vm36 = vcmask 39936
    %v37 = vsel %vm36, %v35, %v33
    %38 = vrot.lane.b32.xlu0 %v37, 123
    %v39 = vpop.permute.xlu0 %38
    %vm40 = vcmask 211968
    %s41 = scalar_lea.vmem [#allocation0], 72
    %42 = vst.msk [vmem:[%s41] sm:$0x1] %vm40, %v39
    %vm43 = vcmask 1048536
    %s44 = scalar_lea.vmem [#allocation0], 64
    %45 = vst.msk [vmem:[%s44] sm:$0x1] %vm43, %v39
    %s46 = scalar_lea.vmem %s0, 8
    %v47 = vld [vmem:[%s46] sm:$0x1]
    %s48 = scalar_lea.vmem %s0, 8
    %v49 = vld [vmem:[%s48] sm:$0x1]
    %vm50 = vcmask 64512
    %v51 = vsel %vm50, %v49, %v47
    %52 = vrot.lane.b32.xlu0 %v51, 120
    %v53 = vpop.permute.xlu0 %52
    %vm54 = vcmask 187392
    %s55 = scalar_lea.vmem [#allocation0], 16
    %56 = vst.msk [vmem:[%s55] sm:$0x1] %vm54, %v53
    %vm57 = vcmask 1048512
    %s58 = scalar_lea.vmem [#allocation0], 8
    %59 = vst.msk [vmem:[%s58] sm:$0x1] %vm57, %v53
    %s60 = scalar_lea.vmem %s0, 41
    %v61 = vld [vmem:[%s60] sm:$0x1]
    %s62 = scalar_lea.vmem %s0, 41
    %v63 = vld [vmem:[%s62] sm:$0x1]
    %vm64 = vcmask 72704
    %v65 = vsel %vm64, %v63, %v61
    %66 = vrot.lane.b32.xlu0 %v65, 119
    %v67 = vpop.permute.xlu0 %66
    %vm68 = vcmask 179200
    %s69 = scalar_lea.vmem [#allocation0], 80
    %70 = vst.msk [vmem:[%s69] sm:$0x1] %vm68, %v67
    %vm71 = vcmask 1048504
    %s72 = scalar_lea.vmem [#allocation0], 72
    %73 = vst.msk [vmem:[%s72] sm:$0x1] %vm71, %v67
    %s74 = scalar_lea.vmem %s0, 12
    %v75 = vld [vmem:[%s74] sm:$0x1]
    %s76 = scalar_lea.vmem %s0, 12
    %v77 = vld [vmem:[%s76] sm:$0x1]
    %vm78 = vcmask 97280
    %v79 = vsel %vm78, %v77, %v75
    %80 = vrot.lane.b32.xlu0 %v79, 116
    %v81 = vpop.permute.xlu0 %80
    %vm82 = vcmask 154624
    %s83 = scalar_lea.vmem [#allocation0], 24
    %84 = vst.msk [vmem:[%s83] sm:$0x1] %vm82, %v81
    %vm85 = vcmask 1048480
    %s86 = scalar_lea.vmem [#allocation0], 16
    %87 = vst.msk [vmem:[%s86] sm:$0x1] %vm85, %v81
    %s88 = scalar_lea.vmem %s0, 45
    %v89 = vld [vmem:[%s88] sm:$0x1]
    %s90 = scalar_lea.vmem %s0, 45
    %v91 = vld [vmem:[%s90] sm:$0x1]
    %vm92 = vcmask 105472
    %v93 = vsel %vm92, %v91, %v89
    %94 = vrot.lane.b32.xlu0 %v93, 115
    %v95 = vpop.permute.xlu0 %94
    %vm96 = vcmask 146432
    %s97 = scalar_lea.vmem [#allocation0], 88
    %98 = vst.msk [vmem:[%s97] sm:$0x1] %vm96, %v95
    %vm99 = vcmask 1048472
    %s100 = scalar_lea.vmem [#allocation0], 80
    %101 = vst.msk [vmem:[%s100] sm:$0x1] %vm99, %v95
    %s102 = scalar_lea.vmem %s0, 16
    %v103 = vld [vmem:[%s102] sm:$0x1]
    %s104 = scalar_lea.vmem %s0, 16
    %v105 = vld [vmem:[%s104] sm:$0x1]
    %vm106 = vcmask 130048
    %v107 = vsel %vm106, %v105, %v103
    %108 = vrot.lane.b32.xlu0 %v107, 112
    %v109 = vpop.permute.xlu0 %108
    %vm110 = vcmask 121856
    %s111 = scalar_lea.vmem [#allocation0], 32
    %112 = vst.msk [vmem:[%s111] sm:$0x1] %vm110, %v109
    %vm113 = vcmask 1048448
    %s114 = scalar_lea.vmem [#allocation0], 24
    %115 = vst.msk [vmem:[%s114] sm:$0x1] %vm113, %v109
    %s116 = scalar_lea.vmem %s0, 49
    %v117 = vld [vmem:[%s116] sm:$0x1]
    %s118 = scalar_lea.vmem %s0, 49
    %v119 = vld [vmem:[%s118] sm:$0x1]
    %vm120 = vcmask 138240
    %v121 = vsel %vm120, %v119, %v117
    %122 = vrot.lane.b32.xlu0 %v121, 111
    %v123 = vpop.permute.xlu0 %122
    %vm124 = vcmask 113664
    %s125 = scalar_lea.vmem [#allocation0], 96
    %126 = vst.msk [vmem:[%s125] sm:$0x1] %vm124, %v123
    %vm127 = vcmask 1048440
    %s128 = scalar_lea.vmem [#allocation0], 88
    %129 = vst.msk [vmem:[%s128] sm:$0x1] %vm127, %v123
    %s130 = scalar_lea.vmem %s0, 20
    %v131 = vld [vmem:[%s130] sm:$0x1]
    %s132 = scalar_lea.vmem %s0, 20
    %v133 = vld [vmem:[%s132] sm:$0x1]
    %vm134 = vcmask 162816
    %v135 = vsel %vm134, %v133, %v131
    %136 = vrot.lane.b32.xlu0 %v135, 108
    %v137 = vpop.permute.xlu0 %136
    %vm138 = vcmask 89088
    %s139 = scalar_lea.vmem [#allocation0], 40
    %140 = vst.msk [vmem:[%s139] sm:$0x1] %vm138, %v137
    %vm141 = vcmask 1048416
    %s142 = scalar_lea.vmem [#allocation0], 32
    %143 = vst.msk [vmem:[%s142] sm:$0x1] %vm141, %v137
    %s144 = scalar_lea.vmem %s0, 53
    %v145 = vld [vmem:[%s144] sm:$0x1]
    %s146 = scalar_lea.vmem %s0, 53
    %v147 = vld [vmem:[%s146] sm:$0x1]
    %vm148 = vcmask 171008
    %v149 = vsel %vm148, %v147, %v145
    %150 = vrot.lane.b32.xlu0 %v149, 107
    %v151 = vpop.permute.xlu0 %150
    %vm152 = vcmask 80896
    %s153 = scalar_lea.vmem [#allocation0], 104
    %154 = vst.msk [vmem:[%s153] sm:$0x1] %vm152, %v151
    %vm155 = vcmask 1048408
    %s156 = scalar_lea.vmem [#allocation0], 96
    %157 = vst.msk [vmem:[%s156] sm:$0x1] %vm155, %v151
    %s158 = scalar_lea.vmem %s0, 24
    %v159 = vld [vmem:[%s158] sm:$0x1]
    %s160 = scalar_lea.vmem %s0, 24
    %v161 = vld [vmem:[%s160] sm:$0x1]
    %vm162 = vcmask 195584
    %v163 = vsel %vm162, %v161, %v159
    %164 = vrot.lane.b32.xlu0 %v163, 104
    %v165 = vpop.permute.xlu0 %164
    %vm166 = vcmask 56320
    %s167 = scalar_lea.vmem [#allocation0], 48
    %168 = vst.msk [vmem:[%s167] sm:$0x1] %vm166, %v165
    %vm169 = vcmask 1048384
    %s170 = scalar_lea.vmem [#allocation0], 40
    %171 = vst.msk [vmem:[%s170] sm:$0x1] %vm169, %v165
    %s172 = scalar_lea.vmem %s0, 57
    %v173 = vld [vmem:[%s172] sm:$0x1]
    %s174 = scalar_lea.vmem %s0, 57
    %v175 = vld [vmem:[%s174] sm:$0x1]
    %vm176 = vcmask 203776
    %v177 = vsel %vm176, %v175, %v173
    %178 = vrot.lane.b32.xlu0 %v177, 103
    %v179 = vpop.permute.xlu0 %178
    %vm180 = vcmask 48128
    %s181 = scalar_lea.vmem [#allocation0], 112
    %182 = vst.msk [vmem:[%s181] sm:$0x1] %vm180, %v179
    %vm183 = vcmask 1048376
    %s184 = scalar_lea.vmem [#allocation0], 104
    %185 = vst.msk [vmem:[%s184] sm:$0x1] %vm183, %v179
    %s186 = scalar_lea.vmem %s0, 28
    %v187 = vld [vmem:[%s186] sm:$0x1]
    %s188 = scalar_lea.vmem %s0, 28
    %v189 = vld [vmem:[%s188] sm:$0x1]
    %vm190 = vcmask 228352
    %v191 = vsel %vm190, %v189, %v187
    %192 = vrot.lane.b32.xlu0 %v191, 100
    %v193 = vpop.permute.xlu0 %192
    %vm194 = vcmask 23552
    %s195 = scalar_lea.vmem [#allocation0], 56
    %196 = vst.msk [vmem:[%s195] sm:$0x1] %vm194, %v193
    %vm197 = vcmask 1048352
    %s198 = scalar_lea.vmem [#allocation0], 48
    %199 = vst.msk [vmem:[%s198] sm:$0x1] %vm197, %v193
    %s200 = scalar_lea.vmem %s0, 61
    %v201 = vld [vmem:[%s200] sm:$0x1]
    %s202 = scalar_lea.vmem %s0, 61
    %v203 = vld [vmem:[%s202] sm:$0x1]
    %vm204 = vcmask 236544
    %v205 = vsel %vm204, %v203, %v201
    %206 = vrot.lane.b32.xlu0 %v205, 99
    %v207 = vpop.permute.xlu0 %206
    %vm208 = vcmask 15360
    %s209 = scalar_lea.vmem [#allocation0], 120
    %210 = vst.msk [vmem:[%s209] sm:$0x1] %vm208, %v207
    %vm211 = vcmask 1048344
    %s212 = scalar_lea.vmem [#allocation0], 112
    %213 = vst.msk [vmem:[%s212] sm:$0x1] %vm211, %v207
    %s214 = scalar_lea.vmem %s0, 32
    %v215 = vld [vmem:[%s214] sm:$0x1]
    %216 = vrot.lane.b32.xlu0 %v215, 96
    %v217 = vpop.permute.xlu0 %216
    %vm218 = vcmask 1040128
    %s219 = scalar_lea.vmem [#allocation0], 56
    %220 = vst.msk [vmem:[%s219] sm:$0x1] %vm218, %v217
    %s221 = scalar_lea.vmem %s0, 3
    %v222 = vld [vmem:[%s221] sm:$0x1]
    %223 = vrot.lane.b32.xlu0 %v222, 93
    %v224 = vpop.permute.xlu0 %223
    %vm225 = vcmask 1015528
    %226 = vst.msk [vmem:[#allocation0] sm:$0x1] %vm225, %v224
    %s227 = scalar_lea.vmem %s0, 36
    %v228 = vld [vmem:[%s227] sm:$0x1]
    %229 = vrot.lane.b32.xlu0 %v228, 92
    %v230 = vpop.permute.xlu0 %229
    %vm231 = vcmask 1007328
    %s232 = scalar_lea.vmem [#allocation0], 64
    %233 = vst.msk [vmem:[%s232] sm:$0x1] %vm231, %v230
    %s234 = scalar_lea.vmem %s0, 7
    %v235 = vld [vmem:[%s234] sm:$0x1]
    %236 = vrot.lane.b32.xlu0 %v235, 89
    %v237 = vpop.permute.xlu0 %236
    %vm238 = vcmask 982728
    %s239 = scalar_lea.vmem [#allocation0], 8
    %240 = vst.msk [vmem:[%s239] sm:$0x1] %vm238, %v237
    %s241 = scalar_lea.vmem %s0, 40
    %v242 = vld [vmem:[%s241] sm:$0x1]
    %243 = vrot.lane.b32.xlu0 %v242, 88
    %v244 = vpop.permute.xlu0 %243
    %vm245 = vcmask 974528
    %s246 = scalar_lea.vmem [#allocation0], 72
    %247 = vst.msk [vmem:[%s246] sm:$0x1] %vm245, %v244
    %s248 = scalar_lea.vmem %s0, 11
    %v249 = vld [vmem:[%s248] sm:$0x1]
    %250 = vrot.lane.b32.xlu0 %v249, 85
    %v251 = vpop.permute.xlu0 %250
    %vm252 = vcmask 949928
    %s253 = scalar_lea.vmem [#allocation0], 16
    %254 = vst.msk [vmem:[%s253] sm:$0x1] %vm252, %v251
    %s255 = scalar_lea.vmem %s0, 44
    %v256 = vld [vmem:[%s255] sm:$0x1]
    %257 = vrot.lane.b32.xlu0 %v256, 84
    %v258 = vpop.permute.xlu0 %257
    %vm259 = vcmask 941728
    %s260 = scalar_lea.vmem [#allocation0], 80
    %261 = vst.msk [vmem:[%s260] sm:$0x1] %vm259, %v258
    %s262 = scalar_lea.vmem %s0, 15
    %v263 = vld [vmem:[%s262] sm:$0x1]
    %264 = vrot.lane.b32.xlu0 %v263, 81
    %v265 = vpop.permute.xlu0 %264
    %vm266 = vcmask 917128
    %s267 = scalar_lea.vmem [#allocation0], 24
    %268 = vst.msk [vmem:[%s267] sm:$0x1] %vm266, %v265
    %s269 = scalar_lea.vmem %s0, 48
    %v270 = vld [vmem:[%s269] sm:$0x1]
    %271 = vrot.lane.b32.xlu0 %v270, 80
    %v272 = vpop.permute.xlu0 %271
    %vm273 = vcmask 908928
    %s274 = scalar_lea.vmem [#allocation0], 88
    %275 = vst.msk [vmem:[%s274] sm:$0x1] %vm273, %v272
    %s276 = scalar_lea.vmem %s0, 19
    %v277 = vld [vmem:[%s276] sm:$0x1]
    %278 = vrot.lane.b32.xlu0 %v277, 77
    %v279 = vpop.permute.xlu0 %278
    %vm280 = vcmask 884328
    %s281 = scalar_lea.vmem [#allocation0], 32
    %282 = vst.msk [vmem:[%s281] sm:$0x1] %vm280, %v279
    %s283 = scalar_lea.vmem %s0, 52
    %v284 = vld [vmem:[%s283] sm:$0x1]
    %285 = vrot.lane.b32.xlu0 %v284, 76
    %v286 = vpop.permute.xlu0 %285
    %vm287 = vcmask 876128
    %s288 = scalar_lea.vmem [#allocation0], 96
    %289 = vst.msk [vmem:[%s288] sm:$0x1] %vm287, %v286
    %s290 = scalar_lea.vmem %s0, 23
    %v291 = vld [vmem:[%s290] sm:$0x1]
    %292 = vrot.lane.b32.xlu0 %v291, 73
    %v293 = vpop.permute.xlu0 %292
    %vm294 = vcmask 851528
    %s295 = scalar_lea.vmem [#allocation0], 40
    %296 = vst.msk [vmem:[%s295] sm:$0x1] %vm294, %v293
    %s297 = scalar_lea.vmem %s0, 56
    %v298 = vld [vmem:[%s297] sm:$0x1]
    %299 = vrot.lane.b32.xlu0 %v298, 72
    %v300 = vpop.permute.xlu0 %299
    %vm301 = vcmask 843328
    %s302 = scalar_lea.vmem [#allocation0], 104
    %303 = vst.msk [vmem:[%s302] sm:$0x1] %vm301, %v300
    %s304 = scalar_lea.vmem %s0, 27
    %v305 = vld [vmem:[%s304] sm:$0x1]
    %306 = vrot.lane.b32.xlu0 %v305, 69
    %v307 = vpop.permute.xlu0 %306
    %vm308 = vcmask 818728
    %s309 = scalar_lea.vmem [#allocation0], 48
    %310 = vst.msk [vmem:[%s309] sm:$0x1] %vm308, %v307
    %s311 = scalar_lea.vmem %s0, 60
    %v312 = vld [vmem:[%s311] sm:$0x1]
    %313 = vrot.lane.b32.xlu0 %v312, 68
    %v314 = vpop.permute.xlu0 %313
    %vm315 = vcmask 810528
    %s316 = scalar_lea.vmem [#allocation0], 112
    %317 = vst.msk [vmem:[%s316] sm:$0x1] %vm315, %v314
    %s318 = scalar_lea.vmem %s0, 31
    %v319 = vld [vmem:[%s318] sm:$0x1]
    %320 = vrot.lane.b32.xlu0 %v319, 65
    %v321 = vpop.permute.xlu0 %320
    %vm322 = vcmask 785928
    %s323 = scalar_lea.vmem [#allocation0], 56
    %324 = vst.msk [vmem:[%s323] sm:$0x1] %vm322, %v321
    %s325 = scalar_lea.vmem %s0, 2
    %v326 = vld [vmem:[%s325] sm:$0x1]
    %327 = vrot.lane.b32.xlu0 %v326, 62
    %v328 = vpop.permute.xlu0 %327
    %vm329 = vcmask 761328
    %330 = vst.msk [vmem:[#allocation0] sm:$0x1] %vm329, %v328
    %s331 = scalar_lea.vmem %s0, 35
    %v332 = vld [vmem:[%s331] sm:$0x1]
    %333 = vrot.lane.b32.xlu0 %v332, 61
    %v334 = vpop.permute.xlu0 %333
    %vm335 = vcmask 753128
    %s336 = scalar_lea.vmem [#allocation0], 64
    %337 = vst.msk [vmem:[%s336] sm:$0x1] %vm335, %v334
    %s338 = scalar_lea.vmem %s0, 6
    %v339 = vld [vmem:[%s338] sm:$0x1]
    %340 = vrot.lane.b32.xlu0 %v339, 58
    %v341 = vpop.permute.xlu0 %340
    %vm342 = vcmask 728528
    %s343 = scalar_lea.vmem [#allocation0], 8
    %344 = vst.msk [vmem:[%s343] sm:$0x1] %vm342, %v341
    %s345 = scalar_lea.vmem %s0, 39
    %v346 = vld [vmem:[%s345] sm:$0x1]
    %347 = vrot.lane.b32.xlu0 %v346, 57
    %v348 = vpop.permute.xlu0 %347
    %vm349 = vcmask 720328
    %s350 = scalar_lea.vmem [#allocation0], 72
    %351 = vst.msk [vmem:[%s350] sm:$0x1] %vm349, %v348
    %s352 = scalar_lea.vmem %s0, 10
    %v353 = vld [vmem:[%s352] sm:$0x1]
    %354 = vrot.lane.b32.xlu0 %v353, 54
    %v355 = vpop.permute.xlu0 %354
    %vm356 = vcmask 695728
    %s357 = scalar_lea.vmem [#allocation0], 16
    %358 = vst.msk [vmem:[%s357] sm:$0x1] %vm356, %v355
    %s359 = scalar_lea.vmem %s0, 43
    %v360 = vld [vmem:[%s359] sm:$0x1]
    %361 = vrot.lane.b32.xlu0 %v360, 53
    %v362 = vpop.permute.xlu0 %361
    %vm363 = vcmask 687528
    %s364 = scalar_lea.vmem [#allocation0], 80
    %365 = vst.msk [vmem:[%s364] sm:$0x1] %vm363, %v362
    %s366 = scalar_lea.vmem %s0, 14
    %v367 = vld [vmem:[%s366] sm:$0x1]
    %368 = vrot.lane.b32.xlu0 %v367, 50
    %v369 = vpop.permute.xlu0 %368
    %vm370 = vcmask 662928
    %s371 = scalar_lea.vmem [#allocation0], 24
    %372 = vst.msk [vmem:[%s371] sm:$0x1] %vm370, %v369
    %s373 = scalar_lea.vmem %s0, 47
    %v374 = vld [vmem:[%s373] sm:$0x1]
    %375 = vrot.lane.b32.xlu0 %v374, 49
    %v376 = vpop.permute.xlu0 %375
    %vm377 = vcmask 654728
    %s378 = scalar_lea.vmem [#allocation0], 88
    %379 = vst.msk [vmem:[%s378] sm:$0x1] %vm377, %v376
    %s380 = scalar_lea.vmem %s0, 18
    %v381 = vld [vmem:[%s380] sm:$0x1]
    %382 = vrot.lane.b32.xlu0 %v381, 46
    %v383 = vpop.permute.xlu0 %382
    %vm384 = vcmask 630128
    %s385 = scalar_lea.vmem [#allocation0], 32
    %386 = vst.msk [vmem:[%s385] sm:$0x1] %vm384, %v383
    %s387 = scalar_lea.vmem %s0, 51
    %v388 = vld [vmem:[%s387] sm:$0x1]
    %389 = vrot.lane.b32.xlu0 %v388, 45
    %v390 = vpop.permute.xlu0 %389
    %vm391 = vcmask 621928
    %s392 = scalar_lea.vmem [#allocation0], 96
    %393 = vst.msk [vmem:[%s392] sm:$0x1] %vm391, %v390
    %s394 = scalar_lea.vmem %s0, 22
    %v395 = vld [vmem:[%s394] sm:$0x1]
    %396 = vrot.lane.b32.xlu0 %v395, 42
    %v397 = vpop.permute.xlu0 %396
    %vm398 = vcmask 597328
    %s399 = scalar_lea.vmem [#allocation0], 40
    %400 = vst.msk [vmem:[%s399] sm:$0x1] %vm398, %v397
    %s401 = scalar_lea.vmem %s0, 55
    %v402 = vld [vmem:[%s401] sm:$0x1]
    %403 = vrot.lane.b32.xlu0 %v402, 41
    %v404 = vpop.permute.xlu0 %403
    %vm405 = vcmask 589128
    %s406 = scalar_lea.vmem [#allocation0], 104
    %407 = vst.msk [vmem:[%s406] sm:$0x1] %vm405, %v404
    %s408 = scalar_lea.vmem %s0, 26
    %v409 = vld [vmem:[%s408] sm:$0x1]
    %410 = vrot.lane.b32.xlu0 %v409, 38
    %v411 = vpop.permute.xlu0 %410
    %vm412 = vcmask 564528
    %s413 = scalar_lea.vmem [#allocation0], 48
    %414 = vst.msk [vmem:[%s413] sm:$0x1] %vm412, %v411
    %s415 = scalar_lea.vmem %s0, 59
    %v416 = vld [vmem:[%s415] sm:$0x1]
    %417 = vrot.lane.b32.xlu0 %v416, 37
    %v418 = vpop.permute.xlu0 %417
    %vm419 = vcmask 556328
    %s420 = scalar_lea.vmem [#allocation0], 112
    %421 = vst.msk [vmem:[%s420] sm:$0x1] %vm419, %v418
    %s422 = scalar_lea.vmem %s0, 30
    %v423 = vld [vmem:[%s422] sm:$0x1]
    %424 = vrot.lane.b32.xlu0 %v423, 34
    %v425 = vpop.permute.xlu0 %424
    %vm426 = vcmask 531728
    %s427 = scalar_lea.vmem [#allocation0], 56
    %428 = vst.msk [vmem:[%s427] sm:$0x1] %vm426, %v425
    %s429 = scalar_lea.vmem %s0, 1
    %v430 = vld [vmem:[%s429] sm:$0x1]
    %431 = vrot.lane.b32.xlu0 %v430, 31
    %v432 = vpop.permute.xlu0 %431
    %vm433 = vcmask 507128
    %434 = vst.msk [vmem:[#allocation0] sm:$0x1] %vm433, %v432
    %s435 = scalar_lea.vmem %s0, 34
    %v436 = vld [vmem:[%s435] sm:$0x1]
    %437 = vrot.lane.b32.xlu0 %v436, 30
    %v438 = vpop.permute.xlu0 %437
    %vm439 = vcmask 498928
    %s440 = scalar_lea.vmem [#allocation0], 64
    %441 = vst.msk [vmem:[%s440] sm:$0x1] %vm439, %v438
    %s442 = scalar_lea.vmem %s0, 5
    %v443 = vld [vmem:[%s442] sm:$0x1]
    %444 = vrot.lane.b32.xlu0 %v443, 27
    %v445 = vpop.permute.xlu0 %444
    %vm446 = vcmask 474328
    %s447 = scalar_lea.vmem [#allocation0], 8
    %448 = vst.msk [vmem:[%s447] sm:$0x1] %vm446, %v445
    %s449 = scalar_lea.vmem %s0, 38
    %v450 = vld [vmem:[%s449] sm:$0x1]
    %451 = vrot.lane.b32.xlu0 %v450, 26
    %v452 = vpop.permute.xlu0 %451
    %vm453 = vcmask 466128
    %s454 = scalar_lea.vmem [#allocation0], 72
    %455 = vst.msk [vmem:[%s454] sm:$0x1] %vm453, %v452
    %s456 = scalar_lea.vmem %s0, 9
    %v457 = vld [vmem:[%s456] sm:$0x1]
    %458 = vrot.lane.b32.xlu0 %v457, 23
    %v459 = vpop.permute.xlu0 %458
    %vm460 = vcmask 441528
    %s461 = scalar_lea.vmem [#allocation0], 16
    %462 = vst.msk [vmem:[%s461] sm:$0x1] %vm460, %v459
    %s463 = scalar_lea.vmem %s0, 42
    %v464 = vld [vmem:[%s463] sm:$0x1]
    %465 = vrot.lane.b32.xlu0 %v464, 22
    %v466 = vpop.permute.xlu0 %465
    %vm467 = vcmask 433328
    %s468 = scalar_lea.vmem [#allocation0], 80
    %469 = vst.msk [vmem:[%s468] sm:$0x1] %vm467, %v466
    %s470 = scalar_lea.vmem %s0, 13
    %v471 = vld [vmem:[%s470] sm:$0x1]
    %472 = vrot.lane.b32.xlu0 %v471, 19
    %v473 = vpop.permute.xlu0 %472
    %vm474 = vcmask 408728
    %s475 = scalar_lea.vmem [#allocation0], 24
    %476 = vst.msk [vmem:[%s475] sm:$0x1] %vm474, %v473
    %s477 = scalar_lea.vmem %s0, 46
    %v478 = vld [vmem:[%s477] sm:$0x1]
    %479 = vrot.lane.b32.xlu0 %v478, 18
    %v480 = vpop.permute.xlu0 %479
    %vm481 = vcmask 400528
    %s482 = scalar_lea.vmem [#allocation0], 88
    %483 = vst.msk [vmem:[%s482] sm:$0x1] %vm481, %v480
    %s484 = scalar_lea.vmem %s0, 17
    %v485 = vld [vmem:[%s484] sm:$0x1]
    %486 = vrot.lane.b32.xlu0 %v485, 15
    %v487 = vpop.permute.xlu0 %486
    %vm488 = vcmask 375928
    %s489 = scalar_lea.vmem [#allocation0], 32
    %490 = vst.msk [vmem:[%s489] sm:$0x1] %vm488, %v487
    %s491 = scalar_lea.vmem %s0, 50
    %v492 = vld [vmem:[%s491] sm:$0x1]
    %493 = vrot.lane.b32.xlu0 %v492, 14
    %v494 = vpop.permute.xlu0 %493
    %vm495 = vcmask 367728
    %s496 = scalar_lea.vmem [#allocation0], 96
    %497 = vst.msk [vmem:[%s496] sm:$0x1] %vm495, %v494
    %s498 = scalar_lea.vmem %s0, 21
    %v499 = vld [vmem:[%s498] sm:$0x1]
    %500 = vrot.lane.b32.xlu0 %v499, 11
    %v501 = vpop.permute.xlu0 %500
    %vm502 = vcmask 343128
    %s503 = scalar_lea.vmem [#allocation0], 40
    %504 = vst.msk [vmem:[%s503] sm:$0x1] %vm502, %v501
    %s505 = scalar_lea.vmem %s0, 54
    %v506 = vld [vmem:[%s505] sm:$0x1]
    %507 = vrot.lane.b32.xlu0 %v506, 10
    %v508 = vpop.permute.xlu0 %507
    %vm509 = vcmask 334928
    %s510 = scalar_lea.vmem [#allocation0], 104
    %511 = vst.msk [vmem:[%s510] sm:$0x1] %vm509, %v508
    %s512 = scalar_lea.vmem %s0, 25
    %v513 = vld [vmem:[%s512] sm:$0x1]
    %514 = vrot.lane.b32.xlu0 %v513, 7
    %v515 = vpop.permute.xlu0 %514
    %vm516 = vcmask 310328
    %s517 = scalar_lea.vmem [#allocation0], 48
    %518 = vst.msk [vmem:[%s517] sm:$0x1] %vm516, %v515
    %s519 = scalar_lea.vmem %s0, 58
    %v520 = vld [vmem:[%s519] sm:$0x1]
    %521 = vrot.lane.b32.xlu0 %v520, 6
    %v522 = vpop.permute.xlu0 %521
    %vm523 = vcmask 302128
    %s524 = scalar_lea.vmem [#allocation0], 112
    %525 = vst.msk [vmem:[%s524] sm:$0x1] %vm523, %v522
    %s526 = scalar_lea.vmem %s0, 29
    %v527 = vld [vmem:[%s526] sm:$0x1]
    %528 = vrot.lane.b32.xlu0 %v527, 3
    %v529 = vpop.permute.xlu0 %528
    %vm530 = vcmask 277528
    %s531 = scalar_lea.vmem [#allocation0], 56
    %532 = vst.msk [vmem:[%s531] sm:$0x1] %vm530, %v529
    %s534 = sshllo.u32 0, 1
    %v536 = vld [vmem:[#allocation0] sm:%s534]
    %s537 = sshllo.u32 0, 1
    %538 = vst [vmem:[%s1] sm:%s537] %v536
    %s539 = scalar_lea.vmem [#allocation0], 8
    %v540 = vld [vmem:[%s539] sm:%s534]
    %s541 = sshllo.u32 0, 1
    %s542 = scalar_lea.vmem %s1, 1
    %543 = vst [vmem:[%s542] sm:%s541] %v540
    %s544 = scalar_lea.vmem [#allocation0], 16
    %v545 = vld [vmem:[%s544] sm:%s534]
    %s546 = sshllo.u32 0, 1
    %s547 = smul.addr 1, 2
    %s548 = scalar_lea.vmem %s1, %s547
    %549 = vst [vmem:[%s548] sm:%s546] %v545
    %s550 = scalar_lea.vmem [#allocation0], 24
    %v551 = vld [vmem:[%s550] sm:%s534]
    %s552 = sshllo.u32 0, 1
    %s553 = smul.addr 1, 3
    %s554 = scalar_lea.vmem %s1, %s553
    %555 = vst [vmem:[%s554] sm:%s552] %v551
    %s556 = scalar_lea.vmem [#allocation0], 32
    %v557 = vld [vmem:[%s556] sm:%s534]
    %s558 = sshllo.u32 0, 1
    %s559 = smul.addr 1, 4
    %s560 = scalar_lea.vmem %s1, %s559
    %561 = vst [vmem:[%s560] sm:%s558] %v557
    %s562 = scalar_lea.vmem [#allocation0], 40
    %v563 = vld [vmem:[%s562] sm:%s534]
    %s564 = sshllo.u32 0, 1
    %s565 = smul.addr 1, 5
    %s566 = scalar_lea.vmem %s1, %s565
    %567 = vst [vmem:[%s566] sm:%s564] %v563
    %s568 = scalar_lea.vmem [#allocation0], 48
    %v569 = vld [vmem:[%s568] sm:%s534]
    %s570 = sshllo.u32 0, 1
    %s571 = smul.addr 1, 6
    %s572 = scalar_lea.vmem %s1, %s571
    %573 = vst [vmem:[%s572] sm:%s570] %v569
    %s574 = scalar_lea.vmem [#allocation0], 56
    %v575 = vld [vmem:[%s574] sm:%s534]
    %s576 = sshllo.u32 0, 1
    %s577 = smul.addr 1, 7
    %s578 = scalar_lea.vmem %s1, %s577
    %579 = vst [vmem:[%s578] sm:%s576] %v575
    %s580 = scalar_lea.vmem [#allocation0], 64
    %v581 = vld [vmem:[%s580] sm:%s534]
    %s582 = sshllo.u32 0, 1
    %s583 = smul.addr 1, 8
    %s584 = scalar_lea.vmem %s1, %s583
    %585 = vst [vmem:[%s584] sm:%s582] %v581
    %s586 = scalar_lea.vmem [#allocation0], 72
    %v587 = vld [vmem:[%s586] sm:%s534]
    %s588 = sshllo.u32 0, 1
    %s589 = smul.addr 1, 9
    %s590 = scalar_lea.vmem %s1, %s589
    %591 = vst [vmem:[%s590] sm:%s588] %v587
    %s592 = scalar_lea.vmem [#allocation0], 80
    %v593 = vld [vmem:[%s592] sm:%s534]
    %s594 = sshllo.u32 0, 1
    %s595 = smul.addr 1, 10
    %s596 = scalar_lea.vmem %s1, %s595
    %597 = vst [vmem:[%s596] sm:%s594] %v593
    %s598 = scalar_lea.vmem [#allocation0], 88
    %v599 = vld [vmem:[%s598] sm:%s534]
    %s600 = sshllo.u32 0, 1
    %s601 = smul.addr 1, 11
    %s602 = scalar_lea.vmem %s1, %s601
    %603 = vst [vmem:[%s602] sm:%s600] %v599
    %s604 = scalar_lea.vmem [#allocation0], 96
    %v605 = vld [vmem:[%s604] sm:%s534]
    %s606 = sshllo.u32 0, 1
    %s607 = smul.addr 1, 12
    %s608 = scalar_lea.vmem %s1, %s607
    %609 = vst [vmem:[%s608] sm:%s606] %v605
    %s610 = scalar_lea.vmem [#allocation0], 104
    %v611 = vld [vmem:[%s610] sm:%s534]
    %s612 = sshllo.u32 0, 1
    %s613 = smul.addr 1, 13
    %s614 = scalar_lea.vmem %s1, %s613
    %615 = vst [vmem:[%s614] sm:%s612] %v611
    %s616 = scalar_lea.vmem [#allocation0], 112
    %v617 = vld [vmem:[%s616] sm:%s534]
    %s618 = sshllo.u32 0, 1
    %s619 = smul.addr 1, 14
    %s620 = scalar_lea.vmem %s1, %s619
    %621 = vst [vmem:[%s620] sm:%s618] %v617
    %s622 = scalar_lea.vmem [#allocation0], 120
    %v623 = vld [vmem:[%s622] sm:%s534]
    %s624 = sshllo.u32 0, 1
    %s625 = smul.addr 1, 15
    %s626 = scalar_lea.vmem %s1, %s625
    %627 = vst [vmem:[%s626] sm:%s624] %v623

// kernel: res_up_forward.1
$region0: #{res_up_forward.1}
  #allocation0 [shape = 'u32[]', space=smem, size = 0x4, offset = 0x4, fixed_abs, tag = 'smem constant byte address 0x4 - core index']
  #allocation1 [shape = 'u32[144,128]{1,0:T(1,128)}', space=vmem, size = 0x12000, scoped, tag = 'internal scratch']
  %s0 = inlined_call_operand.vmem [shape: bf16[36,1922], index: 0, kind: input, shape index: {}]
  %s1 = inlined_call_operand.vmem [shape: bf16[12,36], index: 1, kind: input, shape index: {}]
  %s2 = inlined_call_operand.vmem [shape: f32[12,1], index: 2, kind: input, shape index: {}]
  %s3 = inlined_call_operand.vmem [shape: f32[4,1], index: 3, kind: input, shape index: {}]
  %s4 = inlined_call_operand.vmem [shape: f32[4,1], index: 4, kind: input, shape index: {}]
  %s5 = inlined_call_operand.vmem [shape: bf16[8,36], index: 5, kind: input, shape index: {}]
  %s6 = inlined_call_operand.vmem [shape: f32[8,1], index: 6, kind: input, shape index: {}]
  %s7 = inlined_call_operand.vmem [shape: f32[8,1], index: 7, kind: input, shape index: {}]
  %s8 = inlined_call_operand.vmem [shape: f32[8,1], index: 8, kind: input, shape index: {}]
  %s9 = inlined_call_operand.vmem [shape: s32[2,1922], index: 9, kind: input, shape index: {}]
  %s10 = inlined_call_operand.vmem [shape: f32[8,1922], index: 10, kind: output, shape index: {}]
  %s11 = sld [smem:[#allocation0]]
  $region50: #{res_up_forward.1} parent=0
    _
  %s13 = ssub.s32 1, %s11
  %s14 = scalar_select 0, %s13, %s11
  // Predicated region
  $region2: #{res_up_forward.1} parent=0 // pred_check
    _
  $region3: #{res_up_forward.1} parent=0 // pred_check_branch
    %16 = sbr.rel (0) target = $region5
  $region4: #{res_up_forward.1} parent=0 // pred_region
    _
  $region5: #{res_up_forward.1} parent=0 // pred_fallthru
    _
  // Predicated region
  $region6: #{res_up_forward.1} parent=0 // pred_check
    _
  $region7: #{res_up_forward.1} parent=0 // pred_check_branch
    %18 = sbr.rel (0) target = $region9
  $region8: #{res_up_forward.1} parent=0 // pred_region
    _
  $region9: #{res_up_forward.1} parent=0 // pred_fallthru
    _
  // Predicated region
  $region10: #{res_up_forward.1} parent=0 // pred_check
    _
  $region11: #{res_up_forward.1} parent=0 // pred_check_branch
    %20 = sbr.rel (0) target = $region13
  $region12: #{res_up_forward.1} parent=0 // pred_region
    _
  $region13: #{res_up_forward.1} parent=0 // pred_fallthru
    _
  // Predicated region
  $region14: #{res_up_forward.1} parent=0 // pred_check
    _
  $region15: #{res_up_forward.1} parent=0 // pred_check_branch
    %22 = sbr.rel (0) target = $region17
  $region16: #{res_up_forward.1} parent=0 // pred_region
    _
  $region17: #{res_up_forward.1} parent=0 // pred_fallthru
    _
  // Predicated region
  $region18: #{res_up_forward.1} parent=0 // pred_check
    _
  $region19: #{res_up_forward.1} parent=0 // pred_check_branch
    %24 = sbr.rel (0) target = $region21
  $region20: #{res_up_forward.1} parent=0 // pred_region
    _
  $region21: #{res_up_forward.1} parent=0 // pred_fallthru
    _
  // Predicated region
  $region22: #{res_up_forward.1} parent=0 // pred_check
    _
  $region23: #{res_up_forward.1} parent=0 // pred_check_branch
    %26 = sbr.rel (0) target = $region25
  $region24: #{res_up_forward.1} parent=0 // pred_region
    _
  $region25: #{res_up_forward.1} parent=0 // pred_fallthru
    _
  // Predicated region
  $region26: #{res_up_forward.1} parent=0 // pred_check
    _
  $region27: #{res_up_forward.1} parent=0 // pred_check_branch
    %28 = sbr.rel (0) target = $region29
  $region28: #{res_up_forward.1} parent=0 // pred_region
    _
  $region29: #{res_up_forward.1} parent=0 // pred_fallthru
    _
  // Predicated region
  $region30: #{res_up_forward.1} parent=0 // pred_check
    _
  $region31: #{res_up_forward.1} parent=0 // pred_check_branch
    %30 = sbr.rel (0) target = $region33
  $region32: #{res_up_forward.1} parent=0 // pred_region
    _
  $region33: #{res_up_forward.1} parent=0 // pred_fallthru
    _
  // Predicated region
  $region34: #{res_up_forward.1} parent=0 // pred_check
    _
  $region35: #{res_up_forward.1} parent=0 // pred_check_branch
    %32 = sbr.rel (0) target = $region37
  $region36: #{res_up_forward.1} parent=0 // pred_region
    _
  $region37: #{res_up_forward.1} parent=0 // pred_fallthru
    _
  // Predicated region
  $region38: #{res_up_forward.1} parent=0 // pred_check
    _
  $region39: #{res_up_forward.1} parent=0 // pred_check_branch
    %34 = sbr.rel (0) target = $region41
  $region40: #{res_up_forward.1} parent=0 // pred_region
    _
  $region41: #{res_up_forward.1} parent=0 // pred_fallthru
    _
  %v36 = vld [vmem:[%s1] sm:$0xf]
  %v37 = vld [vmem:[%s1 + $0x4] sm:$0x3]
  %v38 = vld [vmem:[%s0] sm:$0xff]
  %v39 = vld [vmem:[%s0 + $0x8] sm:$0xff]
  %v40 = vld [vmem:[%s0 + $0x10] sm:$0xff]
  %v41 = vld [vmem:[%s0 + $0x18] sm:$0xff]
  %v42 = vld [vmem:[%s0 + $0x20] sm:$0xff]
  %v43 = vld [vmem:[%s0 + $0x28] sm:$0xff]
  %v44 = vld [vmem:[%s0 + $0x30] sm:$0xff]
  %v45 = vld [vmem:[%s0 + $0x38] sm:$0xff]
  %v46 = vld [vmem:[%s0 + $0x40] sm:$0xff]
  %v47 = vld [vmem:[%s0 + $0x48] sm:$0xff]
  %v48 = vld [vmem:[%s0 + $0x50] sm:$0xff]
  %v49 = vld [vmem:[%s0 + $0x58] sm:$0xff]
  %v50 = vld [vmem:[%s0 + $0x60] sm:$0xff]
  %v51 = vld [vmem:[%s0 + $0x68] sm:$0xff]
  %v52 = vld [vmem:[%s0 + $0x70] sm:$0xff]
  %v53 = vld [vmem:[%s0 + $0x78] sm:$0xff]
  %v54 = vld [vmem:[%s0 + $0x80] sm:$0xff]
  %v55 = vld [vmem:[%s0 + $0x88] sm:$0xff]
  %v56 = vld [vmem:[%s0 + $0x90] sm:$0xff]
  %v57 = vld [vmem:[%s0 + $0x98] sm:$0xff]
  %v58 = vld [vmem:[%s0 + $0xa0] sm:$0xff]
  %v59 = vld [vmem:[%s0 + $0xa8] sm:$0xff]
  %v60 = vld [vmem:[%s0 + $0xb0] sm:$0xff]
  %v61 = vld [vmem:[%s0 + $0xb8] sm:$0xff]
  %v62 = vld [vmem:[%s0 + $0xc0] sm:$0xff]
  %v63 = vld [vmem:[%s0 + $0xc8] sm:$0xff]
  %v64 = vld [vmem:[%s0 + $0xd0] sm:$0xff]
  %v65 = vld [vmem:[%s0 + $0xd8] sm:$0xff]
  %v66 = vld [vmem:[%s0 + $0xe0] sm:$0xff]
  %v67 = vld [vmem:[%s0 + $0xe8] sm:$0xff]
  %v68 = vld [vmem:[%s0 + $0xf0] sm:$0xff]
  %v69 = vld [vmem:[%s0 + $0xf8] sm:$0xff]
  %v70 = vld [vmem:[%s0 + $0x100] sm:$0x33]
  %v71 = vld [vmem:[%s0 + $0x108] sm:$0x33]
  %v72 = vld [vmem:[%s0 + $0x110] sm:$0x33]
  %v73 = vld [vmem:[%s0 + $0x118] sm:$0x33]
  %v74 = vld [vmem:[%s0 + $0x120] sm:$0x33]
  %v75 = vld [vmem:[%s0 + $0x128] sm:$0x33]
  %v76 = vld [vmem:[%s0 + $0x130] sm:$0x33]
  %v77 = vld [vmem:[%s0 + $0x138] sm:$0x33]
  %v78 = vld [vmem:[%s2] sm:$0xff]
  %v79 = vld [vmem:[%s2 + $0x8] sm:$0xf]
  %81 = vset.pattern.permute.xlu0 0
  %82 = vperm.xlu0 %81, %v78
  %v83 = vpop.permute.xlu0 %82
  %86 = vset.pattern.permute.xlu0 0
  %87 = vperm.xlu0 %86, %v79
  %v88 = vpop.permute.xlu0 %87
  %v92 = vunpack.c.l.b16 %v36
  %v93 = vunpack.c.l.b16 %v37
  %v94 = vpack.c.b16 %v93, %v92
  %v135 = vunpack.c.l.b16 %v38
  %v136 = vunpack.c.h.b16 %v38
  %v137 = vunpack.c.l.b16 %v39
  %v138 = vunpack.c.h.b16 %v39
  %v139 = vunpack.c.l.b16 %v40
  %v140 = vunpack.c.h.b16 %v40
  %v141 = vunpack.c.l.b16 %v41
  %v142 = vunpack.c.h.b16 %v41
  %v143 = vunpack.c.l.b16 %v42
  %v144 = vunpack.c.h.b16 %v42
  %v145 = vunpack.c.l.b16 %v43
  %v146 = vunpack.c.h.b16 %v43
  %v147 = vunpack.c.l.b16 %v44
  %v148 = vunpack.c.h.b16 %v44
  %v149 = vunpack.c.l.b16 %v45
  %v150 = vunpack.c.h.b16 %v45
  %v151 = vunpack.c.l.b16 %v46
  %v152 = vunpack.c.h.b16 %v46
  %v153 = vunpack.c.l.b16 %v47
  %v154 = vunpack.c.h.b16 %v47
  %v155 = vunpack.c.l.b16 %v48
  %v156 = vunpack.c.h.b16 %v48
  %v157 = vunpack.c.l.b16 %v49
  %v158 = vunpack.c.h.b16 %v49
  %v159 = vunpack.c.l.b16 %v50
  %v160 = vunpack.c.h.b16 %v50
  %v161 = vunpack.c.l.b16 %v51
  %v162 = vunpack.c.h.b16 %v51
  %v163 = vunpack.c.l.b16 %v52
  %v164 = vunpack.c.h.b16 %v52
  %v165 = vunpack.c.l.b16 %v53
  %v166 = vunpack.c.h.b16 %v53
  %v167 = vunpack.c.l.b16 %v54
  %v168 = vunpack.c.h.b16 %v54
  %v169 = vunpack.c.l.b16 %v55
  %v170 = vunpack.c.h.b16 %v55
  %v171 = vunpack.c.l.b16 %v56
  %v172 = vunpack.c.h.b16 %v56
  %v173 = vunpack.c.l.b16 %v57
  %v174 = vunpack.c.h.b16 %v57
  %v175 = vunpack.c.l.b16 %v58
  %v176 = vunpack.c.h.b16 %v58
  %v177 = vunpack.c.l.b16 %v59
  %v178 = vunpack.c.h.b16 %v59
  %v179 = vunpack.c.l.b16 %v60
  %v180 = vunpack.c.h.b16 %v60
  %v181 = vunpack.c.l.b16 %v61
  %v182 = vunpack.c.h.b16 %v61
  %v183 = vunpack.c.l.b16 %v62
  %v184 = vunpack.c.h.b16 %v62
  %v185 = vunpack.c.l.b16 %v63
  %v186 = vunpack.c.h.b16 %v63
  %v187 = vunpack.c.l.b16 %v64
  %v188 = vunpack.c.h.b16 %v64
  %v189 = vunpack.c.l.b16 %v65
  %v190 = vunpack.c.h.b16 %v65
  %v191 = vunpack.c.l.b16 %v66
  %v192 = vunpack.c.h.b16 %v66
  %v193 = vunpack.c.l.b16 %v67
  %v194 = vunpack.c.h.b16 %v67
  %v195 = vunpack.c.l.b16 %v68
  %v196 = vunpack.c.h.b16 %v68
  %v197 = vunpack.c.l.b16 %v69
  %v198 = vunpack.c.h.b16 %v69
  %v199 = vunpack.c.l.b16 %v70
  %v200 = vunpack.c.h.b16 %v70
  %v201 = vunpack.c.l.b16 %v71
  %v202 = vunpack.c.h.b16 %v71
  %v203 = vunpack.c.l.b16 %v72
  %v204 = vunpack.c.h.b16 %v72
  %v205 = vunpack.c.l.b16 %v73
  %v206 = vunpack.c.h.b16 %v73
  %v207 = vunpack.c.l.b16 %v74
  %v208 = vunpack.c.h.b16 %v74
  %v209 = vunpack.c.l.b16 %v75
  %v210 = vunpack.c.h.b16 %v75
  %v211 = vunpack.c.l.b16 %v76
  %v212 = vunpack.c.h.b16 %v76
  %v213 = vunpack.c.l.b16 %v77
  %v214 = vunpack.c.h.b16 %v77
  %v215 = vpack.c.b16 %v151, %v135
  %v216 = vpack.c.b16 %v152, %v136
  %v217 = vpack.c.b16 %v153, %v137
  %v218 = vpack.c.b16 %v154, %v138
  %v219 = vpack.c.b16 %v155, %v139
  %v220 = vpack.c.b16 %v156, %v140
  %v221 = vpack.c.b16 %v157, %v141
  %v222 = vpack.c.b16 %v158, %v142
  %v223 = vpack.c.b16 %v159, %v143
  %v224 = vpack.c.b16 %v160, %v144
  %v225 = vpack.c.b16 %v161, %v145
  %v226 = vpack.c.b16 %v162, %v146
  %v227 = vpack.c.b16 %v163, %v147
  %v228 = vpack.c.b16 %v164, %v148
  %v229 = vpack.c.b16 %v165, %v149
  %v230 = vpack.c.b16 %v166, %v150
  %v231 = vpack.c.b16 %v183, %v167
  %v232 = vpack.c.b16 %v184, %v168
  %v233 = vpack.c.b16 %v185, %v169
  %v234 = vpack.c.b16 %v186, %v170
  %v235 = vpack.c.b16 %v187, %v171
  %v236 = vpack.c.b16 %v188, %v172
  %v237 = vpack.c.b16 %v189, %v173
  %v238 = vpack.c.b16 %v190, %v174
  %v239 = vpack.c.b16 %v191, %v175
  %v240 = vpack.c.b16 %v192, %v176
  %v241 = vpack.c.b16 %v193, %v177
  %v242 = vpack.c.b16 %v194, %v178
  %v243 = vpack.c.b16 %v195, %v179
  %v244 = vpack.c.b16 %v196, %v180
  %v245 = vpack.c.b16 %v197, %v181
  %v246 = vpack.c.b16 %v198, %v182
  %v247 = vpack.c.b16 %v199, %v199
  %v248 = vpack.c.b16 %v200, %v200
  %v249 = vpack.c.b16 %v201, %v201
  %v250 = vpack.c.b16 %v202, %v202
  %v251 = vpack.c.b16 %v203, %v203
  %v252 = vpack.c.b16 %v204, %v204
  %v253 = vpack.c.b16 %v205, %v205
  %v254 = vpack.c.b16 %v206, %v206
  %v255 = vpack.c.b16 %v207, %v207
  %v256 = vpack.c.b16 %v208, %v208
  %v257 = vpack.c.b16 %v209, %v209
  %v258 = vpack.c.b16 %v210, %v210
  %v259 = vpack.c.b16 %v211, %v211
  %v260 = vpack.c.b16 %v212, %v212
  %v261 = vpack.c.b16 %v213, %v213
  %v262 = vpack.c.b16 %v214, %v214
  %vm295 = vcmask 293888
  %v297 = vsel %vm295, %v94, 0
  %vm299 = vcmask 1041408
  %v301 = vsel %vm299, %v247, 0
  %v304 = vsel %vm299, %v248, 0
  %v307 = vsel %vm299, %v249, 0
  %v310 = vsel %vm299, %v250, 0
  %v313 = vsel %vm299, %v251, 0
  %v316 = vsel %vm299, %v252, 0
  %v319 = vsel %vm299, %v253, 0
  %v322 = vsel %vm299, %v254, 0
  %v325 = vsel %vm299, %v255, 0
  %v328 = vsel %vm299, %v256, 0
  %v331 = vsel %vm299, %v257, 0
  %v334 = vsel %vm299, %v258, 0
  %v337 = vsel %vm299, %v259, 0
  %v340 = vsel %vm299, %v260, 0
  %v343 = vsel %vm299, %v261, 0
  %v346 = vsel %vm299, %v262, 0
  %348 = vmatprep.subr.bf16.mxu0 %v216
  %349 = vmatpush1.bf16.msra.mxu0 %v215
  %350 = vmatprep.subr.bf16.mxu0 %v232
  %351 = vmatpush1.bf16.msra.mxu0 %v231
  %352 = vmatprep.subr.bf16.mxu0 %v304
  %353 = vmatpush1.bf16.msra.mxu0 %v301
  %354 = vmatprep.subr.bf16.mxu0 0
  %355 = vmatpush1.bf16.msra.mxu0 0
  %356 = vmatprep.subr.bf16.mxu0 0
  %357 = vmatpush1.bf16.msra.mxu0 0
  %358 = vmatprep.subr.bf16.mxu0 0
  %359 = vmatpush1.bf16.msra.mxu0 0
  %360 = vmatprep.subr.bf16.mxu0 0
  %361 = vmatpush1.bf16.msra.mxu0 0
  %362 = vmatprep.subr.bf16.mxu0 0
  %363 = vmatpush1.bf16.msra.mxu0 0
  %364 = vmatprep.subr.bf16.mxu0 0
  %365 = vmatpush1.bf16.msra.mxu0 0
  %366 = vmatprep.subr.bf16.mxu0 0
  %367 = vmatpush1.bf16.msra.mxu0 0
  %368 = vmatprep.subr.bf16.mxu0 0
  %369 = vmatpush1.bf16.msra.mxu0 0
  %370 = vmatprep.subr.bf16.mxu0 0
  %371 = vmatpush1.bf16.msra.mxu0 0
  %372 = vmatprep.subr.bf16.mxu0 0
  %373 = vmatpush1.bf16.msra.mxu0 0
  %374 = vmatprep.subr.bf16.mxu0 0
  %375 = vmatpush1.bf16.msra.mxu0 0
  %376 = vmatprep.subr.bf16.mxu0 0
  %377 = vmatpush1.bf16.msra.mxu0 0
  %378 = vmatprep.subr.bf16.mxu0 0
  %379 = vmatpush1.bf16.msra.mxu0 0
  %380 = vmatprep.mubr.bf16.mxu0 0
  %381 = vmatmul.mubr.bf16.gmra.mrb[0].mxu0 %v297
  %v382 = vpop.f32.mrb[0].mxu0
  %v383 = vadd.f32 %v83, %v382
  %v384 = vpop.f32.mrb[0].mxu0
  %v385 = vadd.f32 %v83, %v384
  %v386 = vpop.f32.mrb[0].mxu0
  %v387 = vadd.f32 %v88, %v386
  %v388 = vpop.f32.mrb[0].mxu0
  %v389 = vadd.f32 %v88, %v388
  %390 = vdwg.mxu0
  %391 = vmatprep.subr.bf16.mxu0 %v218
  %392 = vmatpush1.bf16.msra.mxu0 %v217
  %393 = vmatprep.subr.bf16.mxu0 %v234
  %394 = vmatpush1.bf16.msra.mxu0 %v233
  %395 = vmatprep.subr.bf16.mxu0 %v310
  %396 = vmatpush1.bf16.msra.mxu0 %v307
  %397 = vmatprep.subr.bf16.mxu0 0
  %398 = vmatpush1.bf16.msra.mxu0 0
  %399 = vmatprep.subr.bf16.mxu0 0
  %400 = vmatpush1.bf16.msra.mxu0 0
  %401 = vmatprep.subr.bf16.mxu0 0
  %402 = vmatpush1.bf16.msra.mxu0 0
  %403 = vmatprep.subr.bf16.mxu0 0
  %404 = vmatpush1.bf16.msra.mxu0 0
  %405 = vmatprep.subr.bf16.mxu0 0
  %406 = vmatpush1.bf16.msra.mxu0 0
  %407 = vmatprep.subr.bf16.mxu0 0
  %408 = vmatpush1.bf16.msra.mxu0 0
  %409 = vmatprep.subr.bf16.mxu0 0
  %410 = vmatpush1.bf16.msra.mxu0 0
  %411 = vmatprep.subr.bf16.mxu0 0
  %412 = vmatpush1.bf16.msra.mxu0 0
  %413 = vmatprep.subr.bf16.mxu0 0
  %414 = vmatpush1.bf16.msra.mxu0 0
  %415 = vmatprep.subr.bf16.mxu0 0
  %416 = vmatpush1.bf16.msra.mxu0 0
  %417 = vmatprep.subr.bf16.mxu0 0
  %418 = vmatpush1.bf16.msra.mxu0 0
  %419 = vmatprep.subr.bf16.mxu0 0
  %420 = vmatpush1.bf16.msra.mxu0 0
  %421 = vmatprep.subr.bf16.mxu0 0
  %422 = vmatpush1.bf16.msra.mxu0 0
  %423 = vmatprep.mubr.bf16.mxu0 0
  %424 = vmatmul.mubr.bf16.gmra.mrb[0].mxu0 %v297
  %v425 = vpop.f32.mrb[0].mxu0
  %v426 = vadd.f32 %v83, %v425
  %v427 = vpop.f32.mrb[0].mxu0
  %v428 = vadd.f32 %v83, %v427
  %v429 = vpop.f32.mrb[0].mxu0
  %v430 = vadd.f32 %v88, %v429
  %v431 = vpop.f32.mrb[0].mxu0
  %v432 = vadd.f32 %v88, %v431
  %433 = vdwg.mxu0
  %434 = vmatprep.subr.bf16.mxu0 %v220
  %435 = vmatpush1.bf16.msra.mxu0 %v219
  %436 = vmatprep.subr.bf16.mxu0 %v236
  %437 = vmatpush1.bf16.msra.mxu0 %v235
  %438 = vmatprep.subr.bf16.mxu0 %v316
  %439 = vmatpush1.bf16.msra.mxu0 %v313
  %440 = vmatprep.subr.bf16.mxu0 0
  %441 = vmatpush1.bf16.msra.mxu0 0
  %442 = vmatprep.subr.bf16.mxu0 0
  %443 = vmatpush1.bf16.msra.mxu0 0
  %444 = vmatprep.subr.bf16.mxu0 0
  %445 = vmatpush1.bf16.msra.mxu0 0
  %446 = vmatprep.subr.bf16.mxu0 0
  %447 = vmatpush1.bf16.msra.mxu0 0
  %448 = vmatprep.subr.bf16.mxu0 0
  %449 = vmatpush1.bf16.msra.mxu0 0
  %450 = vmatprep.subr.bf16.mxu0 0
  %451 = vmatpush1.bf16.msra.mxu0 0
  %452 = vmatprep.subr.bf16.mxu0 0
  %453 = vmatpush1.bf16.msra.mxu0 0
  %454 = vmatprep.subr.bf16.mxu0 0
  %455 = vmatpush1.bf16.msra.mxu0 0
  %456 = vmatprep.subr.bf16.mxu0 0
  %457 = vmatpush1.bf16.msra.mxu0 0
  %458 = vmatprep.subr.bf16.mxu0 0
  %459 = vmatpush1.bf16.msra.mxu0 0
  %460 = vmatprep.subr.bf16.mxu0 0
  %461 = vmatpush1.bf16.msra.mxu0 0
  %462 = vmatprep.subr.bf16.mxu0 0
  %463 = vmatpush1.bf16.msra.mxu0 0
  %464 = vmatprep.subr.bf16.mxu0 0
  %465 = vmatpush1.bf16.msra.mxu0 0
  %466 = vmatprep.mubr.bf16.mxu0 0
  %467 = vmatmul.mubr.bf16.gmra.mrb[0].mxu0 %v297
  %v468 = vpop.f32.mrb[0].mxu0
  %v469 = vadd.f32 %v83, %v468
  %v470 = vpop.f32.mrb[0].mxu0
  %v471 = vadd.f32 %v83, %v470
  %v472 = vpop.f32.mrb[0].mxu0
  %v473 = vadd.f32 %v88, %v472
  %v474 = vpop.f32.mrb[0].mxu0
  %v475 = vadd.f32 %v88, %v474
  %476 = vdwg.mxu0
  %477 = vmatprep.subr.bf16.mxu0 %v222
  %478 = vmatpush1.bf16.msra.mxu0 %v221
  %479 = vmatprep.subr.bf16.mxu0 %v238
  %480 = vmatpush1.bf16.msra.mxu0 %v237
  %481 = vmatprep.subr.bf16.mxu0 %v322
  %482 = vmatpush1.bf16.msra.mxu0 %v319
  %483 = vmatprep.subr.bf16.mxu0 0
  %484 = vmatpush1.bf16.msra.mxu0 0
  %485 = vmatprep.subr.bf16.mxu0 0
  %486 = vmatpush1.bf16.msra.mxu0 0
  %487 = vmatprep.subr.bf16.mxu0 0
  %488 = vmatpush1.bf16.msra.mxu0 0
  %489 = vmatprep.subr.bf16.mxu0 0
  %490 = vmatpush1.bf16.msra.mxu0 0
  %491 = vmatprep.subr.bf16.mxu0 0
  %492 = vmatpush1.bf16.msra.mxu0 0
  %493 = vmatprep.subr.bf16.mxu0 0
  %494 = vmatpush1.bf16.msra.mxu0 0
  %495 = vmatprep.subr.bf16.mxu0 0
  %496 = vmatpush1.bf16.msra.mxu0 0
  %497 = vmatprep.subr.bf16.mxu0 0
  %498 = vmatpush1.bf16.msra.mxu0 0
  %499 = vmatprep.subr.bf16.mxu0 0
  %500 = vmatpush1.bf16.msra.mxu0 0
  %501 = vmatprep.subr.bf16.mxu0 0
  %502 = vmatpush1.bf16.msra.mxu0 0
  %503 = vmatprep.subr.bf16.mxu0 0
  %504 = vmatpush1.bf16.msra.mxu0 0
  %505 = vmatprep.subr.bf16.mxu0 0
  %506 = vmatpush1.bf16.msra.mxu0 0
  %507 = vmatprep.subr.bf16.mxu0 0
  %508 = vmatpush1.bf16.msra.mxu0 0
  %509 = vmatprep.mubr.bf16.mxu0 0
  %510 = vmatmul.mubr.bf16.gmra.mrb[0].mxu0 %v297
  %v511 = vpop.f32.mrb[0].mxu0
  %v512 = vadd.f32 %v83, %v511
  %v513 = vpop.f32.mrb[0].mxu0
  %v514 = vadd.f32 %v83, %v513
  %v515 = vpop.f32.mrb[0].mxu0
  %v516 = vadd.f32 %v88, %v515
  %v517 = vpop.f32.mrb[0].mxu0
  %v518 = vadd.f32 %v88, %v517
  %519 = vdwg.mxu0
  %520 = vmatprep.subr.bf16.mxu0 %v224
  %521 = vmatpush1.bf16.msra.mxu0 %v223
  %522 = vmatprep.subr.bf16.mxu0 %v240
  %523 = vmatpush1.bf16.msra.mxu0 %v239
  %524 = vmatprep.subr.bf16.mxu0 %v328
  %525 = vmatpush1.bf16.msra.mxu0 %v325
  %526 = vmatprep.subr.bf16.mxu0 0
  %527 = vmatpush1.bf16.msra.mxu0 0
  %528 = vmatprep.subr.bf16.mxu0 0
  %529 = vmatpush1.bf16.msra.mxu0 0
  %530 = vmatprep.subr.bf16.mxu0 0
  %531 = vmatpush1.bf16.msra.mxu0 0
  %532 = vmatprep.subr.bf16.mxu0 0
  %533 = vmatpush1.bf16.msra.mxu0 0
  %534 = vmatprep.subr.bf16.mxu0 0
  %535 = vmatpush1.bf16.msra.mxu0 0
  %536 = vmatprep.subr.bf16.mxu0 0
  %537 = vmatpush1.bf16.msra.mxu0 0
  %538 = vmatprep.subr.bf16.mxu0 0
  %539 = vmatpush1.bf16.msra.mxu0 0
  %540 = vmatprep.subr.bf16.mxu0 0
  %541 = vmatpush1.bf16.msra.mxu0 0
  %542 = vmatprep.subr.bf16.mxu0 0
  %543 = vmatpush1.bf16.msra.mxu0 0
  %544 = vmatprep.subr.bf16.mxu0 0
  %545 = vmatpush1.bf16.msra.mxu0 0
  %546 = vmatprep.subr.bf16.mxu0 0
  %547 = vmatpush1.bf16.msra.mxu0 0
  %548 = vmatprep.subr.bf16.mxu0 0
  %549 = vmatpush1.bf16.msra.mxu0 0
  %550 = vmatprep.subr.bf16.mxu0 0
  %551 = vmatpush1.bf16.msra.mxu0 0
  %552 = vmatprep.mubr.bf16.mxu0 0
  %553 = vmatmul.mubr.bf16.gmra.mrb[0].mxu0 %v297
  %v554 = vpop.f32.mrb[0].mxu0
  %v555 = vadd.f32 %v83, %v554
  %v556 = vpop.f32.mrb[0].mxu0
  %v557 = vadd.f32 %v83, %v556
  %v558 = vpop.f32.mrb[0].mxu0
  %v559 = vadd.f32 %v88, %v558
  %v560 = vpop.f32.mrb[0].mxu0
  %v561 = vadd.f32 %v88, %v560
  %562 = vdwg.mxu0
  %563 = vmatprep.subr.bf16.mxu0 %v226
  %564 = vmatpush1.bf16.msra.mxu0 %v225
  %565 = vmatprep.subr.bf16.mxu0 %v242
  %566 = vmatpush1.bf16.msra.mxu0 %v241
  %567 = vmatprep.subr.bf16.mxu0 %v334
  %568 = vmatpush1.bf16.msra.mxu0 %v331
  %569 = vmatprep.subr.bf16.mxu0 0
  %570 = vmatpush1.bf16.msra.mxu0 0
  %571 = vmatprep.subr.bf16.mxu0 0
  %572 = vmatpush1.bf16.msra.mxu0 0
  %573 = vmatprep.subr.bf16.mxu0 0
  %574 = vmatpush1.bf16.msra.mxu0 0
  %575 = vmatprep.subr.bf16.mxu0 0
  %576 = vmatpush1.bf16.msra.mxu0 0
  %577 = vmatprep.subr.bf16.mxu0 0
  %578 = vmatpush1.bf16.msra.mxu0 0
  %579 = vmatprep.subr.bf16.mxu0 0
  %580 = vmatpush1.bf16.msra.mxu0 0
  %581 = vmatprep.subr.bf16.mxu0 0
  %582 = vmatpush1.bf16.msra.mxu0 0
  %583 = vmatprep.subr.bf16.mxu0 0
  %584 = vmatpush1.bf16.msra.mxu0 0
  %585 = vmatprep.subr.bf16.mxu0 0
  %586 = vmatpush1.bf16.msra.mxu0 0
  %587 = vmatprep.subr.bf16.mxu0 0
  %588 = vmatpush1.bf16.msra.mxu0 0
  %589 = vmatprep.subr.bf16.mxu0 0
  %590 = vmatpush1.bf16.msra.mxu0 0
  %591 = vmatprep.subr.bf16.mxu0 0
  %592 = vmatpush1.bf16.msra.mxu0 0
  %593 = vmatprep.subr.bf16.mxu0 0
  %594 = vmatpush1.bf16.msra.mxu0 0
  %595 = vmatprep.mubr.bf16.mxu0 0
  %596 = vmatmul.mubr.bf16.gmra.mrb[0].mxu0 %v297
  %v597 = vpop.f32.mrb[0].mxu0
  %v598 = vadd.f32 %v83, %v597
  %v599 = vpop.f32.mrb[0].mxu0
  %v600 = vadd.f32 %v83, %v599
  %v601 = vpop.f32.mrb[0].mxu0
  %v602 = vadd.f32 %v88, %v601
  %v603 = vpop.f32.mrb[0].mxu0
  %v604 = vadd.f32 %v88, %v603
  %605 = vdwg.mxu0
  %606 = vmatprep.subr.bf16.mxu0 %v228
  %607 = vmatpush1.bf16.msra.mxu0 %v227
  %608 = vmatprep.subr.bf16.mxu0 %v244
  %609 = vmatpush1.bf16.msra.mxu0 %v243
  %610 = vmatprep.subr.bf16.mxu0 %v340
  %611 = vmatpush1.bf16.msra.mxu0 %v337
  %612 = vmatprep.subr.bf16.mxu0 0
  %613 = vmatpush1.bf16.msra.mxu0 0
  %614 = vmatprep.subr.bf16.mxu0 0
  %615 = vmatpush1.bf16.msra.mxu0 0
  %616 = vmatprep.subr.bf16.mxu0 0
  %617 = vmatpush1.bf16.msra.mxu0 0
  %618 = vmatprep.subr.bf16.mxu0 0
  %619 = vmatpush1.bf16.msra.mxu0 0
  %620 = vmatprep.subr.bf16.mxu0 0
  %621 = vmatpush1.bf16.msra.mxu0 0
  %622 = vmatprep.subr.bf16.mxu0 0
  %623 = vmatpush1.bf16.msra.mxu0 0
  %624 = vmatprep.subr.bf16.mxu0 0
  %625 = vmatpush1.bf16.msra.mxu0 0
  %626 = vmatprep.subr.bf16.mxu0 0
  %627 = vmatpush1.bf16.msra.mxu0 0
  %628 = vmatprep.subr.bf16.mxu0 0
  %629 = vmatpush1.bf16.msra.mxu0 0
  %630 = vmatprep.subr.bf16.mxu0 0
  %631 = vmatpush1.bf16.msra.mxu0 0
  %632 = vmatprep.subr.bf16.mxu0 0
  %633 = vmatpush1.bf16.msra.mxu0 0
  %634 = vmatprep.subr.bf16.mxu0 0
  %635 = vmatpush1.bf16.msra.mxu0 0
  %636 = vmatprep.subr.bf16.mxu0 0
  %637 = vmatpush1.bf16.msra.mxu0 0
  %638 = vmatprep.mubr.bf16.mxu0 0
  %639 = vmatmul.mubr.bf16.gmra.mrb[0].mxu0 %v297
  %v640 = vpop.f32.mrb[0].mxu0
  %v641 = vadd.f32 %v83, %v640
  %v642 = vpop.f32.mrb[0].mxu0
  %v643 = vadd.f32 %v83, %v642
  %v644 = vpop.f32.mrb[0].mxu0
  %v645 = vadd.f32 %v88, %v644
  %v646 = vpop.f32.mrb[0].mxu0
  %v647 = vadd.f32 %v88, %v646
  %648 = vdwg.mxu0
  %649 = vmatprep.subr.bf16.mxu0 %v230
  %650 = vmatpush1.bf16.msra.mxu0 %v229
  %651 = vmatprep.subr.bf16.mxu0 %v246
  %652 = vmatpush1.bf16.msra.mxu0 %v245
  %653 = vmatprep.subr.bf16.mxu0 %v346
  %654 = vmatpush1.bf16.msra.mxu0 %v343
  %655 = vmatprep.subr.bf16.mxu0 0
  %656 = vmatpush1.bf16.msra.mxu0 0
  %657 = vmatprep.subr.bf16.mxu0 0
  %658 = vmatpush1.bf16.msra.mxu0 0
  %659 = vmatprep.subr.bf16.mxu0 0
  %660 = vmatpush1.bf16.msra.mxu0 0
  %661 = vmatprep.subr.bf16.mxu0 0
  %662 = vmatpush1.bf16.msra.mxu0 0
  %663 = vmatprep.subr.bf16.mxu0 0
  %664 = vmatpush1.bf16.msra.mxu0 0
  %665 = vmatprep.subr.bf16.mxu0 0
  %666 = vmatpush1.bf16.msra.mxu0 0
  %667 = vmatprep.subr.bf16.mxu0 0
  %668 = vmatpush1.bf16.msra.mxu0 0
  %669 = vmatprep.subr.bf16.mxu0 0
  %670 = vmatpush1.bf16.msra.mxu0 0
  %671 = vmatprep.subr.bf16.mxu0 0
  %672 = vmatpush1.bf16.msra.mxu0 0
  %673 = vmatprep.subr.bf16.mxu0 0
  %674 = vmatpush1.bf16.msra.mxu0 0
  %675 = vmatprep.subr.bf16.mxu0 0
  %676 = vmatpush1.bf16.msra.mxu0 0
  %677 = vmatprep.subr.bf16.mxu0 0
  %678 = vmatpush1.bf16.msra.mxu0 0
  %679 = vmatprep.subr.bf16.mxu0 0
  %680 = vmatpush1.bf16.msra.mxu0 0
  %681 = vmatprep.mubr.bf16.mxu0 0
  %682 = vmatmul.mubr.bf16.gmra.mrb[0].mxu0 %v297
  %v683 = vpop.f32.mrb[0].mxu0
  %v684 = vadd.f32 %v83, %v683
  %v685 = vpop.f32.mrb[0].mxu0
  %v686 = vadd.f32 %v83, %v685
  %v687 = vpop.f32.mrb[0].mxu0
  %v688 = vadd.f32 %v88, %v687
  %v689 = vpop.f32.mrb[0].mxu0
  %v690 = vadd.f32 %v88, %v689
  %691 = vdwg.mxu0
  %vm692 = vcmask 1043456
  %v693 = vsel %vm692, %v387, 0.0
  %v694 = vsel %vm692, %v389, 0.0
  %v695 = vadd.f32 %v693, %v694
  %v696 = vsel %vm692, %v430, 0.0
  %v697 = vadd.f32 %v695, %v696
  %v698 = vsel %vm692, %v432, 0.0
  %v699 = vadd.f32 %v697, %v698
  %v700 = vsel %vm692, %v473, 0.0
  %v701 = vadd.f32 %v699, %v700
  %v702 = vsel %vm692, %v475, 0.0
  %v703 = vadd.f32 %v701, %v702
  %v704 = vsel %vm692, %v516, 0.0
  %v705 = vadd.f32 %v703, %v704
  %v706 = vsel %vm692, %v518, 0.0
  %v707 = vadd.f32 %v705, %v706
  %v708 = vsel %vm692, %v559, 0.0
  %v709 = vadd.f32 %v707, %v708
  %v710 = vsel %vm692, %v561, 0.0
  %v711 = vadd.f32 %v709, %v710
  %v712 = vsel %vm692, %v602, 0.0
  %v713 = vadd.f32 %v711, %v712
  %v714 = vsel %vm692, %v604, 0.0
  %v715 = vadd.f32 %v713, %v714
  %v716 = vsel %vm692, %v645, 0.0
  %v717 = vadd.f32 %v715, %v716
  %v718 = vsel %vm692, %v647, 0.0
  %v719 = vadd.f32 %v717, %v718
  %v720 = vsel %vm692, %v688, 0.0
  %v721 = vadd.f32 %v719, %v720
  %vm722 = vcmask 11264
  %v723 = vsel %vm722, %v690, 0.0
  %v724 = vadd.f32 %v721, %v723
  %725 = vadd.xlane.f32.xlu0 %v724
  %v726 = vpop.xlane.xlu0 %725
  %v727 = vrcp.pop 1922.0
  %v728 = vmul.f32 %v726, %v727
  %v729 = vmul.f32 %v387, %v387
  %v730 = vmul.f32 %v389, %v389
  %v731 = vmul.f32 %v430, %v430
  %v732 = vmul.f32 %v432, %v432
  %v733 = vmul.f32 %v473, %v473
  %v734 = vmul.f32 %v475, %v475
  %v735 = vmul.f32 %v516, %v516
  %v736 = vmul.f32 %v518, %v518
  %v737 = vmul.f32 %v559, %v559
  %v738 = vmul.f32 %v561, %v561
  %v739 = vmul.f32 %v602, %v602
  %v740 = vmul.f32 %v604, %v604
  %v741 = vmul.f32 %v645, %v645
  %v742 = vmul.f32 %v647, %v647
  %v743 = vmul.f32 %v688, %v688
  %v744 = vmul.f32 %v690, %v690
  %v745 = vsel %vm692, %v729, 0.0
  %v746 = vsel %vm692, %v730, 0.0
  %v747 = vadd.f32 %v745, %v746
  %v748 = vsel %vm692, %v731, 0.0
  %v749 = vadd.f32 %v747, %v748
  %v750 = vsel %vm692, %v732, 0.0
  %v751 = vadd.f32 %v749, %v750
  %v752 = vsel %vm692, %v733, 0.0
  %v753 = vadd.f32 %v751, %v752
  %v754 = vsel %vm692, %v734, 0.0
  %v755 = vadd.f32 %v753, %v754
  %v756 = vsel %vm692, %v735, 0.0
  %v757 = vadd.f32 %v755, %v756
  %v758 = vsel %vm692, %v736, 0.0
  %v759 = vadd.f32 %v757, %v758
  %v760 = vsel %vm692, %v737, 0.0
  %v761 = vadd.f32 %v759, %v760
  %v762 = vsel %vm692, %v738, 0.0
  %v763 = vadd.f32 %v761, %v762
  %v764 = vsel %vm692, %v739, 0.0
  %v765 = vadd.f32 %v763, %v764
  %v766 = vsel %vm692, %v740, 0.0
  %v767 = vadd.f32 %v765, %v766
  %v768 = vsel %vm692, %v741, 0.0
  %v769 = vadd.f32 %v767, %v768
  %v770 = vsel %vm692, %v742, 0.0
  %v771 = vadd.f32 %v769, %v770
  %v772 = vsel %vm692, %v743, 0.0
  %v773 = vadd.f32 %v771, %v772
  %v774 = vsel %vm722, %v744, 0.0
  %v775 = vadd.f32 %v773, %v774
  %776 = vadd.xlane.f32.xlu0 %v775
  %v777 = vpop.xlane.xlu0 %776
  %v778 = vmul.f32 %v777, %v727
  %v779 = vmul.f32 %v728, %v728
  %v780 = vsub.f32 %v778, %v779
  %v781 = vsub.f32 %v387, %v728
  %v782 = vsub.f32 %v389, %v728
  %v783 = vsub.f32 %v430, %v728
  %v784 = vsub.f32 %v432, %v728
  %v785 = vsub.f32 %v473, %v728
  %v786 = vsub.f32 %v475, %v728
  %v787 = vsub.f32 %v516, %v728
  %v788 = vsub.f32 %v518, %v728
  %v789 = vsub.f32 %v559, %v728
  %v790 = vsub.f32 %v561, %v728
  %v791 = vsub.f32 %v602, %v728
  %v792 = vsub.f32 %v604, %v728
  %v793 = vsub.f32 %v645, %v728
  %v794 = vsub.f32 %v647, %v728
  %v795 = vsub.f32 %v688, %v728
  %v796 = vsub.f32 %v690, %v728
  %v797 = vadd.f32 %v780, 0.0001
  %v798 = vrsqrt.pop %v797
  %v799 = vmul.f32 %v781, %v798
  %v800 = vmul.f32 %v782, %v798
  %v801 = vmul.f32 %v783, %v798
  %v802 = vmul.f32 %v784, %v798
  %v803 = vmul.f32 %v785, %v798
  %v804 = vmul.f32 %v786, %v798
  %v805 = vmul.f32 %v787, %v798
  %v806 = vmul.f32 %v788, %v798
  %v807 = vmul.f32 %v789, %v798
  %v808 = vmul.f32 %v790, %v798
  %v809 = vmul.f32 %v791, %v798
  %v810 = vmul.f32 %v792, %v798
  %v811 = vmul.f32 %v793, %v798
  %v812 = vmul.f32 %v794, %v798
  %v813 = vmul.f32 %v795, %v798
  %v814 = vmul.f32 %v796, %v798
  %v815 = vld [vmem:[%s3] sm:$0xf]
  %817 = vset.pattern.permute.xlu0 0
  %818 = vperm.xlu0 %817, %v815
  %v819 = vpop.permute.xlu0 %818
  %v821 = vmul.f32 %v799, %v819
  %v822 = vmul.f32 %v800, %v819
  %v823 = vmul.f32 %v801, %v819
  %v824 = vmul.f32 %v802, %v819
  %v825 = vmul.f32 %v803, %v819
  %v826 = vmul.f32 %v804, %v819
  %v827 = vmul.f32 %v805, %v819
  %v828 = vmul.f32 %v806, %v819
  %v829 = vmul.f32 %v807, %v819
  %v830 = vmul.f32 %v808, %v819
  %v831 = vmul.f32 %v809, %v819
  %v832 = vmul.f32 %v810, %v819
  %v833 = vmul.f32 %v811, %v819
  %v834 = vmul.f32 %v812, %v819
  %v835 = vmul.f32 %v813, %v819
  %v836 = vmul.f32 %v814, %v819
  %v837 = vld [vmem:[%s4] sm:$0xf]
  %839 = vset.pattern.permute.xlu0 0
  %840 = vperm.xlu0 %839, %v837
  %v841 = vpop.permute.xlu0 %840
  %v843 = vadd.f32 %v821, %v841
  %v844 = vadd.f32 %v822, %v841
  %v845 = vadd.f32 %v823, %v841
  %v846 = vadd.f32 %v824, %v841
  %v847 = vadd.f32 %v825, %v841
  %v848 = vadd.f32 %v826, %v841
  %v849 = vadd.f32 %v827, %v841
  %v850 = vadd.f32 %v828, %v841
  %v851 = vadd.f32 %v829, %v841
  %v852 = vadd.f32 %v830, %v841
  %v853 = vadd.f32 %v831, %v841
  %v854 = vadd.f32 %v832, %v841
  %v855 = vadd.f32 %v833, %v841
  %v856 = vadd.f32 %v834, %v841
  %v857 = vadd.f32 %v835, %v841
  %v858 = vadd.f32 %v836, %v841
  %vm859 = vcmp.gt.f32.partialorder %v843, 0.0
  %vm860 = vcmp.gt.f32.partialorder %v844, 0.0
  %vm861 = vcmp.gt.f32.partialorder %v845, 0.0
  %vm862 = vcmp.gt.f32.partialorder %v846, 0.0
  %vm863 = vcmp.gt.f32.partialorder %v847, 0.0
  %vm864 = vcmp.gt.f32.partialorder %v848, 0.0
  %vm865 = vcmp.gt.f32.partialorder %v849, 0.0
  %vm866 = vcmp.gt.f32.partialorder %v850, 0.0
  %vm867 = vcmp.gt.f32.partialorder %v851, 0.0
  %vm868 = vcmp.gt.f32.partialorder %v852, 0.0
  %vm869 = vcmp.gt.f32.partialorder %v853, 0.0
  %vm870 = vcmp.gt.f32.partialorder %v854, 0.0
  %vm871 = vcmp.gt.f32.partialorder %v855, 0.0
  %vm872 = vcmp.gt.f32.partialorder %v856, 0.0
  %vm873 = vcmp.gt.f32.partialorder %v857, 0.0
  %vm874 = vcmp.gt.f32.partialorder %v858, 0.0
  %v875 = vmin.f32 %v843, 0.0
  %v876 = vmin.f32 %v844, 0.0
  %v877 = vmin.f32 %v845, 0.0
  %v878 = vmin.f32 %v846, 0.0
  %v879 = vmin.f32 %v847, 0.0
  %v880 = vmin.f32 %v848, 0.0
  %v881 = vmin.f32 %v849, 0.0
  %v882 = vmin.f32 %v850, 0.0
  %v883 = vmin.f32 %v851, 0.0
  %v884 = vmin.f32 %v852, 0.0
  %v885 = vmin.f32 %v853, 0.0
  %v886 = vmin.f32 %v854, 0.0
  %v887 = vmin.f32 %v855, 0.0
  %v888 = vmin.f32 %v856, 0.0
  %v889 = vmin.f32 %v857, 0.0
  %v890 = vmin.f32 %v858, 0.0
  %v891 = vmul.f32 %v875, 1.442695
  %v892 = vpow.pop %v891
  %v893 = vmul.f32 %v876, 1.442695
  %v894 = vpow.pop %v893
  %v895 = vmul.f32 %v877, 1.442695
  %v896 = vpow.pop %v895
  %v897 = vmul.f32 %v878, 1.442695
  %v898 = vpow.pop %v897
  %v899 = vmul.f32 %v879, 1.442695
  %v900 = vpow.pop %v899
  %v901 = vmul.f32 %v880, 1.442695
  %v902 = vpow.pop %v901
  %v903 = vmul.f32 %v881, 1.442695
  %v904 = vpow.pop %v903
  %v905 = vmul.f32 %v882, 1.442695
  %v906 = vpow.pop %v905
  %v907 = vmul.f32 %v883, 1.442695
  %v908 = vpow.pop %v907
  %v909 = vmul.f32 %v884, 1.442695
  %v910 = vpow.pop %v909
  %v911 = vmul.f32 %v885, 1.442695
  %v912 = vpow.pop %v911
  %v913 = vmul.f32 %v886, 1.442695
  %v914 = vpow.pop %v913
  %v915 = vmul.f32 %v887, 1.442695
  %v916 = vpow.pop %v915
  %v917 = vmul.f32 %v888, 1.442695
  %v918 = vpow.pop %v917
  %v919 = vmul.f32 %v889, 1.442695
  %v920 = vpow.pop %v919
  %v921 = vmul.f32 %v890, 1.442695
  %v922 = vpow.pop %v921
  %v923 = vsub.f32 %v892, 1.0
  %v924 = vsub.f32 %v894, 1.0
  %v925 = vsub.f32 %v896, 1.0
  %v926 = vsub.f32 %v898, 1.0
  %v927 = vsub.f32 %v900, 1.0
  %v928 = vsub.f32 %v902, 1.0
  %v929 = vsub.f32 %v904, 1.0
  %v930 = vsub.f32 %v906, 1.0
  %v931 = vsub.f32 %v908, 1.0
  %v932 = vsub.f32 %v910, 1.0
  %v933 = vsub.f32 %v912, 1.0
  %v934 = vsub.f32 %v914, 1.0
  %v935 = vsub.f32 %v916, 1.0
  %v936 = vsub.f32 %v918, 1.0
  %v937 = vsub.f32 %v920, 1.0
  %v938 = vsub.f32 %v922, 1.0
  %v939 = vsel %vm859, %v843, %v923
  %v940 = vsel %vm860, %v844, %v924
  %v941 = vsel %vm861, %v845, %v925
  %v942 = vsel %vm862, %v846, %v926
  %v943 = vsel %vm863, %v847, %v927
  %v944 = vsel %vm864, %v848, %v928
  %v945 = vsel %vm865, %v849, %v929
  %v946 = vsel %vm866, %v850, %v930
  %v947 = vsel %vm867, %v851, %v931
  %v948 = vsel %vm868, %v852, %v932
  %v949 = vsel %vm869, %v853, %v933
  %v950 = vsel %vm870, %v854, %v934
  %v951 = vsel %vm871, %v855, %v935
  %v952 = vsel %vm872, %v856, %v936
  %v953 = vsel %vm873, %v857, %v937
  %v954 = vsel %vm874, %v858, %v938
  %971 = vrot.lane.b32.xlu0 %v939, 32
  %v972 = vpop.permute.xlu0 %971
  %973 = vrot.lane.b32.xlu0 %v940, 32
  %v974 = vpop.permute.xlu0 %973
  %975 = vrot.lane.b32.xlu0 %v941, 32
  %v976 = vpop.permute.xlu0 %975
  %977 = vrot.lane.b32.xlu0 %v942, 32
  %v978 = vpop.permute.xlu0 %977
  %979 = vrot.lane.b32.xlu0 %v943, 32
  %v980 = vpop.permute.xlu0 %979
  %981 = vrot.lane.b32.xlu0 %v944, 32
  %v982 = vpop.permute.xlu0 %981
  %983 = vrot.lane.b32.xlu0 %v945, 32
  %v984 = vpop.permute.xlu0 %983
  %985 = vrot.lane.b32.xlu0 %v946, 32
  %v986 = vpop.permute.xlu0 %985
  %987 = vrot.lane.b32.xlu0 %v947, 32
  %v988 = vpop.permute.xlu0 %987
  %989 = vrot.lane.b32.xlu0 %v948, 32
  %v990 = vpop.permute.xlu0 %989
  %991 = vrot.lane.b32.xlu0 %v949, 32
  %v992 = vpop.permute.xlu0 %991
  %993 = vrot.lane.b32.xlu0 %v950, 32
  %v994 = vpop.permute.xlu0 %993
  %995 = vrot.lane.b32.xlu0 %v951, 32
  %v996 = vpop.permute.xlu0 %995
  %997 = vrot.lane.b32.xlu0 %v952, 32
  %v998 = vpop.permute.xlu0 %997
  %999 = vrot.lane.b32.xlu0 %v953, 32
  %v1000 = vpop.permute.xlu0 %999
  %1001 = vrot.lane.b32.xlu0 %v954, 32
  %v1002 = vpop.permute.xlu0 %1001
  %vm1003 = vcmask 261120
  %v1004 = vsel %vm1003, %v972, %v974
  %v1005 = vsel %vm1003, %v974, %v976
  %v1006 = vsel %vm1003, %v976, %v978
  %v1007 = vsel %vm1003, %v978, %v980
  %v1008 = vsel %vm1003, %v980, %v982
  %v1009 = vsel %vm1003, %v982, %v984
  %v1010 = vsel %vm1003, %v984, %v986
  %v1011 = vsel %vm1003, %v986, %v988
  %v1012 = vsel %vm1003, %v988, %v990
  %v1013 = vsel %vm1003, %v990, %v992
  %v1014 = vsel %vm1003, %v992, %v994
  %v1015 = vsel %vm1003, %v994, %v996
  %v1016 = vsel %vm1003, %v996, %v998
  %v1017 = vsel %vm1003, %v998, %v1000
  %v1018 = vsel %vm1003, %v1000, %v1002
  %v1035 = vsel %vm1003, 0.0, %v972
  %vm1036 = vcmask 277504
  %v1037 = vsel %vm1036, %v1018, 0.0
  %v1038 = vld [vmem:[%s9] ss:$2 sm:$0xff]
  %s1039 = scalar_lea.vmem %s9, 16
  %v1040 = vld [vmem:[%s1039] ss:$2 sm:$0xff]
  %s1041 = scalar_lea.vmem %s9, 1
  %v1042 = vld [vmem:[%s1041] ss:$2 sm:$0xff]
  %s1043 = scalar_lea.vmem %s9, 17
  %v1044 = vld [vmem:[%s1043] ss:$2 sm:$0xff]
  %v1045 = vadd.s32 %v1042, 4294967295
  %v1046 = vadd.s32 %v1044, 4294967295
  %vm1047 = vcmp.ge.s32.totalorder %v1045, 0
  %vm1048 = vcmp.ge.s32.totalorder %v1046, 0
  %vm1049 = vcmp.lt.s32.totalorder %v1045, 31
  %vm1050 = vcmp.lt.s32.totalorder %v1046, 31
  %vm1051 = vmand %vm1047, %vm1049
  %vm1052 = vmand %vm1048, %vm1050
  %v1053 = vadd.s32 %v1038, 4294967295
  %v1054 = vadd.s32 %v1040, 4294967295
  %vm1055 = vcmp.ge.s32.totalorder %v1053, 0
  %vm1056 = vcmp.ge.s32.totalorder %v1054, 0
  %vm1057 = vcmp.lt.s32.totalorder %v1053, 31
  %vm1058 = vcmp.lt.s32.totalorder %v1054, 31
  %vm1059 = vmand %vm1055, %vm1057
  %vm1060 = vmand %vm1056, %vm1058
  %vm1061 = vmand %vm1051, %vm1059
  %vm1062 = vmand %vm1052, %vm1060
  %v1063 = vsel %vm1061, 1, 0
  %v1064 = vsel %vm1062, 1, 0
  %v1065 = vlaneseq
  %v1066 = vshrl.u32 %v1065, 7
  %v1067 = vsub.s32 0, %v1066
  %v1068 = vrot.slane %v1063, %v1067
  %v1069 = vlaneseq
  %v1070 = vshrl.u32 %v1069, 7
  %v1071 = vsub.s32 1, %v1070
  %v1072 = vrot.slane %v1063, %v1071
  %v1073 = vlaneseq
  %v1074 = vshrl.u32 %v1073, 7
  %v1075 = vsub.s32 2, %v1074
  %v1076 = vrot.slane %v1063, %v1075
  %v1077 = vlaneseq
  %v1078 = vshrl.u32 %v1077, 7
  %v1079 = vsub.s32 3, %v1078
  %v1080 = vrot.slane %v1063, %v1079
  %v1081 = vlaneseq
  %v1082 = vshrl.u32 %v1081, 7
  %v1083 = vsub.s32 4, %v1082
  %v1084 = vrot.slane %v1063, %v1083
  %v1085 = vlaneseq
  %v1086 = vshrl.u32 %v1085, 7
  %v1087 = vsub.s32 5, %v1086
  %v1088 = vrot.slane %v1063, %v1087
  %v1089 = vlaneseq
  %v1090 = vshrl.u32 %v1089, 7
  %v1091 = vsub.s32 6, %v1090
  %v1092 = vrot.slane %v1063, %v1091
  %v1093 = vlaneseq
  %v1094 = vshrl.u32 %v1093, 7
  %v1095 = vsub.s32 7, %v1094
  %v1096 = vrot.slane %v1063, %v1095
  %v1097 = vlaneseq
  %v1098 = vshrl.u32 %v1097, 7
  %v1099 = vsub.s32 0, %v1098
  %v1100 = vrot.slane %v1064, %v1099
  %v1101 = vlaneseq
  %v1102 = vshrl.u32 %v1101, 7
  %v1103 = vsub.s32 1, %v1102
  %v1104 = vrot.slane %v1064, %v1103
  %v1105 = vlaneseq
  %v1106 = vshrl.u32 %v1105, 7
  %v1107 = vsub.s32 2, %v1106
  %v1108 = vrot.slane %v1064, %v1107
  %v1109 = vlaneseq
  %v1110 = vshrl.u32 %v1109, 7
  %v1111 = vsub.s32 3, %v1110
  %v1112 = vrot.slane %v1064, %v1111
  %v1113 = vlaneseq
  %v1114 = vshrl.u32 %v1113, 7
  %v1115 = vsub.s32 4, %v1114
  %v1116 = vrot.slane %v1064, %v1115
  %v1117 = vlaneseq
  %v1118 = vshrl.u32 %v1117, 7
  %v1119 = vsub.s32 5, %v1118
  %v1120 = vrot.slane %v1064, %v1119
  %v1121 = vlaneseq
  %v1122 = vshrl.u32 %v1121, 7
  %v1123 = vsub.s32 6, %v1122
  %v1124 = vrot.slane %v1064, %v1123
  %v1125 = vlaneseq
  %v1126 = vshrl.u32 %v1125, 7
  %v1127 = vsub.s32 7, %v1126
  %v1128 = vrot.slane %v1064, %v1127
  %vm1129 = vcmp.eq.s32.totalorder %v1068, 1
  %vm1130 = vcmp.eq.s32.totalorder %v1072, 1
  %vm1131 = vcmp.eq.s32.totalorder %v1076, 1
  %vm1132 = vcmp.eq.s32.totalorder %v1080, 1
  %vm1133 = vcmp.eq.s32.totalorder %v1084, 1
  %vm1134 = vcmp.eq.s32.totalorder %v1088, 1
  %vm1135 = vcmp.eq.s32.totalorder %v1092, 1
  %vm1136 = vcmp.eq.s32.totalorder %v1096, 1
  %vm1137 = vcmp.eq.s32.totalorder %v1100, 1
  %vm1138 = vcmp.eq.s32.totalorder %v1104, 1
  %vm1139 = vcmp.eq.s32.totalorder %v1108, 1
  %vm1140 = vcmp.eq.s32.totalorder %v1112, 1
  %vm1141 = vcmp.eq.s32.totalorder %v1116, 1
  %vm1142 = vcmp.eq.s32.totalorder %v1120, 1
  %vm1143 = vcmp.eq.s32.totalorder %v1124, 1
  %vm1144 = vcmp.eq.s32.totalorder %v1128, 1
  %v1145 = vsel %vm1129, %v1035, 0.0
  %v1146 = vsel %vm1130, %v1004, 0.0
  %v1147 = vsel %vm1131, %v1005, 0.0
  %v1148 = vsel %vm1132, %v1006, 0.0
  %v1149 = vsel %vm1133, %v1007, 0.0
  %v1150 = vsel %vm1134, %v1008, 0.0
  %v1151 = vsel %vm1135, %v1009, 0.0
  %v1152 = vsel %vm1136, %v1010, 0.0
  %v1153 = vsel %vm1137, %v1011, 0.0
  %v1154 = vsel %vm1138, %v1012, 0.0
  %v1155 = vsel %vm1139, %v1013, 0.0
  %v1156 = vsel %vm1140, %v1014, 0.0
  %v1157 = vsel %vm1141, %v1015, 0.0
  %v1158 = vsel %vm1142, %v1016, 0.0
  %v1159 = vsel %vm1143, %v1017, 0.0
  %v1160 = vsel %vm1144, %v1037, 0.0
  %vm1161 = vcmp.ge.s32.totalorder %v1038, 0
  %vm1162 = vcmp.ge.s32.totalorder %v1040, 0
  %vm1163 = vcmp.lt.s32.totalorder %v1038, 31
  %vm1164 = vcmp.lt.s32.totalorder %v1040, 31
  %vm1165 = vmand %vm1161, %vm1163
  %vm1166 = vmand %vm1162, %vm1164
  %vm1167 = vmand %vm1051, %vm1165
  %vm1168 = vmand %vm1052, %vm1166
  %v1169 = vsel %vm1167, 1, 0
  %v1170 = vsel %vm1168, 1, 0
  %v1171 = vlaneseq
  %v1172 = vshrl.u32 %v1171, 7
  %v1173 = vsub.s32 0, %v1172
  %v1174 = vrot.slane %v1169, %v1173
  %v1175 = vlaneseq
  %v1176 = vshrl.u32 %v1175, 7
  %v1177 = vsub.s32 1, %v1176
  %v1178 = vrot.slane %v1169, %v1177
  %v1179 = vlaneseq
  %v1180 = vshrl.u32 %v1179, 7
  %v1181 = vsub.s32 2, %v1180
  %v1182 = vrot.slane %v1169, %v1181
  %v1183 = vlaneseq
  %v1184 = vshrl.u32 %v1183, 7
  %v1185 = vsub.s32 3, %v1184
  %v1186 = vrot.slane %v1169, %v1185
  %v1187 = vlaneseq
  %v1188 = vshrl.u32 %v1187, 7
  %v1189 = vsub.s32 4, %v1188
  %v1190 = vrot.slane %v1169, %v1189
  %v1191 = vlaneseq
  %v1192 = vshrl.u32 %v1191, 7
  %v1193 = vsub.s32 5, %v1192
  %v1194 = vrot.slane %v1169, %v1193
  %v1195 = vlaneseq
  %v1196 = vshrl.u32 %v1195, 7
  %v1197 = vsub.s32 6, %v1196
  %v1198 = vrot.slane %v1169, %v1197
  %v1199 = vlaneseq
  %v1200 = vshrl.u32 %v1199, 7
  %v1201 = vsub.s32 7, %v1200
  %v1202 = vrot.slane %v1169, %v1201
  %v1203 = vlaneseq
  %v1204 = vshrl.u32 %v1203, 7
  %v1205 = vsub.s32 0, %v1204
  %v1206 = vrot.slane %v1170, %v1205
  %v1207 = vlaneseq
  %v1208 = vshrl.u32 %v1207, 7
  %v1209 = vsub.s32 1, %v1208
  %v1210 = vrot.slane %v1170, %v1209
  %v1211 = vlaneseq
  %v1212 = vshrl.u32 %v1211, 7
  %v1213 = vsub.s32 2, %v1212
  %v1214 = vrot.slane %v1170, %v1213
  %v1215 = vlaneseq
  %v1216 = vshrl.u32 %v1215, 7
  %v1217 = vsub.s32 3, %v1216
  %v1218 = vrot.slane %v1170, %v1217
  %v1219 = vlaneseq
  %v1220 = vshrl.u32 %v1219, 7
  %v1221 = vsub.s32 4, %v1220
  %v1222 = vrot.slane %v1170, %v1221
  %v1223 = vlaneseq
  %v1224 = vshrl.u32 %v1223, 7
  %v1225 = vsub.s32 5, %v1224
  %v1226 = vrot.slane %v1170, %v1225
  %v1227 = vlaneseq
  %v1228 = vshrl.u32 %v1227, 7
  %v1229 = vsub.s32 6, %v1228
  %v1230 = vrot.slane %v1170, %v1229
  %v1231 = vlaneseq
  %v1232 = vshrl.u32 %v1231, 7
  %v1233 = vsub.s32 7, %v1232
  %v1234 = vrot.slane %v1170, %v1233
  %vm1235 = vcmp.eq.s32.totalorder %v1174, 1
  %vm1236 = vcmp.eq.s32.totalorder %v1178, 1
  %vm1237 = vcmp.eq.s32.totalorder %v1182, 1
  %vm1238 = vcmp.eq.s32.totalorder %v1186, 1
  %vm1239 = vcmp.eq.s32.totalorder %v1190, 1
  %vm1240 = vcmp.eq.s32.totalorder %v1194, 1
  %vm1241 = vcmp.eq.s32.totalorder %v1198, 1
  %vm1242 = vcmp.eq.s32.totalorder %v1202, 1
  %vm1243 = vcmp.eq.s32.totalorder %v1206, 1
  %vm1244 = vcmp.eq.s32.totalorder %v1210, 1
  %vm1245 = vcmp.eq.s32.totalorder %v1214, 1
  %vm1246 = vcmp.eq.s32.totalorder %v1218, 1
  %vm1247 = vcmp.eq.s32.totalorder %v1222, 1
  %vm1248 = vcmp.eq.s32.totalorder %v1226, 1
  %vm1249 = vcmp.eq.s32.totalorder %v1230, 1
  %vm1250 = vcmp.eq.s32.totalorder %v1234, 1
  %1253 = vrot.lane.b32.xlu0 %v1035, 127
  %v1254 = vpop.permute.xlu0 %1253
  %1255 = vrot.lane.b32.xlu0 %v1004, 127
  %v1256 = vpop.permute.xlu0 %1255
  %1257 = vrot.lane.b32.xlu0 %v1005, 127
  %v1258 = vpop.permute.xlu0 %1257
  %1259 = vrot.lane.b32.xlu0 %v1006, 127
  %v1260 = vpop.permute.xlu0 %1259
  %1261 = vrot.lane.b32.xlu0 %v1007, 127
  %v1262 = vpop.permute.xlu0 %1261
  %1263 = vrot.lane.b32.xlu0 %v1008, 127
  %v1264 = vpop.permute.xlu0 %1263
  %1265 = vrot.lane.b32.xlu0 %v1009, 127
  %v1266 = vpop.permute.xlu0 %1265
  %1267 = vrot.lane.b32.xlu0 %v1010, 127
  %v1268 = vpop.permute.xlu0 %1267
  %1269 = vrot.lane.b32.xlu0 %v1011, 127
  %v1270 = vpop.permute.xlu0 %1269
  %1271 = vrot.lane.b32.xlu0 %v1012, 127
  %v1272 = vpop.permute.xlu0 %1271
  %1273 = vrot.lane.b32.xlu0 %v1013, 127
  %v1274 = vpop.permute.xlu0 %1273
  %1275 = vrot.lane.b32.xlu0 %v1014, 127
  %v1276 = vpop.permute.xlu0 %1275
  %1277 = vrot.lane.b32.xlu0 %v1015, 127
  %v1278 = vpop.permute.xlu0 %1277
  %1279 = vrot.lane.b32.xlu0 %v1016, 127
  %v1280 = vpop.permute.xlu0 %1279
  %1281 = vrot.lane.b32.xlu0 %v1017, 127
  %v1282 = vpop.permute.xlu0 %1281
  %1283 = vrot.lane.b32.xlu0 %v1037, 127
  %v1284 = vpop.permute.xlu0 %1283
  %vm1285 = vcmask 1039360
  %v1286 = vsel %vm1285, %v1254, %v1256
  %v1287 = vsel %vm1285, %v1256, %v1258
  %v1288 = vsel %vm1285, %v1258, %v1260
  %v1289 = vsel %vm1285, %v1260, %v1262
  %v1290 = vsel %vm1285, %v1262, %v1264
  %v1291 = vsel %vm1285, %v1264, %v1266
  %v1292 = vsel %vm1285, %v1266, %v1268
  %v1293 = vsel %vm1285, %v1268, %v1270
  %v1294 = vsel %vm1285, %v1270, %v1272
  %v1295 = vsel %vm1285, %v1272, %v1274
  %v1296 = vsel %vm1285, %v1274, %v1276
  %v1297 = vsel %vm1285, %v1276, %v1278
  %v1298 = vsel %vm1285, %v1278, %v1280
  %v1299 = vsel %vm1285, %v1280, %v1282
  %v1300 = vsel %vm1285, %v1282, %v1284
  %v1317 = vsel %vm1235, %v1286, 0.0
  %v1318 = vsel %vm1236, %v1287, 0.0
  %v1319 = vsel %vm1237, %v1288, 0.0
  %v1320 = vsel %vm1238, %v1289, 0.0
  %v1321 = vsel %vm1239, %v1290, 0.0
  %v1322 = vsel %vm1240, %v1291, 0.0
  %v1323 = vsel %vm1241, %v1292, 0.0
  %v1324 = vsel %vm1242, %v1293, 0.0
  %v1325 = vsel %vm1243, %v1294, 0.0
  %v1326 = vsel %vm1244, %v1295, 0.0
  %v1327 = vsel %vm1245, %v1296, 0.0
  %v1328 = vsel %vm1246, %v1297, 0.0
  %v1329 = vsel %vm1247, %v1298, 0.0
  %v1330 = vsel %vm1248, %v1299, 0.0
  %v1331 = vsel %vm1249, %v1300, 0.0
  %v1332 = vsel %vm1250, %v1284, 0.0
  %v1333 = vadd.s32 %v1038, 1
  %v1334 = vadd.s32 %v1040, 1
  %vm1335 = vcmp.ge.s32.totalorder %v1333, 0
  %vm1336 = vcmp.ge.s32.totalorder %v1334, 0
  %vm1337 = vcmp.lt.s32.totalorder %v1333, 31
  %vm1338 = vcmp.lt.s32.totalorder %v1334, 31
  %vm1339 = vmand %vm1335, %vm1337
  %vm1340 = vmand %vm1336, %vm1338
  %vm1341 = vmand %vm1051, %vm1339
  %vm1342 = vmand %vm1052, %vm1340
  %v1343 = vsel %vm1341, 1, 0
  %v1344 = vsel %vm1342, 1, 0
  %v1345 = vlaneseq
  %v1346 = vshrl.u32 %v1345, 7
  %v1347 = vsub.s32 0, %v1346
  %v1348 = vrot.slane %v1343, %v1347
  %v1349 = vlaneseq
  %v1350 = vshrl.u32 %v1349, 7
  %v1351 = vsub.s32 1, %v1350
  %v1352 = vrot.slane %v1343, %v1351
  %v1353 = vlaneseq
  %v1354 = vshrl.u32 %v1353, 7
  %v1355 = vsub.s32 2, %v1354
  %v1356 = vrot.slane %v1343, %v1355
  %v1357 = vlaneseq
  %v1358 = vshrl.u32 %v1357, 7
  %v1359 = vsub.s32 3, %v1358
  %v1360 = vrot.slane %v1343, %v1359
  %v1361 = vlaneseq
  %v1362 = vshrl.u32 %v1361, 7
  %v1363 = vsub.s32 4, %v1362
  %v1364 = vrot.slane %v1343, %v1363
  %v1365 = vlaneseq
  %v1366 = vshrl.u32 %v1365, 7
  %v1367 = vsub.s32 5, %v1366
  %v1368 = vrot.slane %v1343, %v1367
  %v1369 = vlaneseq
  %v1370 = vshrl.u32 %v1369, 7
  %v1371 = vsub.s32 6, %v1370
  %v1372 = vrot.slane %v1343, %v1371
  %v1373 = vlaneseq
  %v1374 = vshrl.u32 %v1373, 7
  %v1375 = vsub.s32 7, %v1374
  %v1376 = vrot.slane %v1343, %v1375
  %v1377 = vlaneseq
  %v1378 = vshrl.u32 %v1377, 7
  %v1379 = vsub.s32 0, %v1378
  %v1380 = vrot.slane %v1344, %v1379
  %v1381 = vlaneseq
  %v1382 = vshrl.u32 %v1381, 7
  %v1383 = vsub.s32 1, %v1382
  %v1384 = vrot.slane %v1344, %v1383
  %v1385 = vlaneseq
  %v1386 = vshrl.u32 %v1385, 7
  %v1387 = vsub.s32 2, %v1386
  %v1388 = vrot.slane %v1344, %v1387
  %v1389 = vlaneseq
  %v1390 = vshrl.u32 %v1389, 7
  %v1391 = vsub.s32 3, %v1390
  %v1392 = vrot.slane %v1344, %v1391
  %v1393 = vlaneseq
  %v1394 = vshrl.u32 %v1393, 7
  %v1395 = vsub.s32 4, %v1394
  %v1396 = vrot.slane %v1344, %v1395
  %v1397 = vlaneseq
  %v1398 = vshrl.u32 %v1397, 7
  %v1399 = vsub.s32 5, %v1398
  %v1400 = vrot.slane %v1344, %v1399
  %v1401 = vlaneseq
  %v1402 = vshrl.u32 %v1401, 7
  %v1403 = vsub.s32 6, %v1402
  %v1404 = vrot.slane %v1344, %v1403
  %v1405 = vlaneseq
  %v1406 = vshrl.u32 %v1405, 7
  %v1407 = vsub.s32 7, %v1406
  %v1408 = vrot.slane %v1344, %v1407
  %vm1409 = vcmp.eq.s32.totalorder %v1348, 1
  %vm1410 = vcmp.eq.s32.totalorder %v1352, 1
  %vm1411 = vcmp.eq.s32.totalorder %v1356, 1
  %vm1412 = vcmp.eq.s32.totalorder %v1360, 1
  %vm1413 = vcmp.eq.s32.totalorder %v1364, 1
  %vm1414 = vcmp.eq.s32.totalorder %v1368, 1
  %vm1415 = vcmp.eq.s32.totalorder %v1372, 1
  %vm1416 = vcmp.eq.s32.totalorder %v1376, 1
  %vm1417 = vcmp.eq.s32.totalorder %v1380, 1
  %vm1418 = vcmp.eq.s32.totalorder %v1384, 1
  %vm1419 = vcmp.eq.s32.totalorder %v1388, 1
  %vm1420 = vcmp.eq.s32.totalorder %v1392, 1
  %vm1421 = vcmp.eq.s32.totalorder %v1396, 1
  %vm1422 = vcmp.eq.s32.totalorder %v1400, 1
  %vm1423 = vcmp.eq.s32.totalorder %v1404, 1
  %vm1424 = vcmp.eq.s32.totalorder %v1408, 1
  %1425 = vrot.lane.b32.xlu0 %v1035, 126
  %v1426 = vpop.permute.xlu0 %1425
  %1427 = vrot.lane.b32.xlu0 %v1004, 126
  %v1428 = vpop.permute.xlu0 %1427
  %1429 = vrot.lane.b32.xlu0 %v1005, 126
  %v1430 = vpop.permute.xlu0 %1429
  %1431 = vrot.lane.b32.xlu0 %v1006, 126
  %v1432 = vpop.permute.xlu0 %1431
  %1433 = vrot.lane.b32.xlu0 %v1007, 126
  %v1434 = vpop.permute.xlu0 %1433
  %1435 = vrot.lane.b32.xlu0 %v1008, 126
  %v1436 = vpop.permute.xlu0 %1435
  %1437 = vrot.lane.b32.xlu0 %v1009, 126
  %v1438 = vpop.permute.xlu0 %1437
  %1439 = vrot.lane.b32.xlu0 %v1010, 126
  %v1440 = vpop.permute.xlu0 %1439
  %1441 = vrot.lane.b32.xlu0 %v1011, 126
  %v1442 = vpop.permute.xlu0 %1441
  %1443 = vrot.lane.b32.xlu0 %v1012, 126
  %v1444 = vpop.permute.xlu0 %1443
  %1445 = vrot.lane.b32.xlu0 %v1013, 126
  %v1446 = vpop.permute.xlu0 %1445
  %1447 = vrot.lane.b32.xlu0 %v1014, 126
  %v1448 = vpop.permute.xlu0 %1447
  %1449 = vrot.lane.b32.xlu0 %v1015, 126
  %v1450 = vpop.permute.xlu0 %1449
  %1451 = vrot.lane.b32.xlu0 %v1016, 126
  %v1452 = vpop.permute.xlu0 %1451
  %1453 = vrot.lane.b32.xlu0 %v1017, 126
  %v1454 = vpop.permute.xlu0 %1453
  %1455 = vrot.lane.b32.xlu0 %v1037, 126
  %v1456 = vpop.permute.xlu0 %1455
  %vm1457 = vcmask 1031168
  %v1458 = vsel %vm1457, %v1426, %v1428
  %v1459 = vsel %vm1457, %v1428, %v1430
  %v1460 = vsel %vm1457, %v1430, %v1432
  %v1461 = vsel %vm1457, %v1432, %v1434
  %v1462 = vsel %vm1457, %v1434, %v1436
  %v1463 = vsel %vm1457, %v1436, %v1438
  %v1464 = vsel %vm1457, %v1438, %v1440
  %v1465 = vsel %vm1457, %v1440, %v1442
  %v1466 = vsel %vm1457, %v1442, %v1444
  %v1467 = vsel %vm1457, %v1444, %v1446
  %v1468 = vsel %vm1457, %v1446, %v1448
  %v1469 = vsel %vm1457, %v1448, %v1450
  %v1470 = vsel %vm1457, %v1450, %v1452
  %v1471 = vsel %vm1457, %v1452, %v1454
  %v1472 = vsel %vm1457, %v1454, %v1456
  %v1489 = vsel %vm1409, %v1458, 0.0
  %v1490 = vsel %vm1410, %v1459, 0.0
  %v1491 = vsel %vm1411, %v1460, 0.0
  %v1492 = vsel %vm1412, %v1461, 0.0
  %v1493 = vsel %vm1413, %v1462, 0.0
  %v1494 = vsel %vm1414, %v1463, 0.0
  %v1495 = vsel %vm1415, %v1464, 0.0
  %v1496 = vsel %vm1416, %v1465, 0.0
  %v1497 = vsel %vm1417, %v1466, 0.0
  %v1498 = vsel %vm1418, %v1467, 0.0
  %v1499 = vsel %vm1419, %v1468, 0.0
  %v1500 = vsel %vm1420, %v1469, 0.0
  %v1501 = vsel %vm1421, %v1470, 0.0
  %v1502 = vsel %vm1422, %v1471, 0.0
  %v1503 = vsel %vm1423, %v1472, 0.0
  %v1504 = vsel %vm1424, %v1456, 0.0
  %vm1505 = vcmp.ge.s32.totalorder %v1042, 0
  %vm1506 = vcmp.ge.s32.totalorder %v1044, 0
  %vm1507 = vcmp.lt.s32.totalorder %v1042, 31
  %vm1508 = vcmp.lt.s32.totalorder %v1044, 31
  %vm1509 = vmand %vm1505, %vm1507
  %vm1510 = vmand %vm1506, %vm1508
  %vm1511 = vmand %vm1509, %vm1059
  %vm1512 = vmand %vm1510, %vm1060
  %v1513 = vsel %vm1511, 1, 0
  %v1514 = vsel %vm1512, 1, 0
  %v1515 = vlaneseq
  %v1516 = vshrl.u32 %v1515, 7
  %v1517 = vsub.s32 0, %v1516
  %v1518 = vrot.slane %v1513, %v1517
  %v1519 = vlaneseq
  %v1520 = vshrl.u32 %v1519, 7
  %v1521 = vsub.s32 1, %v1520
  %v1522 = vrot.slane %v1513, %v1521
  %v1523 = vlaneseq
  %v1524 = vshrl.u32 %v1523, 7
  %v1525 = vsub.s32 2, %v1524
  %v1526 = vrot.slane %v1513, %v1525
  %v1527 = vlaneseq
  %v1528 = vshrl.u32 %v1527, 7
  %v1529 = vsub.s32 3, %v1528
  %v1530 = vrot.slane %v1513, %v1529
  %v1531 = vlaneseq
  %v1532 = vshrl.u32 %v1531, 7
  %v1533 = vsub.s32 4, %v1532
  %v1534 = vrot.slane %v1513, %v1533
  %v1535 = vlaneseq
  %v1536 = vshrl.u32 %v1535, 7
  %v1537 = vsub.s32 5, %v1536
  %v1538 = vrot.slane %v1513, %v1537
  %v1539 = vlaneseq
  %v1540 = vshrl.u32 %v1539, 7
  %v1541 = vsub.s32 6, %v1540
  %v1542 = vrot.slane %v1513, %v1541
  %v1543 = vlaneseq
  %v1544 = vshrl.u32 %v1543, 7
  %v1545 = vsub.s32 7, %v1544
  %v1546 = vrot.slane %v1513, %v1545
  %v1547 = vlaneseq
  %v1548 = vshrl.u32 %v1547, 7
  %v1549 = vsub.s32 0, %v1548
  %v1550 = vrot.slane %v1514, %v1549
  %v1551 = vlaneseq
  %v1552 = vshrl.u32 %v1551, 7
  %v1553 = vsub.s32 1, %v1552
  %v1554 = vrot.slane %v1514, %v1553
  %v1555 = vlaneseq
  %v1556 = vshrl.u32 %v1555, 7
  %v1557 = vsub.s32 2, %v1556
  %v1558 = vrot.slane %v1514, %v1557
  %v1559 = vlaneseq
  %v1560 = vshrl.u32 %v1559, 7
  %v1561 = vsub.s32 3, %v1560
  %v1562 = vrot.slane %v1514, %v1561
  %v1563 = vlaneseq
  %v1564 = vshrl.u32 %v1563, 7
  %v1565 = vsub.s32 4, %v1564
  %v1566 = vrot.slane %v1514, %v1565
  %v1567 = vlaneseq
  %v1568 = vshrl.u32 %v1567, 7
  %v1569 = vsub.s32 5, %v1568
  %v1570 = vrot.slane %v1514, %v1569
  %v1571 = vlaneseq
  %v1572 = vshrl.u32 %v1571, 7
  %v1573 = vsub.s32 6, %v1572
  %v1574 = vrot.slane %v1514, %v1573
  %v1575 = vlaneseq
  %v1576 = vshrl.u32 %v1575, 7
  %v1577 = vsub.s32 7, %v1576
  %v1578 = vrot.slane %v1514, %v1577
  %vm1579 = vcmp.eq.s32.totalorder %v1518, 1
  %vm1580 = vcmp.eq.s32.totalorder %v1522, 1
  %vm1581 = vcmp.eq.s32.totalorder %v1526, 1
  %vm1582 = vcmp.eq.s32.totalorder %v1530, 1
  %vm1583 = vcmp.eq.s32.totalorder %v1534, 1
  %vm1584 = vcmp.eq.s32.totalorder %v1538, 1
  %vm1585 = vcmp.eq.s32.totalorder %v1542, 1
  %vm1586 = vcmp.eq.s32.totalorder %v1546, 1
  %vm1587 = vcmp.eq.s32.totalorder %v1550, 1
  %vm1588 = vcmp.eq.s32.totalorder %v1554, 1
  %vm1589 = vcmp.eq.s32.totalorder %v1558, 1
  %vm1590 = vcmp.eq.s32.totalorder %v1562, 1
  %vm1591 = vcmp.eq.s32.totalorder %v1566, 1
  %vm1592 = vcmp.eq.s32.totalorder %v1570, 1
  %vm1593 = vcmp.eq.s32.totalorder %v1574, 1
  %vm1594 = vcmp.eq.s32.totalorder %v1578, 1
  %1595 = vrot.lane.b32.xlu0 %v1035, 97
  %v1596 = vpop.permute.xlu0 %1595
  %1597 = vrot.lane.b32.xlu0 %v1004, 97
  %v1598 = vpop.permute.xlu0 %1597
  %1599 = vrot.lane.b32.xlu0 %v1005, 97
  %v1600 = vpop.permute.xlu0 %1599
  %1601 = vrot.lane.b32.xlu0 %v1006, 97
  %v1602 = vpop.permute.xlu0 %1601
  %1603 = vrot.lane.b32.xlu0 %v1007, 97
  %v1604 = vpop.permute.xlu0 %1603
  %1605 = vrot.lane.b32.xlu0 %v1008, 97
  %v1606 = vpop.permute.xlu0 %1605
  %1607 = vrot.lane.b32.xlu0 %v1009, 97
  %v1608 = vpop.permute.xlu0 %1607
  %1609 = vrot.lane.b32.xlu0 %v1010, 97
  %v1610 = vpop.permute.xlu0 %1609
  %1611 = vrot.lane.b32.xlu0 %v1011, 97
  %v1612 = vpop.permute.xlu0 %1611
  %1613 = vrot.lane.b32.xlu0 %v1012, 97
  %v1614 = vpop.permute.xlu0 %1613
  %1615 = vrot.lane.b32.xlu0 %v1013, 97
  %v1616 = vpop.permute.xlu0 %1615
  %1617 = vrot.lane.b32.xlu0 %v1014, 97
  %v1618 = vpop.permute.xlu0 %1617
  %1619 = vrot.lane.b32.xlu0 %v1015, 97
  %v1620 = vpop.permute.xlu0 %1619
  %1621 = vrot.lane.b32.xlu0 %v1016, 97
  %v1622 = vpop.permute.xlu0 %1621
  %1623 = vrot.lane.b32.xlu0 %v1017, 97
  %v1624 = vpop.permute.xlu0 %1623
  %1625 = vrot.lane.b32.xlu0 %v1037, 97
  %v1626 = vpop.permute.xlu0 %1625
  %vm1627 = vcmask 793600
  %v1628 = vsel %vm1627, %v1596, %v1598
  %v1629 = vsel %vm1627, %v1598, %v1600
  %v1630 = vsel %vm1627, %v1600, %v1602
  %v1631 = vsel %vm1627, %v1602, %v1604
  %v1632 = vsel %vm1627, %v1604, %v1606
  %v1633 = vsel %vm1627, %v1606, %v1608
  %v1634 = vsel %vm1627, %v1608, %v1610
  %v1635 = vsel %vm1627, %v1610, %v1612
  %v1636 = vsel %vm1627, %v1612, %v1614
  %v1637 = vsel %vm1627, %v1614, %v1616
  %v1638 = vsel %vm1627, %v1616, %v1618
  %v1639 = vsel %vm1627, %v1618, %v1620
  %v1640 = vsel %vm1627, %v1620, %v1622
  %v1641 = vsel %vm1627, %v1622, %v1624
  %v1642 = vsel %vm1627, %v1624, %v1626
  %v1659 = vsel %vm1579, %v1628, 0.0
  %v1660 = vsel %vm1580, %v1629, 0.0
  %v1661 = vsel %vm1581, %v1630, 0.0
  %v1662 = vsel %vm1582, %v1631, 0.0
  %v1663 = vsel %vm1583, %v1632, 0.0
  %v1664 = vsel %vm1584, %v1633, 0.0
  %v1665 = vsel %vm1585, %v1634, 0.0
  %v1666 = vsel %vm1586, %v1635, 0.0
  %v1667 = vsel %vm1587, %v1636, 0.0
  %v1668 = vsel %vm1588, %v1637, 0.0
  %v1669 = vsel %vm1589, %v1638, 0.0
  %v1670 = vsel %vm1590, %v1639, 0.0
  %v1671 = vsel %vm1591, %v1640, 0.0
  %v1672 = vsel %vm1592, %v1641, 0.0
  %v1673 = vsel %vm1593, %v1642, 0.0
  %v1674 = vsel %vm1594, %v1626, 0.0
  %vm1675 = vmand %vm1509, %vm1165
  %vm1676 = vmand %vm1510, %vm1166
  %v1677 = vsel %vm1675, 1, 0
  %v1678 = vsel %vm1676, 1, 0
  %v1679 = vlaneseq
  %v1680 = vshrl.u32 %v1679, 7
  %v1681 = vsub.s32 0, %v1680
  %v1682 = vrot.slane %v1677, %v1681
  %v1683 = vlaneseq
  %v1684 = vshrl.u32 %v1683, 7
  %v1685 = vsub.s32 1, %v1684
  %v1686 = vrot.slane %v1677, %v1685
  %v1687 = vlaneseq
  %v1688 = vshrl.u32 %v1687, 7
  %v1689 = vsub.s32 2, %v1688
  %v1690 = vrot.slane %v1677, %v1689
  %v1691 = vlaneseq
  %v1692 = vshrl.u32 %v1691, 7
  %v1693 = vsub.s32 3, %v1692
  %v1694 = vrot.slane %v1677, %v1693
  %v1695 = vlaneseq
  %v1696 = vshrl.u32 %v1695, 7
  %v1697 = vsub.s32 4, %v1696
  %v1698 = vrot.slane %v1677, %v1697
  %v1699 = vlaneseq
  %v1700 = vshrl.u32 %v1699, 7
  %v1701 = vsub.s32 5, %v1700
  %v1702 = vrot.slane %v1677, %v1701
  %v1703 = vlaneseq
  %v1704 = vshrl.u32 %v1703, 7
  %v1705 = vsub.s32 6, %v1704
  %v1706 = vrot.slane %v1677, %v1705
  %v1707 = vlaneseq
  %v1708 = vshrl.u32 %v1707, 7
  %v1709 = vsub.s32 7, %v1708
  %v1710 = vrot.slane %v1677, %v1709
  %v1711 = vlaneseq
  %v1712 = vshrl.u32 %v1711, 7
  %v1713 = vsub.s32 0, %v1712
  %v1714 = vrot.slane %v1678, %v1713
  %v1715 = vlaneseq
  %v1716 = vshrl.u32 %v1715, 7
  %v1717 = vsub.s32 1, %v1716
  %v1718 = vrot.slane %v1678, %v1717
  %v1719 = vlaneseq
  %v1720 = vshrl.u32 %v1719, 7
  %v1721 = vsub.s32 2, %v1720
  %v1722 = vrot.slane %v1678, %v1721
  %v1723 = vlaneseq
  %v1724 = vshrl.u32 %v1723, 7
  %v1725 = vsub.s32 3, %v1724
  %v1726 = vrot.slane %v1678, %v1725
  %v1727 = vlaneseq
  %v1728 = vshrl.u32 %v1727, 7
  %v1729 = vsub.s32 4, %v1728
  %v1730 = vrot.slane %v1678, %v1729
  %v1731 = vlaneseq
  %v1732 = vshrl.u32 %v1731, 7
  %v1733 = vsub.s32 5, %v1732
  %v1734 = vrot.slane %v1678, %v1733
  %v1735 = vlaneseq
  %v1736 = vshrl.u32 %v1735, 7
  %v1737 = vsub.s32 6, %v1736
  %v1738 = vrot.slane %v1678, %v1737
  %v1739 = vlaneseq
  %v1740 = vshrl.u32 %v1739, 7
  %v1741 = vsub.s32 7, %v1740
  %v1742 = vrot.slane %v1678, %v1741
  %vm1743 = vcmp.eq.s32.totalorder %v1682, 1
  %vm1744 = vcmp.eq.s32.totalorder %v1686, 1
  %vm1745 = vcmp.eq.s32.totalorder %v1690, 1
  %vm1746 = vcmp.eq.s32.totalorder %v1694, 1
  %vm1747 = vcmp.eq.s32.totalorder %v1698, 1
  %vm1748 = vcmp.eq.s32.totalorder %v1702, 1
  %vm1749 = vcmp.eq.s32.totalorder %v1706, 1
  %vm1750 = vcmp.eq.s32.totalorder %v1710, 1
  %vm1751 = vcmp.eq.s32.totalorder %v1714, 1
  %vm1752 = vcmp.eq.s32.totalorder %v1718, 1
  %vm1753 = vcmp.eq.s32.totalorder %v1722, 1
  %vm1754 = vcmp.eq.s32.totalorder %v1726, 1
  %vm1755 = vcmp.eq.s32.totalorder %v1730, 1
  %vm1756 = vcmp.eq.s32.totalorder %v1734, 1
  %vm1757 = vcmp.eq.s32.totalorder %v1738, 1
  %vm1758 = vcmp.eq.s32.totalorder %v1742, 1
  %1759 = vrot.lane.b32.xlu0 %v1035, 96
  %v1760 = vpop.permute.xlu0 %1759
  %1761 = vrot.lane.b32.xlu0 %v1004, 96
  %v1762 = vpop.permute.xlu0 %1761
  %1763 = vrot.lane.b32.xlu0 %v1005, 96
  %v1764 = vpop.permute.xlu0 %1763
  %1765 = vrot.lane.b32.xlu0 %v1006, 96
  %v1766 = vpop.permute.xlu0 %1765
  %1767 = vrot.lane.b32.xlu0 %v1007, 96
  %v1768 = vpop.permute.xlu0 %1767
  %1769 = vrot.lane.b32.xlu0 %v1008, 96
  %v1770 = vpop.permute.xlu0 %1769
  %1771 = vrot.lane.b32.xlu0 %v1009, 96
  %v1772 = vpop.permute.xlu0 %1771
  %1773 = vrot.lane.b32.xlu0 %v1010, 96
  %v1774 = vpop.permute.xlu0 %1773
  %1775 = vrot.lane.b32.xlu0 %v1011, 96
  %v1776 = vpop.permute.xlu0 %1775
  %1777 = vrot.lane.b32.xlu0 %v1012, 96
  %v1778 = vpop.permute.xlu0 %1777
  %1779 = vrot.lane.b32.xlu0 %v1013, 96
  %v1780 = vpop.permute.xlu0 %1779
  %1781 = vrot.lane.b32.xlu0 %v1014, 96
  %v1782 = vpop.permute.xlu0 %1781
  %1783 = vrot.lane.b32.xlu0 %v1015, 96
  %v1784 = vpop.permute.xlu0 %1783
  %1785 = vrot.lane.b32.xlu0 %v1016, 96
  %v1786 = vpop.permute.xlu0 %1785
  %1787 = vrot.lane.b32.xlu0 %v1017, 96
  %v1788 = vpop.permute.xlu0 %1787
  %1789 = vrot.lane.b32.xlu0 %v1037, 96
  %v1790 = vpop.permute.xlu0 %1789
  %vm1791 = vcmask 785408
  %v1792 = vsel %vm1791, %v1760, %v1762
  %v1793 = vsel %vm1791, %v1762, %v1764
  %v1794 = vsel %vm1791, %v1764, %v1766
  %v1795 = vsel %vm1791, %v1766, %v1768
  %v1796 = vsel %vm1791, %v1768, %v1770
  %v1797 = vsel %vm1791, %v1770, %v1772
  %v1798 = vsel %vm1791, %v1772, %v1774
  %v1799 = vsel %vm1791, %v1774, %v1776
  %v1800 = vsel %vm1791, %v1776, %v1778
  %v1801 = vsel %vm1791, %v1778, %v1780
  %v1802 = vsel %vm1791, %v1780, %v1782
  %v1803 = vsel %vm1791, %v1782, %v1784
  %v1804 = vsel %vm1791, %v1784, %v1786
  %v1805 = vsel %vm1791, %v1786, %v1788
  %v1806 = vsel %vm1791, %v1788, %v1790
  %v1823 = vsel %vm1743, %v1792, 0.0
  %v1824 = vsel %vm1744, %v1793, 0.0
  %v1825 = vsel %vm1745, %v1794, 0.0
  %v1826 = vsel %vm1746, %v1795, 0.0
  %v1827 = vsel %vm1747, %v1796, 0.0
  %v1828 = vsel %vm1748, %v1797, 0.0
  %v1829 = vsel %vm1749, %v1798, 0.0
  %v1830 = vsel %vm1750, %v1799, 0.0
  %v1831 = vsel %vm1751, %v1800, 0.0
  %v1832 = vsel %vm1752, %v1801, 0.0
  %v1833 = vsel %vm1753, %v1802, 0.0
  %v1834 = vsel %vm1754, %v1803, 0.0
  %v1835 = vsel %vm1755, %v1804, 0.0
  %v1836 = vsel %vm1756, %v1805, 0.0
  %v1837 = vsel %vm1757, %v1806, 0.0
  %v1838 = vsel %vm1758, %v1790, 0.0
  %vm1839 = vmand %vm1509, %vm1339
  %vm1840 = vmand %vm1510, %vm1340
  %v1841 = vsel %vm1839, 1, 0
  %v1842 = vsel %vm1840, 1, 0
  %v1843 = vlaneseq
  %v1844 = vshrl.u32 %v1843, 7
  %v1845 = vsub.s32 0, %v1844
  %v1846 = vrot.slane %v1841, %v1845
  %v1847 = vlaneseq
  %v1848 = vshrl.u32 %v1847, 7
  %v1849 = vsub.s32 1, %v1848
  %v1850 = vrot.slane %v1841, %v1849
  %v1851 = vlaneseq
  %v1852 = vshrl.u32 %v1851, 7
  %v1853 = vsub.s32 2, %v1852
  %v1854 = vrot.slane %v1841, %v1853
  %v1855 = vlaneseq
  %v1856 = vshrl.u32 %v1855, 7
  %v1857 = vsub.s32 3, %v1856
  %v1858 = vrot.slane %v1841, %v1857
  %v1859 = vlaneseq
  %v1860 = vshrl.u32 %v1859, 7
  %v1861 = vsub.s32 4, %v1860
  %v1862 = vrot.slane %v1841, %v1861
  %v1863 = vlaneseq
  %v1864 = vshrl.u32 %v1863, 7
  %v1865 = vsub.s32 5, %v1864
  %v1866 = vrot.slane %v1841, %v1865
  %v1867 = vlaneseq
  %v1868 = vshrl.u32 %v1867, 7
  %v1869 = vsub.s32 6, %v1868
  %v1870 = vrot.slane %v1841, %v1869
  %v1871 = vlaneseq
  %v1872 = vshrl.u32 %v1871, 7
  %v1873 = vsub.s32 7, %v1872
  %v1874 = vrot.slane %v1841, %v1873
  %v1875 = vlaneseq
  %v1876 = vshrl.u32 %v1875, 7
  %v1877 = vsub.s32 0, %v1876
  %v1878 = vrot.slane %v1842, %v1877
  %v1879 = vlaneseq
  %v1880 = vshrl.u32 %v1879, 7
  %v1881 = vsub.s32 1, %v1880
  %v1882 = vrot.slane %v1842, %v1881
  %v1883 = vlaneseq
  %v1884 = vshrl.u32 %v1883, 7
  %v1885 = vsub.s32 2, %v1884
  %v1886 = vrot.slane %v1842, %v1885
  %v1887 = vlaneseq
  %v1888 = vshrl.u32 %v1887, 7
  %v1889 = vsub.s32 3, %v1888
  %v1890 = vrot.slane %v1842, %v1889
  %v1891 = vlaneseq
  %v1892 = vshrl.u32 %v1891, 7
  %v1893 = vsub.s32 4, %v1892
  %v1894 = vrot.slane %v1842, %v1893
  %v1895 = vlaneseq
  %v1896 = vshrl.u32 %v1895, 7
  %v1897 = vsub.s32 5, %v1896
  %v1898 = vrot.slane %v1842, %v1897
  %v1899 = vlaneseq
  %v1900 = vshrl.u32 %v1899, 7
  %v1901 = vsub.s32 6, %v1900
  %v1902 = vrot.slane %v1842, %v1901
  %v1903 = vlaneseq
  %v1904 = vshrl.u32 %v1903, 7
  %v1905 = vsub.s32 7, %v1904
  %v1906 = vrot.slane %v1842, %v1905
  %vm1907 = vcmp.eq.s32.totalorder %v1846, 1
  %vm1908 = vcmp.eq.s32.totalorder %v1850, 1
  %vm1909 = vcmp.eq.s32.totalorder %v1854, 1
  %vm1910 = vcmp.eq.s32.totalorder %v1858, 1
  %vm1911 = vcmp.eq.s32.totalorder %v1862, 1
  %vm1912 = vcmp.eq.s32.totalorder %v1866, 1
  %vm1913 = vcmp.eq.s32.totalorder %v1870, 1
  %vm1914 = vcmp.eq.s32.totalorder %v1874, 1
  %vm1915 = vcmp.eq.s32.totalorder %v1878, 1
  %vm1916 = vcmp.eq.s32.totalorder %v1882, 1
  %vm1917 = vcmp.eq.s32.totalorder %v1886, 1
  %vm1918 = vcmp.eq.s32.totalorder %v1890, 1
  %vm1919 = vcmp.eq.s32.totalorder %v1894, 1
  %vm1920 = vcmp.eq.s32.totalorder %v1898, 1
  %vm1921 = vcmp.eq.s32.totalorder %v1902, 1
  %vm1922 = vcmp.eq.s32.totalorder %v1906, 1
  %1923 = vrot.lane.b32.xlu0 %v1035, 95
  %v1924 = vpop.permute.xlu0 %1923
  %1925 = vrot.lane.b32.xlu0 %v1004, 95
  %v1926 = vpop.permute.xlu0 %1925
  %1927 = vrot.lane.b32.xlu0 %v1005, 95
  %v1928 = vpop.permute.xlu0 %1927
  %1929 = vrot.lane.b32.xlu0 %v1006, 95
  %v1930 = vpop.permute.xlu0 %1929
  %1931 = vrot.lane.b32.xlu0 %v1007, 95
  %v1932 = vpop.permute.xlu0 %1931
  %1933 = vrot.lane.b32.xlu0 %v1008, 95
  %v1934 = vpop.permute.xlu0 %1933
  %1935 = vrot.lane.b32.xlu0 %v1009, 95
  %v1936 = vpop.permute.xlu0 %1935
  %1937 = vrot.lane.b32.xlu0 %v1010, 95
  %v1938 = vpop.permute.xlu0 %1937
  %1939 = vrot.lane.b32.xlu0 %v1011, 95
  %v1940 = vpop.permute.xlu0 %1939
  %1941 = vrot.lane.b32.xlu0 %v1012, 95
  %v1942 = vpop.permute.xlu0 %1941
  %1943 = vrot.lane.b32.xlu0 %v1013, 95
  %v1944 = vpop.permute.xlu0 %1943
  %1945 = vrot.lane.b32.xlu0 %v1014, 95
  %v1946 = vpop.permute.xlu0 %1945
  %1947 = vrot.lane.b32.xlu0 %v1015, 95
  %v1948 = vpop.permute.xlu0 %1947
  %1949 = vrot.lane.b32.xlu0 %v1016, 95
  %v1950 = vpop.permute.xlu0 %1949
  %1951 = vrot.lane.b32.xlu0 %v1017, 95
  %v1952 = vpop.permute.xlu0 %1951
  %1953 = vrot.lane.b32.xlu0 %v1037, 95
  %v1954 = vpop.permute.xlu0 %1953
  %vm1955 = vcmask 777216
  %v1956 = vsel %vm1955, %v1924, %v1926
  %v1957 = vsel %vm1955, %v1926, %v1928
  %v1958 = vsel %vm1955, %v1928, %v1930
  %v1959 = vsel %vm1955, %v1930, %v1932
  %v1960 = vsel %vm1955, %v1932, %v1934
  %v1961 = vsel %vm1955, %v1934, %v1936
  %v1962 = vsel %vm1955, %v1936, %v1938
  %v1963 = vsel %vm1955, %v1938, %v1940
  %v1964 = vsel %vm1955, %v1940, %v1942
  %v1965 = vsel %vm1955, %v1942, %v1944
  %v1966 = vsel %vm1955, %v1944, %v1946
  %v1967 = vsel %vm1955, %v1946, %v1948
  %v1968 = vsel %vm1955, %v1948, %v1950
  %v1969 = vsel %vm1955, %v1950, %v1952
  %v1970 = vsel %vm1955, %v1952, %v1954
  %v1987 = vsel %vm1907, %v1956, 0.0
  %v1988 = vsel %vm1908, %v1957, 0.0
  %v1989 = vsel %vm1909, %v1958, 0.0
  %v1990 = vsel %vm1910, %v1959, 0.0
  %v1991 = vsel %vm1911, %v1960, 0.0
  %v1992 = vsel %vm1912, %v1961, 0.0
  %v1993 = vsel %vm1913, %v1962, 0.0
  %v1994 = vsel %vm1914, %v1963, 0.0
  %v1995 = vsel %vm1915, %v1964, 0.0
  %v1996 = vsel %vm1916, %v1965, 0.0
  %v1997 = vsel %vm1917, %v1966, 0.0
  %v1998 = vsel %vm1918, %v1967, 0.0
  %v1999 = vsel %vm1919, %v1968, 0.0
  %v2000 = vsel %vm1920, %v1969, 0.0
  %v2001 = vsel %vm1921, %v1970, 0.0
  %v2002 = vsel %vm1922, %v1954, 0.0
  %v2003 = vadd.s32 %v1042, 1
  %v2004 = vadd.s32 %v1044, 1
  %vm2005 = vcmp.ge.s32.totalorder %v2003, 0
  %vm2006 = vcmp.ge.s32.totalorder %v2004, 0
  %vm2007 = vcmp.lt.s32.totalorder %v2003, 31
  %vm2008 = vcmp.lt.s32.totalorder %v2004, 31
  %vm2009 = vmand %vm2005, %vm2007
  %vm2010 = vmand %vm2006, %vm2008
  %vm2011 = vmand %vm2009, %vm1059
  %vm2012 = vmand %vm2010, %vm1060
  %v2013 = vsel %vm2011, 1, 0
  %v2014 = vsel %vm2012, 1, 0
  %v2015 = vlaneseq
  %v2016 = vshrl.u32 %v2015, 7
  %v2017 = vsub.s32 0, %v2016
  %v2018 = vrot.slane %v2013, %v2017
  %v2019 = vlaneseq
  %v2020 = vshrl.u32 %v2019, 7
  %v2021 = vsub.s32 1, %v2020
  %v2022 = vrot.slane %v2013, %v2021
  %v2023 = vlaneseq
  %v2024 = vshrl.u32 %v2023, 7
  %v2025 = vsub.s32 2, %v2024
  %v2026 = vrot.slane %v2013, %v2025
  %v2027 = vlaneseq
  %v2028 = vshrl.u32 %v2027, 7
  %v2029 = vsub.s32 3, %v2028
  %v2030 = vrot.slane %v2013, %v2029
  %v2031 = vlaneseq
  %v2032 = vshrl.u32 %v2031, 7
  %v2033 = vsub.s32 4, %v2032
  %v2034 = vrot.slane %v2013, %v2033
  %v2035 = vlaneseq
  %v2036 = vshrl.u32 %v2035, 7
  %v2037 = vsub.s32 5, %v2036
  %v2038 = vrot.slane %v2013, %v2037
  %v2039 = vlaneseq
  %v2040 = vshrl.u32 %v2039, 7
  %v2041 = vsub.s32 6, %v2040
  %v2042 = vrot.slane %v2013, %v2041
  %v2043 = vlaneseq
  %v2044 = vshrl.u32 %v2043, 7
  %v2045 = vsub.s32 7, %v2044
  %v2046 = vrot.slane %v2013, %v2045
  %v2047 = vlaneseq
  %v2048 = vshrl.u32 %v2047, 7
  %v2049 = vsub.s32 0, %v2048
  %v2050 = vrot.slane %v2014, %v2049
  %v2051 = vlaneseq
  %v2052 = vshrl.u32 %v2051, 7
  %v2053 = vsub.s32 1, %v2052
  %v2054 = vrot.slane %v2014, %v2053
  %v2055 = vlaneseq
  %v2056 = vshrl.u32 %v2055, 7
  %v2057 = vsub.s32 2, %v2056
  %v2058 = vrot.slane %v2014, %v2057
  %v2059 = vlaneseq
  %v2060 = vshrl.u32 %v2059, 7
  %v2061 = vsub.s32 3, %v2060
  %v2062 = vrot.slane %v2014, %v2061
  %v2063 = vlaneseq
  %v2064 = vshrl.u32 %v2063, 7
  %v2065 = vsub.s32 4, %v2064
  %v2066 = vrot.slane %v2014, %v2065
  %v2067 = vlaneseq
  %v2068 = vshrl.u32 %v2067, 7
  %v2069 = vsub.s32 5, %v2068
  %v2070 = vrot.slane %v2014, %v2069
  %v2071 = vlaneseq
  %v2072 = vshrl.u32 %v2071, 7
  %v2073 = vsub.s32 6, %v2072
  %v2074 = vrot.slane %v2014, %v2073
  %v2075 = vlaneseq
  %v2076 = vshrl.u32 %v2075, 7
  %v2077 = vsub.s32 7, %v2076
  %v2078 = vrot.slane %v2014, %v2077
  %vm2079 = vcmp.eq.s32.totalorder %v2018, 1
  %vm2080 = vcmp.eq.s32.totalorder %v2022, 1
  %vm2081 = vcmp.eq.s32.totalorder %v2026, 1
  %vm2082 = vcmp.eq.s32.totalorder %v2030, 1
  %vm2083 = vcmp.eq.s32.totalorder %v2034, 1
  %vm2084 = vcmp.eq.s32.totalorder %v2038, 1
  %vm2085 = vcmp.eq.s32.totalorder %v2042, 1
  %vm2086 = vcmp.eq.s32.totalorder %v2046, 1
  %vm2087 = vcmp.eq.s32.totalorder %v2050, 1
  %vm2088 = vcmp.eq.s32.totalorder %v2054, 1
  %vm2089 = vcmp.eq.s32.totalorder %v2058, 1
  %vm2090 = vcmp.eq.s32.totalorder %v2062, 1
  %vm2091 = vcmp.eq.s32.totalorder %v2066, 1
  %vm2092 = vcmp.eq.s32.totalorder %v2070, 1
  %vm2093 = vcmp.eq.s32.totalorder %v2074, 1
  %vm2094 = vcmp.eq.s32.totalorder %v2078, 1
  %2095 = vrot.lane.b32.xlu0 %v1035, 66
  %v2096 = vpop.permute.xlu0 %2095
  %2097 = vrot.lane.b32.xlu0 %v1004, 66
  %v2098 = vpop.permute.xlu0 %2097
  %2099 = vrot.lane.b32.xlu0 %v1005, 66
  %v2100 = vpop.permute.xlu0 %2099
  %2101 = vrot.lane.b32.xlu0 %v1006, 66
  %v2102 = vpop.permute.xlu0 %2101
  %2103 = vrot.lane.b32.xlu0 %v1007, 66
  %v2104 = vpop.permute.xlu0 %2103
  %2105 = vrot.lane.b32.xlu0 %v1008, 66
  %v2106 = vpop.permute.xlu0 %2105
  %2107 = vrot.lane.b32.xlu0 %v1009, 66
  %v2108 = vpop.permute.xlu0 %2107
  %2109 = vrot.lane.b32.xlu0 %v1010, 66
  %v2110 = vpop.permute.xlu0 %2109
  %2111 = vrot.lane.b32.xlu0 %v1011, 66
  %v2112 = vpop.permute.xlu0 %2111
  %2113 = vrot.lane.b32.xlu0 %v1012, 66
  %v2114 = vpop.permute.xlu0 %2113
  %2115 = vrot.lane.b32.xlu0 %v1013, 66
  %v2116 = vpop.permute.xlu0 %2115
  %2117 = vrot.lane.b32.xlu0 %v1014, 66
  %v2118 = vpop.permute.xlu0 %2117
  %2119 = vrot.lane.b32.xlu0 %v1015, 66
  %v2120 = vpop.permute.xlu0 %2119
  %2121 = vrot.lane.b32.xlu0 %v1016, 66
  %v2122 = vpop.permute.xlu0 %2121
  %2123 = vrot.lane.b32.xlu0 %v1017, 66
  %v2124 = vpop.permute.xlu0 %2123
  %2125 = vrot.lane.b32.xlu0 %v1037, 66
  %v2126 = vpop.permute.xlu0 %2125
  %vm2127 = vcmask 539648
  %v2128 = vsel %vm2127, %v2096, %v2098
  %v2129 = vsel %vm2127, %v2098, %v2100
  %v2130 = vsel %vm2127, %v2100, %v2102
  %v2131 = vsel %vm2127, %v2102, %v2104
  %v2132 = vsel %vm2127, %v2104, %v2106
  %v2133 = vsel %vm2127, %v2106, %v2108
  %v2134 = vsel %vm2127, %v2108, %v2110
  %v2135 = vsel %vm2127, %v2110, %v2112
  %v2136 = vsel %vm2127, %v2112, %v2114
  %v2137 = vsel %vm2127, %v2114, %v2116
  %v2138 = vsel %vm2127, %v2116, %v2118
  %v2139 = vsel %vm2127, %v2118, %v2120
  %v2140 = vsel %vm2127, %v2120, %v2122
  %v2141 = vsel %vm2127, %v2122, %v2124
  %v2142 = vsel %vm2127, %v2124, %v2126
  %v2159 = vsel %vm2079, %v2128, 0.0
  %v2160 = vsel %vm2080, %v2129, 0.0
  %v2161 = vsel %vm2081, %v2130, 0.0
  %v2162 = vsel %vm2082, %v2131, 0.0
  %v2163 = vsel %vm2083, %v2132, 0.0
  %v2164 = vsel %vm2084, %v2133, 0.0
  %v2165 = vsel %vm2085, %v2134, 0.0
  %v2166 = vsel %vm2086, %v2135, 0.0
  %v2167 = vsel %vm2087, %v2136, 0.0
  %v2168 = vsel %vm2088, %v2137, 0.0
  %v2169 = vsel %vm2089, %v2138, 0.0
  %v2170 = vsel %vm2090, %v2139, 0.0
  %v2171 = vsel %vm2091, %v2140, 0.0
  %v2172 = vsel %vm2092, %v2141, 0.0
  %v2173 = vsel %vm2093, %v2142, 0.0
  %v2174 = vsel %vm2094, %v2126, 0.0
  %vm2175 = vmand %vm2009, %vm1165
  %vm2176 = vmand %vm2010, %vm1166
  %v2177 = vsel %vm2175, 1, 0
  %v2178 = vsel %vm2176, 1, 0
  %v2179 = vlaneseq
  %v2180 = vshrl.u32 %v2179, 7
  %v2181 = vsub.s32 0, %v2180
  %v2182 = vrot.slane %v2177, %v2181
  %v2183 = vlaneseq
  %v2184 = vshrl.u32 %v2183, 7
  %v2185 = vsub.s32 1, %v2184
  %v2186 = vrot.slane %v2177, %v2185
  %v2187 = vlaneseq
  %v2188 = vshrl.u32 %v2187, 7
  %v2189 = vsub.s32 2, %v2188
  %v2190 = vrot.slane %v2177, %v2189
  %v2191 = vlaneseq
  %v2192 = vshrl.u32 %v2191, 7
  %v2193 = vsub.s32 3, %v2192
  %v2194 = vrot.slane %v2177, %v2193
  %v2195 = vlaneseq
  %v2196 = vshrl.u32 %v2195, 7
  %v2197 = vsub.s32 4, %v2196
  %v2198 = vrot.slane %v2177, %v2197
  %v2199 = vlaneseq
  %v2200 = vshrl.u32 %v2199, 7
  %v2201 = vsub.s32 5, %v2200
  %v2202 = vrot.slane %v2177, %v2201
  %v2203 = vlaneseq
  %v2204 = vshrl.u32 %v2203, 7
  %v2205 = vsub.s32 6, %v2204
  %v2206 = vrot.slane %v2177, %v2205
  %v2207 = vlaneseq
  %v2208 = vshrl.u32 %v2207, 7
  %v2209 = vsub.s32 7, %v2208
  %v2210 = vrot.slane %v2177, %v2209
  %v2211 = vlaneseq
  %v2212 = vshrl.u32 %v2211, 7
  %v2213 = vsub.s32 0, %v2212
  %v2214 = vrot.slane %v2178, %v2213
  %v2215 = vlaneseq
  %v2216 = vshrl.u32 %v2215, 7
  %v2217 = vsub.s32 1, %v2216
  %v2218 = vrot.slane %v2178, %v2217
  %v2219 = vlaneseq
  %v2220 = vshrl.u32 %v2219, 7
  %v2221 = vsub.s32 2, %v2220
  %v2222 = vrot.slane %v2178, %v2221
  %v2223 = vlaneseq
  %v2224 = vshrl.u32 %v2223, 7
  %v2225 = vsub.s32 3, %v2224
  %v2226 = vrot.slane %v2178, %v2225
  %v2227 = vlaneseq
  %v2228 = vshrl.u32 %v2227, 7
  %v2229 = vsub.s32 4, %v2228
  %v2230 = vrot.slane %v2178, %v2229
  %v2231 = vlaneseq
  %v2232 = vshrl.u32 %v2231, 7
  %v2233 = vsub.s32 5, %v2232
  %v2234 = vrot.slane %v2178, %v2233
  %v2235 = vlaneseq
  %v2236 = vshrl.u32 %v2235, 7
  %v2237 = vsub.s32 6, %v2236
  %v2238 = vrot.slane %v2178, %v2237
  %v2239 = vlaneseq
  %v2240 = vshrl.u32 %v2239, 7
  %v2241 = vsub.s32 7, %v2240
  %v2242 = vrot.slane %v2178, %v2241
  %vm2243 = vcmp.eq.s32.totalorder %v2182, 1
  %vm2244 = vcmp.eq.s32.totalorder %v2186, 1
  %vm2245 = vcmp.eq.s32.totalorder %v2190, 1
  %vm2246 = vcmp.eq.s32.totalorder %v2194, 1
  %vm2247 = vcmp.eq.s32.totalorder %v2198, 1
  %vm2248 = vcmp.eq.s32.totalorder %v2202, 1
  %vm2249 = vcmp.eq.s32.totalorder %v2206, 1
  %vm2250 = vcmp.eq.s32.totalorder %v2210, 1
  %vm2251 = vcmp.eq.s32.totalorder %v2214, 1
  %vm2252 = vcmp.eq.s32.totalorder %v2218, 1
  %vm2253 = vcmp.eq.s32.totalorder %v2222, 1
  %vm2254 = vcmp.eq.s32.totalorder %v2226, 1
  %vm2255 = vcmp.eq.s32.totalorder %v2230, 1
  %vm2256 = vcmp.eq.s32.totalorder %v2234, 1
  %vm2257 = vcmp.eq.s32.totalorder %v2238, 1
  %vm2258 = vcmp.eq.s32.totalorder %v2242, 1
  %2259 = vrot.lane.b32.xlu0 %v1035, 65
  %v2260 = vpop.permute.xlu0 %2259
  %2261 = vrot.lane.b32.xlu0 %v1004, 65
  %v2262 = vpop.permute.xlu0 %2261
  %2263 = vrot.lane.b32.xlu0 %v1005, 65
  %v2264 = vpop.permute.xlu0 %2263
  %2265 = vrot.lane.b32.xlu0 %v1006, 65
  %v2266 = vpop.permute.xlu0 %2265
  %2267 = vrot.lane.b32.xlu0 %v1007, 65
  %v2268 = vpop.permute.xlu0 %2267
  %2269 = vrot.lane.b32.xlu0 %v1008, 65
  %v2270 = vpop.permute.xlu0 %2269
  %2271 = vrot.lane.b32.xlu0 %v1009, 65
  %v2272 = vpop.permute.xlu0 %2271
  %2273 = vrot.lane.b32.xlu0 %v1010, 65
  %v2274 = vpop.permute.xlu0 %2273
  %2275 = vrot.lane.b32.xlu0 %v1011, 65
  %v2276 = vpop.permute.xlu0 %2275
  %2277 = vrot.lane.b32.xlu0 %v1012, 65
  %v2278 = vpop.permute.xlu0 %2277
  %2279 = vrot.lane.b32.xlu0 %v1013, 65
  %v2280 = vpop.permute.xlu0 %2279
  %2281 = vrot.lane.b32.xlu0 %v1014, 65
  %v2282 = vpop.permute.xlu0 %2281
  %2283 = vrot.lane.b32.xlu0 %v1015, 65
  %v2284 = vpop.permute.xlu0 %2283
  %2285 = vrot.lane.b32.xlu0 %v1016, 65
  %v2286 = vpop.permute.xlu0 %2285
  %2287 = vrot.lane.b32.xlu0 %v1017, 65
  %v2288 = vpop.permute.xlu0 %2287
  %2289 = vrot.lane.b32.xlu0 %v1037, 65
  %v2290 = vpop.permute.xlu0 %2289
  %vm2291 = vcmask 531456
  %v2292 = vsel %vm2291, %v2260, %v2262
  %v2293 = vsel %vm2291, %v2262, %v2264
  %v2294 = vsel %vm2291, %v2264, %v2266
  %v2295 = vsel %vm2291, %v2266, %v2268
  %v2296 = vsel %vm2291, %v2268, %v2270
  %v2297 = vsel %vm2291, %v2270, %v2272
  %v2298 = vsel %vm2291, %v2272, %v2274
  %v2299 = vsel %vm2291, %v2274, %v2276
  %v2300 = vsel %vm2291, %v2276, %v2278
  %v2301 = vsel %vm2291, %v2278, %v2280
  %v2302 = vsel %vm2291, %v2280, %v2282
  %v2303 = vsel %vm2291, %v2282, %v2284
  %v2304 = vsel %vm2291, %v2284, %v2286
  %v2305 = vsel %vm2291, %v2286, %v2288
  %v2306 = vsel %vm2291, %v2288, %v2290
  %v2323 = vsel %vm2243, %v2292, 0.0
  %v2324 = vsel %vm2244, %v2293, 0.0
  %v2325 = vsel %vm2245, %v2294, 0.0
  %v2326 = vsel %vm2246, %v2295, 0.0
  %v2327 = vsel %vm2247, %v2296, 0.0
  %v2328 = vsel %vm2248, %v2297, 0.0
  %v2329 = vsel %vm2249, %v2298, 0.0
  %v2330 = vsel %vm2250, %v2299, 0.0
  %v2331 = vsel %vm2251, %v2300, 0.0
  %v2332 = vsel %vm2252, %v2301, 0.0
  %v2333 = vsel %vm2253, %v2302, 0.0
  %v2334 = vsel %vm2254, %v2303, 0.0
  %v2335 = vsel %vm2255, %v2304, 0.0
  %v2336 = vsel %vm2256, %v2305, 0.0
  %v2337 = vsel %vm2257, %v2306, 0.0
  %v2338 = vsel %vm2258, %v2290, 0.0
  %vm2339 = vmand %vm2009, %vm1339
  %vm2340 = vmand %vm2010, %vm1340
  %v2341 = vsel %vm2339, 1, 0
  %v2342 = vsel %vm2340, 1, 0
  %v2343 = vlaneseq
  %v2344 = vshrl.u32 %v2343, 7
  %v2345 = vsub.s32 0, %v2344
  %v2346 = vrot.slane %v2341, %v2345
  %v2347 = vlaneseq
  %v2348 = vshrl.u32 %v2347, 7
  %v2349 = vsub.s32 1, %v2348
  %v2350 = vrot.slane %v2341, %v2349
  %v2351 = vlaneseq
  %v2352 = vshrl.u32 %v2351, 7
  %v2353 = vsub.s32 2, %v2352
  %v2354 = vrot.slane %v2341, %v2353
  %v2355 = vlaneseq
  %v2356 = vshrl.u32 %v2355, 7
  %v2357 = vsub.s32 3, %v2356
  %v2358 = vrot.slane %v2341, %v2357
  %v2359 = vlaneseq
  %v2360 = vshrl.u32 %v2359, 7
  %v2361 = vsub.s32 4, %v2360
  %v2362 = vrot.slane %v2341, %v2361
  %v2363 = vlaneseq
  %v2364 = vshrl.u32 %v2363, 7
  %v2365 = vsub.s32 5, %v2364
  %v2366 = vrot.slane %v2341, %v2365
  %v2367 = vlaneseq
  %v2368 = vshrl.u32 %v2367, 7
  %v2369 = vsub.s32 6, %v2368
  %v2370 = vrot.slane %v2341, %v2369
  %v2371 = vlaneseq
  %v2372 = vshrl.u32 %v2371, 7
  %v2373 = vsub.s32 7, %v2372
  %v2374 = vrot.slane %v2341, %v2373
  %v2375 = vlaneseq
  %v2376 = vshrl.u32 %v2375, 7
  %v2377 = vsub.s32 0, %v2376
  %v2378 = vrot.slane %v2342, %v2377
  %v2379 = vlaneseq
  %v2380 = vshrl.u32 %v2379, 7
  %v2381 = vsub.s32 1, %v2380
  %v2382 = vrot.slane %v2342, %v2381
  %v2383 = vlaneseq
  %v2384 = vshrl.u32 %v2383, 7
  %v2385 = vsub.s32 2, %v2384
  %v2386 = vrot.slane %v2342, %v2385
  %v2387 = vlaneseq
  %v2388 = vshrl.u32 %v2387, 7
  %v2389 = vsub.s32 3, %v2388
  %v2390 = vrot.slane %v2342, %v2389
  %v2391 = vlaneseq
  %v2392 = vshrl.u32 %v2391, 7
  %v2393 = vsub.s32 4, %v2392
  %v2394 = vrot.slane %v2342, %v2393
  %v2395 = vlaneseq
  %v2396 = vshrl.u32 %v2395, 7
  %v2397 = vsub.s32 5, %v2396
  %v2398 = vrot.slane %v2342, %v2397
  %v2399 = vlaneseq
  %v2400 = vshrl.u32 %v2399, 7
  %v2401 = vsub.s32 6, %v2400
  %v2402 = vrot.slane %v2342, %v2401
  %v2403 = vlaneseq
  %v2404 = vshrl.u32 %v2403, 7
  %v2405 = vsub.s32 7, %v2404
  %v2406 = vrot.slane %v2342, %v2405
  %vm2407 = vcmp.eq.s32.totalorder %v2346, 1
  %vm2408 = vcmp.eq.s32.totalorder %v2350, 1
  %vm2409 = vcmp.eq.s32.totalorder %v2354, 1
  %vm2410 = vcmp.eq.s32.totalorder %v2358, 1
  %vm2411 = vcmp.eq.s32.totalorder %v2362, 1
  %vm2412 = vcmp.eq.s32.totalorder %v2366, 1
  %vm2413 = vcmp.eq.s32.totalorder %v2370, 1
  %vm2414 = vcmp.eq.s32.totalorder %v2374, 1
  %vm2415 = vcmp.eq.s32.totalorder %v2378, 1
  %vm2416 = vcmp.eq.s32.totalorder %v2382, 1
  %vm2417 = vcmp.eq.s32.totalorder %v2386, 1
  %vm2418 = vcmp.eq.s32.totalorder %v2390, 1
  %vm2419 = vcmp.eq.s32.totalorder %v2394, 1
  %vm2420 = vcmp.eq.s32.totalorder %v2398, 1
  %vm2421 = vcmp.eq.s32.totalorder %v2402, 1
  %vm2422 = vcmp.eq.s32.totalorder %v2406, 1
  %2423 = vrot.lane.b32.xlu0 %v1035, 64
  %v2424 = vpop.permute.xlu0 %2423
  %2425 = vrot.lane.b32.xlu0 %v1004, 64
  %v2426 = vpop.permute.xlu0 %2425
  %2427 = vrot.lane.b32.xlu0 %v1005, 64
  %v2428 = vpop.permute.xlu0 %2427
  %2429 = vrot.lane.b32.xlu0 %v1006, 64
  %v2430 = vpop.permute.xlu0 %2429
  %2431 = vrot.lane.b32.xlu0 %v1007, 64
  %v2432 = vpop.permute.xlu0 %2431
  %2433 = vrot.lane.b32.xlu0 %v1008, 64
  %v2434 = vpop.permute.xlu0 %2433
  %2435 = vrot.lane.b32.xlu0 %v1009, 64
  %v2436 = vpop.permute.xlu0 %2435
  %2437 = vrot.lane.b32.xlu0 %v1010, 64
  %v2438 = vpop.permute.xlu0 %2437
  %2439 = vrot.lane.b32.xlu0 %v1011, 64
  %v2440 = vpop.permute.xlu0 %2439
  %2441 = vrot.lane.b32.xlu0 %v1012, 64
  %v2442 = vpop.permute.xlu0 %2441
  %2443 = vrot.lane.b32.xlu0 %v1013, 64
  %v2444 = vpop.permute.xlu0 %2443
  %2445 = vrot.lane.b32.xlu0 %v1014, 64
  %v2446 = vpop.permute.xlu0 %2445
  %2447 = vrot.lane.b32.xlu0 %v1015, 64
  %v2448 = vpop.permute.xlu0 %2447
  %2449 = vrot.lane.b32.xlu0 %v1016, 64
  %v2450 = vpop.permute.xlu0 %2449
  %2451 = vrot.lane.b32.xlu0 %v1017, 64
  %v2452 = vpop.permute.xlu0 %2451
  %2453 = vrot.lane.b32.xlu0 %v1037, 64
  %v2454 = vpop.permute.xlu0 %2453
  %vm2455 = vcmask 523264
  %v2456 = vsel %vm2455, %v2424, %v2426
  %v2457 = vsel %vm2455, %v2426, %v2428
  %v2458 = vsel %vm2455, %v2428, %v2430
  %v2459 = vsel %vm2455, %v2430, %v2432
  %v2460 = vsel %vm2455, %v2432, %v2434
  %v2461 = vsel %vm2455, %v2434, %v2436
  %v2462 = vsel %vm2455, %v2436, %v2438
  %v2463 = vsel %vm2455, %v2438, %v2440
  %v2464 = vsel %vm2455, %v2440, %v2442
  %v2465 = vsel %vm2455, %v2442, %v2444
  %v2466 = vsel %vm2455, %v2444, %v2446
  %v2467 = vsel %vm2455, %v2446, %v2448
  %v2468 = vsel %vm2455, %v2448, %v2450
  %v2469 = vsel %vm2455, %v2450, %v2452
  %v2470 = vsel %vm2455, %v2452, %v2454
  %v2487 = vsel %vm2407, %v2456, 0.0
  %v2488 = vsel %vm2408, %v2457, 0.0
  %v2489 = vsel %vm2409, %v2458, 0.0
  %v2490 = vsel %vm2410, %v2459, 0.0
  %v2491 = vsel %vm2411, %v2460, 0.0
  %v2492 = vsel %vm2412, %v2461, 0.0
  %v2493 = vsel %vm2413, %v2462, 0.0
  %v2494 = vsel %vm2414, %v2463, 0.0
  %v2495 = vsel %vm2415, %v2464, 0.0
  %v2496 = vsel %vm2416, %v2465, 0.0
  %v2497 = vsel %vm2417, %v2466, 0.0
  %v2498 = vsel %vm2418, %v2467, 0.0
  %v2499 = vsel %vm2419, %v2468, 0.0
  %v2500 = vsel %vm2420, %v2469, 0.0
  %v2501 = vsel %vm2421, %v2470, 0.0
  %v2502 = vsel %vm2422, %v2454, 0.0
  %v2519 = vrot.slane %v1317, 4
  %v2520 = vrot.slane %v1318, 4
  %v2521 = vrot.slane %v1319, 4
  %v2522 = vrot.slane %v1320, 4
  %v2523 = vrot.slane %v1321, 4
  %v2524 = vrot.slane %v1322, 4
  %v2525 = vrot.slane %v1323, 4
  %v2526 = vrot.slane %v1324, 4
  %v2527 = vrot.slane %v1325, 4
  %v2528 = vrot.slane %v1326, 4
  %v2529 = vrot.slane %v1327, 4
  %v2530 = vrot.slane %v1328, 4
  %v2531 = vrot.slane %v1329, 4
  %v2532 = vrot.slane %v1330, 4
  %v2533 = vrot.slane %v1331, 4
  %v2534 = vrot.slane %v1332, 4
  %v2567 = vrot.slane %v1659, 4
  %v2568 = vrot.slane %v1660, 4
  %v2569 = vrot.slane %v1661, 4
  %v2570 = vrot.slane %v1662, 4
  %v2571 = vrot.slane %v1663, 4
  %v2572 = vrot.slane %v1664, 4
  %v2573 = vrot.slane %v1665, 4
  %v2574 = vrot.slane %v1666, 4
  %v2575 = vrot.slane %v1667, 4
  %v2576 = vrot.slane %v1668, 4
  %v2577 = vrot.slane %v1669, 4
  %v2578 = vrot.slane %v1670, 4
  %v2579 = vrot.slane %v1671, 4
  %v2580 = vrot.slane %v1672, 4
  %v2581 = vrot.slane %v1673, 4
  %v2582 = vrot.slane %v1674, 4
  %v2615 = vrot.slane %v1987, 4
  %v2616 = vrot.slane %v1988, 4
  %v2617 = vrot.slane %v1989, 4
  %v2618 = vrot.slane %v1990, 4
  %v2619 = vrot.slane %v1991, 4
  %v2620 = vrot.slane %v1992, 4
  %v2621 = vrot.slane %v1993, 4
  %v2622 = vrot.slane %v1994, 4
  %v2623 = vrot.slane %v1995, 4
  %v2624 = vrot.slane %v1996, 4
  %v2625 = vrot.slane %v1997, 4
  %v2626 = vrot.slane %v1998, 4
  %v2627 = vrot.slane %v1999, 4
  %v2628 = vrot.slane %v2000, 4
  %v2629 = vrot.slane %v2001, 4
  %v2630 = vrot.slane %v2002, 4
  %v2663 = vrot.slane %v2323, 4
  %v2664 = vrot.slane %v2324, 4
  %v2665 = vrot.slane %v2325, 4
  %v2666 = vrot.slane %v2326, 4
  %v2667 = vrot.slane %v2327, 4
  %v2668 = vrot.slane %v2328, 4
  %v2669 = vrot.slane %v2329, 4
  %v2670 = vrot.slane %v2330, 4
  %v2671 = vrot.slane %v2331, 4
  %v2672 = vrot.slane %v2332, 4
  %v2673 = vrot.slane %v2333, 4
  %v2674 = vrot.slane %v2334, 4
  %v2675 = vrot.slane %v2335, 4
  %v2676 = vrot.slane %v2336, 4
  %v2677 = vrot.slane %v2337, 4
  %v2678 = vrot.slane %v2338, 4
  %v2695 = vsel %vm692, %v1145, %v2519
  %v2696 = vsel %vm692, %v1146, %v2520
  %v2697 = vsel %vm692, %v1147, %v2521
  %v2698 = vsel %vm692, %v1148, %v2522
  %v2699 = vsel %vm692, %v1149, %v2523
  %v2700 = vsel %vm692, %v1150, %v2524
  %v2701 = vsel %vm692, %v1151, %v2525
  %v2702 = vsel %vm692, %v1152, %v2526
  %v2703 = vsel %vm692, %v1153, %v2527
  %v2704 = vsel %vm692, %v1154, %v2528
  %v2705 = vsel %vm692, %v1155, %v2529
  %v2706 = vsel %vm692, %v1156, %v2530
  %v2707 = vsel %vm692, %v1157, %v2531
  %v2708 = vsel %vm692, %v1158, %v2532
  %v2709 = vsel %vm692, %v1159, %v2533
  %v2710 = vsel %vm692, %v1160, %v2534
  %v2711 = vsel %vm692, %v1489, %v2567
  %v2712 = vsel %vm692, %v1490, %v2568
  %v2713 = vsel %vm692, %v1491, %v2569
  %v2714 = vsel %vm692, %v1492, %v2570
  %v2715 = vsel %vm692, %v1493, %v2571
  %v2716 = vsel %vm692, %v1494, %v2572
  %v2717 = vsel %vm692, %v1495, %v2573
  %v2718 = vsel %vm692, %v1496, %v2574
  %v2719 = vsel %vm692, %v1497, %v2575
  %v2720 = vsel %vm692, %v1498, %v2576
  %v2721 = vsel %vm692, %v1499, %v2577
  %v2722 = vsel %vm692, %v1500, %v2578
  %v2723 = vsel %vm692, %v1501, %v2579
  %v2724 = vsel %vm692, %v1502, %v2580
  %v2725 = vsel %vm692, %v1503, %v2581
  %v2726 = vsel %vm692, %v1504, %v2582
  %v2727 = vsel %vm692, %v1823, %v2615
  %v2728 = vsel %vm692, %v1824, %v2616
  %v2729 = vsel %vm692, %v1825, %v2617
  %v2730 = vsel %vm692, %v1826, %v2618
  %v2731 = vsel %vm692, %v1827, %v2619
  %v2732 = vsel %vm692, %v1828, %v2620
  %v2733 = vsel %vm692, %v1829, %v2621
  %v2734 = vsel %vm692, %v1830, %v2622
  %v2735 = vsel %vm692, %v1831, %v2623
  %v2736 = vsel %vm692, %v1832, %v2624
  %v2737 = vsel %vm692, %v1833, %v2625
  %v2738 = vsel %vm692, %v1834, %v2626
  %v2739 = vsel %vm692, %v1835, %v2627
  %v2740 = vsel %vm692, %v1836, %v2628
  %v2741 = vsel %vm692, %v1837, %v2629
  %v2742 = vsel %vm692, %v1838, %v2630
  %v2743 = vsel %vm692, %v2159, %v2663
  %v2744 = vsel %vm692, %v2160, %v2664
  %v2745 = vsel %vm692, %v2161, %v2665
  %v2746 = vsel %vm692, %v2162, %v2666
  %v2747 = vsel %vm692, %v2163, %v2667
  %v2748 = vsel %vm692, %v2164, %v2668
  %v2749 = vsel %vm692, %v2165, %v2669
  %v2750 = vsel %vm692, %v2166, %v2670
  %v2751 = vsel %vm692, %v2167, %v2671
  %v2752 = vsel %vm692, %v2168, %v2672
  %v2753 = vsel %vm692, %v2169, %v2673
  %v2754 = vsel %vm692, %v2170, %v2674
  %v2755 = vsel %vm692, %v2171, %v2675
  %v2756 = vsel %vm692, %v2172, %v2676
  %v2757 = vsel %vm692, %v2173, %v2677
  %v2758 = vsel %vm692, %v2174, %v2678
  %v2759 = vpack.c.bf16 %v2711, %v2695
  %v2760 = vpack.c.bf16 %v2712, %v2696
  %v2761 = vpack.c.bf16 %v2713, %v2697
  %v2762 = vpack.c.bf16 %v2714, %v2698
  %v2763 = vpack.c.bf16 %v2715, %v2699
  %v2764 = vpack.c.bf16 %v2716, %v2700
  %v2765 = vpack.c.bf16 %v2717, %v2701
  %v2766 = vpack.c.bf16 %v2718, %v2702
  %v2767 = vpack.c.bf16 %v2719, %v2703
  %v2768 = vpack.c.bf16 %v2720, %v2704
  %v2769 = vpack.c.bf16 %v2721, %v2705
  %v2770 = vpack.c.bf16 %v2722, %v2706
  %v2771 = vpack.c.bf16 %v2723, %v2707
  %v2772 = vpack.c.bf16 %v2724, %v2708
  %v2773 = vpack.c.bf16 %v2725, %v2709
  %v2774 = vpack.c.bf16 %v2726, %v2710
  %v2775 = vpack.c.bf16 %v2743, %v2727
  %v2776 = vpack.c.bf16 %v2744, %v2728
  %v2777 = vpack.c.bf16 %v2745, %v2729
  %v2778 = vpack.c.bf16 %v2746, %v2730
  %v2779 = vpack.c.bf16 %v2747, %v2731
  %v2780 = vpack.c.bf16 %v2748, %v2732
  %v2781 = vpack.c.bf16 %v2749, %v2733
  %v2782 = vpack.c.bf16 %v2750, %v2734
  %v2783 = vpack.c.bf16 %v2751, %v2735
  %v2784 = vpack.c.bf16 %v2752, %v2736
  %v2785 = vpack.c.bf16 %v2753, %v2737
  %v2786 = vpack.c.bf16 %v2754, %v2738
  %v2787 = vpack.c.bf16 %v2755, %v2739
  %v2788 = vpack.c.bf16 %v2756, %v2740
  %v2789 = vpack.c.bf16 %v2757, %v2741
  %v2790 = vpack.c.bf16 %v2758, %v2742
  %v2791 = vpack.c.bf16 %v2487, %v2487
  %v2792 = vpack.c.bf16 %v2488, %v2488
  %v2793 = vpack.c.bf16 %v2489, %v2489
  %v2794 = vpack.c.bf16 %v2490, %v2490
  %v2795 = vpack.c.bf16 %v2491, %v2491
  %v2796 = vpack.c.bf16 %v2492, %v2492
  %v2797 = vpack.c.bf16 %v2493, %v2493
  %v2798 = vpack.c.bf16 %v2494, %v2494
  %v2799 = vpack.c.bf16 %v2495, %v2495
  %v2800 = vpack.c.bf16 %v2496, %v2496
  %v2801 = vpack.c.bf16 %v2497, %v2497
  %v2802 = vpack.c.bf16 %v2498, %v2498
  %v2803 = vpack.c.bf16 %v2499, %v2499
  %v2804 = vpack.c.bf16 %v2500, %v2500
  %v2805 = vpack.c.bf16 %v2501, %v2501
  %v2806 = vpack.c.bf16 %v2502, %v2502
  %v2807 = vld [vmem:[%s5] sm:$0xf]
  %v2808 = vld [vmem:[%s6] sm:$0xff]
  %2810 = vset.pattern.permute.xlu0 0
  %2811 = vperm.xlu0 %2810, %v2808
  %v2812 = vpop.permute.xlu0 %2811
  %v2815 = vsel %vm295, %v2807, 0
  %v2818 = vsel %vm299, %v2791, 0
  %v2821 = vsel %vm299, %v2792, 0
  %v2824 = vsel %vm299, %v2793, 0
  %v2827 = vsel %vm299, %v2794, 0
  %v2830 = vsel %vm299, %v2795, 0
  %v2833 = vsel %vm299, %v2796, 0
  %v2836 = vsel %vm299, %v2797, 0
  %v2839 = vsel %vm299, %v2798, 0
  %v2842 = vsel %vm299, %v2799, 0
  %v2845 = vsel %vm299, %v2800, 0
  %v2848 = vsel %vm299, %v2801, 0
  %v2851 = vsel %vm299, %v2802, 0
  %v2854 = vsel %vm299, %v2803, 0
  %v2857 = vsel %vm299, %v2804, 0
  %v2860 = vsel %vm299, %v2805, 0
  %v2863 = vsel %vm299, %v2806, 0
  %2865 = vmatprep.subr.bf16.mxu0 %v2760
  %2866 = vmatpush1.bf16.msra.mxu0 %v2759
  %2867 = vmatprep.subr.bf16.mxu0 %v2776
  %2868 = vmatpush1.bf16.msra.mxu0 %v2775
  %2869 = vmatprep.subr.bf16.mxu0 %v2821
  %2870 = vmatpush1.bf16.msra.mxu0 %v2818
  %2871 = vmatprep.subr.bf16.mxu0 0
  %2872 = vmatpush1.bf16.msra.mxu0 0
  %2873 = vmatprep.subr.bf16.mxu0 0
  %2874 = vmatpush1.bf16.msra.mxu0 0
  %2875 = vmatprep.subr.bf16.mxu0 0
  %2876 = vmatpush1.bf16.msra.mxu0 0
  %2877 = vmatprep.subr.bf16.mxu0 0
  %2878 = vmatpush1.bf16.msra.mxu0 0
  %2879 = vmatprep.subr.bf16.mxu0 0
  %2880 = vmatpush1.bf16.msra.mxu0 0
  %2881 = vmatprep.subr.bf16.mxu0 0
  %2882 = vmatpush1.bf16.msra.mxu0 0
  %2883 = vmatprep.subr.bf16.mxu0 0
  %2884 = vmatpush1.bf16.msra.mxu0 0
  %2885 = vmatprep.subr.bf16.mxu0 0
  %2886 = vmatpush1.bf16.msra.mxu0 0
  %2887 = vmatprep.subr.bf16.mxu0 0
  %2888 = vmatpush1.bf16.msra.mxu0 0
  %2889 = vmatprep.subr.bf16.mxu0 0
  %2890 = vmatpush1.bf16.msra.mxu0 0
  %2891 = vmatprep.subr.bf16.mxu0 0
  %2892 = vmatpush1.bf16.msra.mxu0 0
  %2893 = vmatprep.subr.bf16.mxu0 0
  %2894 = vmatpush1.bf16.msra.mxu0 0
  %2895 = vmatprep.subr.bf16.mxu0 0
  %2896 = vmatpush1.bf16.msra.mxu0 0
  %2897 = vmatprep.mubr.bf16.mxu0 0
  %2898 = vmatmul.mubr.bf16.gmra.mrb[0].mxu0 %v2815
  %v2899 = vpop.f32.mrb[0].mxu0
  %v2900 = vadd.f32 %v2812, %v2899
  %v2901 = vpop.f32.mrb[0].mxu0
  %v2902 = vadd.f32 %v2812, %v2901
  %v2903 = vpop.f32.mrb[0].mxu0
  %v2904 = vpop.f32.mrb[0].mxu0
  %2905 = vdwg.mxu0
  %2906 = vmatprep.subr.bf16.mxu0 %v2762
  %2907 = vmatpush1.bf16.msra.mxu0 %v2761
  %2908 = vmatprep.subr.bf16.mxu0 %v2778
  %2909 = vmatpush1.bf16.msra.mxu0 %v2777
  %2910 = vmatprep.subr.bf16.mxu0 %v2827
  %2911 = vmatpush1.bf16.msra.mxu0 %v2824
  %2912 = vmatprep.subr.bf16.mxu0 0
  %2913 = vmatpush1.bf16.msra.mxu0 0
  %2914 = vmatprep.subr.bf16.mxu0 0
  %2915 = vmatpush1.bf16.msra.mxu0 0
  %2916 = vmatprep.subr.bf16.mxu0 0
  %2917 = vmatpush1.bf16.msra.mxu0 0
  %2918 = vmatprep.subr.bf16.mxu0 0
  %2919 = vmatpush1.bf16.msra.mxu0 0
  %2920 = vmatprep.subr.bf16.mxu0 0
  %2921 = vmatpush1.bf16.msra.mxu0 0
  %2922 = vmatprep.subr.bf16.mxu0 0
  %2923 = vmatpush1.bf16.msra.mxu0 0
  %2924 = vmatprep.subr.bf16.mxu0 0
  %2925 = vmatpush1.bf16.msra.mxu0 0
  %2926 = vmatprep.subr.bf16.mxu0 0
  %2927 = vmatpush1.bf16.msra.mxu0 0
  %2928 = vmatprep.subr.bf16.mxu0 0
  %2929 = vmatpush1.bf16.msra.mxu0 0
  %2930 = vmatprep.subr.bf16.mxu0 0
  %2931 = vmatpush1.bf16.msra.mxu0 0
  %2932 = vmatprep.subr.bf16.mxu0 0
  %2933 = vmatpush1.bf16.msra.mxu0 0
  %2934 = vmatprep.subr.bf16.mxu0 0
  %2935 = vmatpush1.bf16.msra.mxu0 0
  %2936 = vmatprep.subr.bf16.mxu0 0
  %2937 = vmatpush1.bf16.msra.mxu0 0
  %2938 = vmatprep.mubr.bf16.mxu0 0
  %2939 = vmatmul.mubr.bf16.gmra.mrb[0].mxu0 %v2815
  %v2940 = vpop.f32.mrb[0].mxu0
  %v2941 = vadd.f32 %v2812, %v2940
  %v2942 = vpop.f32.mrb[0].mxu0
  %v2943 = vadd.f32 %v2812, %v2942
  %v2944 = vpop.f32.mrb[0].mxu0
  %v2945 = vpop.f32.mrb[0].mxu0
  %2946 = vdwg.mxu0
  %2947 = vmatprep.subr.bf16.mxu0 %v2764
  %2948 = vmatpush1.bf16.msra.mxu0 %v2763
  %2949 = vmatprep.subr.bf16.mxu0 %v2780
  %2950 = vmatpush1.bf16.msra.mxu0 %v2779
  %2951 = vmatprep.subr.bf16.mxu0 %v2833
  %2952 = vmatpush1.bf16.msra.mxu0 %v2830
  %2953 = vmatprep.subr.bf16.mxu0 0
  %2954 = vmatpush1.bf16.msra.mxu0 0
  %2955 = vmatprep.subr.bf16.mxu0 0
  %2956 = vmatpush1.bf16.msra.mxu0 0
  %2957 = vmatprep.subr.bf16.mxu0 0
  %2958 = vmatpush1.bf16.msra.mxu0 0
  %2959 = vmatprep.subr.bf16.mxu0 0
  %2960 = vmatpush1.bf16.msra.mxu0 0
  %2961 = vmatprep.subr.bf16.mxu0 0
  %2962 = vmatpush1.bf16.msra.mxu0 0
  %2963 = vmatprep.subr.bf16.mxu0 0
  %2964 = vmatpush1.bf16.msra.mxu0 0
  %2965 = vmatprep.subr.bf16.mxu0 0
  %2966 = vmatpush1.bf16.msra.mxu0 0
  %2967 = vmatprep.subr.bf16.mxu0 0
  %2968 = vmatpush1.bf16.msra.mxu0 0
  %2969 = vmatprep.subr.bf16.mxu0 0
  %2970 = vmatpush1.bf16.msra.mxu0 0
  %2971 = vmatprep.subr.bf16.mxu0 0
  %2972 = vmatpush1.bf16.msra.mxu0 0
  %2973 = vmatprep.subr.bf16.mxu0 0
  %2974 = vmatpush1.bf16.msra.mxu0 0
  %2975 = vmatprep.subr.bf16.mxu0 0
  %2976 = vmatpush1.bf16.msra.mxu0 0
  %2977 = vmatprep.subr.bf16.mxu0 0
  %2978 = vmatpush1.bf16.msra.mxu0 0
  %2979 = vmatprep.mubr.bf16.mxu0 0
  %2980 = vmatmul.mubr.bf16.gmra.mrb[0].mxu0 %v2815
  %v2981 = vpop.f32.mrb[0].mxu0
  %v2982 = vadd.f32 %v2812, %v2981
  %v2983 = vpop.f32.mrb[0].mxu0
  %v2984 = vadd.f32 %v2812, %v2983
  %v2985 = vpop.f32.mrb[0].mxu0
  %v2986 = vpop.f32.mrb[0].mxu0
  %2987 = vdwg.mxu0
  %2988 = vmatprep.subr.bf16.mxu0 %v2766
  %2989 = vmatpush1.bf16.msra.mxu0 %v2765
  %2990 = vmatprep.subr.bf16.mxu0 %v2782
  %2991 = vmatpush1.bf16.msra.mxu0 %v2781
  %2992 = vmatprep.subr.bf16.mxu0 %v2839
  %2993 = vmatpush1.bf16.msra.mxu0 %v2836
  %2994 = vmatprep.subr.bf16.mxu0 0
  %2995 = vmatpush1.bf16.msra.mxu0 0
  %2996 = vmatprep.subr.bf16.mxu0 0
  %2997 = vmatpush1.bf16.msra.mxu0 0
  %2998 = vmatprep.subr.bf16.mxu0 0
  %2999 = vmatpush1.bf16.msra.mxu0 0
  %3000 = vmatprep.subr.bf16.mxu0 0
  %3001 = vmatpush1.bf16.msra.mxu0 0
  %3002 = vmatprep.subr.bf16.mxu0 0
  %3003 = vmatpush1.bf16.msra.mxu0 0
  %3004 = vmatprep.subr.bf16.mxu0 0
  %3005 = vmatpush1.bf16.msra.mxu0 0
  %3006 = vmatprep.subr.bf16.mxu0 0
  %3007 = vmatpush1.bf16.msra.mxu0 0
  %3008 = vmatprep.subr.bf16.mxu0 0
  %3009 = vmatpush1.bf16.msra.mxu0 0
  %3010 = vmatprep.subr.bf16.mxu0 0
  %3011 = vmatpush1.bf16.msra.mxu0 0
  %3012 = vmatprep.subr.bf16.mxu0 0
  %3013 = vmatpush1.bf16.msra.mxu0 0
  %3014 = vmatprep.subr.bf16.mxu0 0
  %3015 = vmatpush1.bf16.msra.mxu0 0
  %3016 = vmatprep.subr.bf16.mxu0 0
  %3017 = vmatpush1.bf16.msra.mxu0 0
  %3018 = vmatprep.subr.bf16.mxu0 0
  %3019 = vmatpush1.bf16.msra.mxu0 0
  %3020 = vmatprep.mubr.bf16.mxu0 0
  %3021 = vmatmul.mubr.bf16.gmra.mrb[0].mxu0 %v2815
  %v3022 = vpop.f32.mrb[0].mxu0
  %v3023 = vadd.f32 %v2812, %v3022
  %v3024 = vpop.f32.mrb[0].mxu0
  %v3025 = vadd.f32 %v2812, %v3024
  %v3026 = vpop.f32.mrb[0].mxu0
  %v3027 = vpop.f32.mrb[0].mxu0
  %3028 = vdwg.mxu0
  %3029 = vmatprep.subr.bf16.mxu0 %v2768
  %3030 = vmatpush1.bf16.msra.mxu0 %v2767
  %3031 = vmatprep.subr.bf16.mxu0 %v2784
  %3032 = vmatpush1.bf16.msra.mxu0 %v2783
  %3033 = vmatprep.subr.bf16.mxu0 %v2845
  %3034 = vmatpush1.bf16.msra.mxu0 %v2842
  %3035 = vmatprep.subr.bf16.mxu0 0
  %3036 = vmatpush1.bf16.msra.mxu0 0
  %3037 = vmatprep.subr.bf16.mxu0 0
  %3038 = vmatpush1.bf16.msra.mxu0 0
  %3039 = vmatprep.subr.bf16.mxu0 0
  %3040 = vmatpush1.bf16.msra.mxu0 0
  %3041 = vmatprep.subr.bf16.mxu0 0
  %3042 = vmatpush1.bf16.msra.mxu0 0
  %3043 = vmatprep.subr.bf16.mxu0 0
  %3044 = vmatpush1.bf16.msra.mxu0 0
  %3045 = vmatprep.subr.bf16.mxu0 0
  %3046 = vmatpush1.bf16.msra.mxu0 0
  %3047 = vmatprep.subr.bf16.mxu0 0
  %3048 = vmatpush1.bf16.msra.mxu0 0
  %3049 = vmatprep.subr.bf16.mxu0 0
  %3050 = vmatpush1.bf16.msra.mxu0 0
  %3051 = vmatprep.subr.bf16.mxu0 0
  %3052 = vmatpush1.bf16.msra.mxu0 0
  %3053 = vmatprep.subr.bf16.mxu0 0
  %3054 = vmatpush1.bf16.msra.mxu0 0
  %3055 = vmatprep.subr.bf16.mxu0 0
  %3056 = vmatpush1.bf16.msra.mxu0 0
  %3057 = vmatprep.subr.bf16.mxu0 0
  %3058 = vmatpush1.bf16.msra.mxu0 0
  %3059 = vmatprep.subr.bf16.mxu0 0
  %3060 = vmatpush1.bf16.msra.mxu0 0
  %3061 = vmatprep.mubr.bf16.mxu0 0
  %3062 = vmatmul.mubr.bf16.gmra.mrb[0].mxu0 %v2815
  %v3063 = vpop.f32.mrb[0].mxu0
  %v3064 = vadd.f32 %v2812, %v3063
  %v3065 = vpop.f32.mrb[0].mxu0
  %v3066 = vadd.f32 %v2812, %v3065
  %v3067 = vpop.f32.mrb[0].mxu0
  %v3068 = vpop.f32.mrb[0].mxu0
  %3069 = vdwg.mxu0
  %3070 = vmatprep.subr.bf16.mxu0 %v2770
  %3071 = vmatpush1.bf16.msra.mxu0 %v2769
  %3072 = vmatprep.subr.bf16.mxu0 %v2786
  %3073 = vmatpush1.bf16.msra.mxu0 %v2785
  %3074 = vmatprep.subr.bf16.mxu0 %v2851
  %3075 = vmatpush1.bf16.msra.mxu0 %v2848
  %3076 = vmatprep.subr.bf16.mxu0 0
  %3077 = vmatpush1.bf16.msra.mxu0 0
  %3078 = vmatprep.subr.bf16.mxu0 0
  %3079 = vmatpush1.bf16.msra.mxu0 0
  %3080 = vmatprep.subr.bf16.mxu0 0
  %3081 = vmatpush1.bf16.msra.mxu0 0
  %3082 = vmatprep.subr.bf16.mxu0 0
  %3083 = vmatpush1.bf16.msra.mxu0 0
  %3084 = vmatprep.subr.bf16.mxu0 0
  %3085 = vmatpush1.bf16.msra.mxu0 0
  %3086 = vmatprep.subr.bf16.mxu0 0
  %3087 = vmatpush1.bf16.msra.mxu0 0
  %3088 = vmatprep.subr.bf16.mxu0 0
  %3089 = vmatpush1.bf16.msra.mxu0 0
  %3090 = vmatprep.subr.bf16.mxu0 0
  %3091 = vmatpush1.bf16.msra.mxu0 0
  %3092 = vmatprep.subr.bf16.mxu0 0
  %3093 = vmatpush1.bf16.msra.mxu0 0
  %3094 = vmatprep.subr.bf16.mxu0 0
  %3095 = vmatpush1.bf16.msra.mxu0 0
  %3096 = vmatprep.subr.bf16.mxu0 0
  %3097 = vmatpush1.bf16.msra.mxu0 0
  %3098 = vmatprep.subr.bf16.mxu0 0
  %3099 = vmatpush1.bf16.msra.mxu0 0
  %3100 = vmatprep.subr.bf16.mxu0 0
  %3101 = vmatpush1.bf16.msra.mxu0 0
  %3102 = vmatprep.mubr.bf16.mxu0 0
  %3103 = vmatmul.mubr.bf16.gmra.mrb[0].mxu0 %v2815
  %v3104 = vpop.f32.mrb[0].mxu0
  %v3105 = vadd.f32 %v2812, %v3104
  %v3106 = vpop.f32.mrb[0].mxu0
  %v3107 = vadd.f32 %v2812, %v3106
  %v3108 = vpop.f32.mrb[0].mxu0
  %v3109 = vpop.f32.mrb[0].mxu0
  %3110 = vdwg.mxu0
  %3111 = vmatprep.subr.bf16.mxu0 %v2772
  %3112 = vmatpush1.bf16.msra.mxu0 %v2771
  %3113 = vmatprep.subr.bf16.mxu0 %v2788
  %3114 = vmatpush1.bf16.msra.mxu0 %v2787
  %3115 = vmatprep.subr.bf16.mxu0 %v2857
  %3116 = vmatpush1.bf16.msra.mxu0 %v2854
  %3117 = vmatprep.subr.bf16.mxu0 0
  %3118 = vmatpush1.bf16.msra.mxu0 0
  %3119 = vmatprep.subr.bf16.mxu0 0
  %3120 = vmatpush1.bf16.msra.mxu0 0
  %3121 = vmatprep.subr.bf16.mxu0 0
  %3122 = vmatpush1.bf16.msra.mxu0 0
  %3123 = vmatprep.subr.bf16.mxu0 0
  %3124 = vmatpush1.bf16.msra.mxu0 0
  %3125 = vmatprep.subr.bf16.mxu0 0
  %3126 = vmatpush1.bf16.msra.mxu0 0
  %3127 = vmatprep.subr.bf16.mxu0 0
  %3128 = vmatpush1.bf16.msra.mxu0 0
  %3129 = vmatprep.subr.bf16.mxu0 0
  %3130 = vmatpush1.bf16.msra.mxu0 0
  %3131 = vmatprep.subr.bf16.mxu0 0
  %3132 = vmatpush1.bf16.msra.mxu0 0
  %3133 = vmatprep.subr.bf16.mxu0 0
  %3134 = vmatpush1.bf16.msra.mxu0 0
  %3135 = vmatprep.subr.bf16.mxu0 0
  %3136 = vmatpush1.bf16.msra.mxu0 0
  %3137 = vmatprep.subr.bf16.mxu0 0
  %3138 = vmatpush1.bf16.msra.mxu0 0
  %3139 = vmatprep.subr.bf16.mxu0 0
  %3140 = vmatpush1.bf16.msra.mxu0 0
  %3141 = vmatprep.subr.bf16.mxu0 0
  %3142 = vmatpush1.bf16.msra.mxu0 0
  %3143 = vmatprep.mubr.bf16.mxu0 0
  %3144 = vmatmul.mubr.bf16.gmra.mrb[0].mxu0 %v2815
  %v3145 = vpop.f32.mrb[0].mxu0
  %v3146 = vadd.f32 %v2812, %v3145
  %v3147 = vpop.f32.mrb[0].mxu0
  %v3148 = vadd.f32 %v2812, %v3147
  %v3149 = vpop.f32.mrb[0].mxu0
  %v3150 = vpop.f32.mrb[0].mxu0
  %3151 = vdwg.mxu0
  %3152 = vmatprep.subr.bf16.mxu0 %v2774
  %3153 = vmatpush1.bf16.msra.mxu0 %v2773
  %3154 = vmatprep.subr.bf16.mxu0 %v2790
  %3155 = vmatpush1.bf16.msra.mxu0 %v2789
  %3156 = vmatprep.subr.bf16.mxu0 %v2863
  %3157 = vmatpush1.bf16.msra.mxu0 %v2860
  %3158 = vmatprep.subr.bf16.mxu0 0
  %3159 = vmatpush1.bf16.msra.mxu0 0
  %3160 = vmatprep.subr.bf16.mxu0 0
  %3161 = vmatpush1.bf16.msra.mxu0 0
  %3162 = vmatprep.subr.bf16.mxu0 0
  %3163 = vmatpush1.bf16.msra.mxu0 0
  %3164 = vmatprep.subr.bf16.mxu0 0
  %3165 = vmatpush1.bf16.msra.mxu0 0
  %3166 = vmatprep.subr.bf16.mxu0 0
  %3167 = vmatpush1.bf16.msra.mxu0 0
  %3168 = vmatprep.subr.bf16.mxu0 0
  %3169 = vmatpush1.bf16.msra.mxu0 0
  %3170 = vmatprep.subr.bf16.mxu0 0
  %3171 = vmatpush1.bf16.msra.mxu0 0
  %3172 = vmatprep.subr.bf16.mxu0 0
  %3173 = vmatpush1.bf16.msra.mxu0 0
  %3174 = vmatprep.subr.bf16.mxu0 0
  %3175 = vmatpush1.bf16.msra.mxu0 0
  %3176 = vmatprep.subr.bf16.mxu0 0
  %3177 = vmatpush1.bf16.msra.mxu0 0
  %3178 = vmatprep.subr.bf16.mxu0 0
  %3179 = vmatpush1.bf16.msra.mxu0 0
  %3180 = vmatprep.subr.bf16.mxu0 0
  %3181 = vmatpush1.bf16.msra.mxu0 0
  %3182 = vmatprep.subr.bf16.mxu0 0
  %3183 = vmatpush1.bf16.msra.mxu0 0
  %3184 = vmatprep.mubr.bf16.mxu0 0
  %3185 = vmatmul.mubr.bf16.gmra.mrb[0].mxu0 %v2815
  %v3186 = vpop.f32.mrb[0].mxu0
  %v3187 = vadd.f32 %v2812, %v3186
  %v3188 = vpop.f32.mrb[0].mxu0
  %v3189 = vadd.f32 %v2812, %v3188
  %v3190 = vpop.f32.mrb[0].mxu0
  %v3191 = vpop.f32.mrb[0].mxu0
  %3192 = vdwg.mxu0
  %v3193 = vadd.f32 %v2900, %v383
  %v3194 = vadd.f32 %v2902, %v385
  %v3195 = vadd.f32 %v2941, %v426
  %v3196 = vadd.f32 %v2943, %v428
  %v3197 = vadd.f32 %v2982, %v469
  %v3198 = vadd.f32 %v2984, %v471
  %v3199 = vadd.f32 %v3023, %v512
  %v3200 = vadd.f32 %v3025, %v514
  %v3201 = vadd.f32 %v3064, %v555
  %v3202 = vadd.f32 %v3066, %v557
  %v3203 = vadd.f32 %v3105, %v598
  %v3204 = vadd.f32 %v3107, %v600
  %v3205 = vadd.f32 %v3146, %v641
  %v3206 = vadd.f32 %v3148, %v643
  %v3207 = vadd.f32 %v3187, %v684
  %v3208 = vadd.f32 %v3189, %v686
  %v3209 = vadd.f32 %v3193, %v3194
  %v3210 = vadd.f32 %v3209, %v3195
  %v3211 = vadd.f32 %v3210, %v3196
  %v3212 = vadd.f32 %v3211, %v3197
  %v3213 = vadd.f32 %v3212, %v3198
  %v3214 = vadd.f32 %v3213, %v3199
  %v3215 = vadd.f32 %v3214, %v3200
  %v3216 = vadd.f32 %v3215, %v3201
  %v3217 = vadd.f32 %v3216, %v3202
  %v3218 = vadd.f32 %v3217, %v3203
  %v3219 = vadd.f32 %v3218, %v3204
  %v3220 = vadd.f32 %v3219, %v3205
  %v3221 = vadd.f32 %v3220, %v3206
  %v3222 = vadd.f32 %v3221, %v3207
  %vm3223 = vcmask 15360
  %v3224 = vsel %vm3223, %v3208, 0.0
  %v3225 = vadd.f32 %v3222, %v3224
  %3226 = vadd.xlane.f32.xlu0 %v3225
  %v3227 = vpop.xlane.xlu0 %3226
  %v3228 = vmul.f32 %v3227, %v727
  %v3229 = vmul.f32 %v3193, %v3193
  %v3230 = vmul.f32 %v3194, %v3194
  %v3231 = vmul.f32 %v3195, %v3195
  %v3232 = vmul.f32 %v3196, %v3196
  %v3233 = vmul.f32 %v3197, %v3197
  %v3234 = vmul.f32 %v3198, %v3198
  %v3235 = vmul.f32 %v3199, %v3199
  %v3236 = vmul.f32 %v3200, %v3200
  %v3237 = vmul.f32 %v3201, %v3201
  %v3238 = vmul.f32 %v3202, %v3202
  %v3239 = vmul.f32 %v3203, %v3203
  %v3240 = vmul.f32 %v3204, %v3204
  %v3241 = vmul.f32 %v3205, %v3205
  %v3242 = vmul.f32 %v3206, %v3206
  %v3243 = vmul.f32 %v3207, %v3207
  %v3244 = vmul.f32 %v3208, %v3208
  %v3245 = vadd.f32 %v3229, %v3230
  %v3246 = vadd.f32 %v3245, %v3231
  %v3247 = vadd.f32 %v3246, %v3232
  %v3248 = vadd.f32 %v3247, %v3233
  %v3249 = vadd.f32 %v3248, %v3234
  %v3250 = vadd.f32 %v3249, %v3235
  %v3251 = vadd.f32 %v3250, %v3236
  %v3252 = vadd.f32 %v3251, %v3237
  %v3253 = vadd.f32 %v3252, %v3238
  %v3254 = vadd.f32 %v3253, %v3239
  %v3255 = vadd.f32 %v3254, %v3240
  %v3256 = vadd.f32 %v3255, %v3241
  %v3257 = vadd.f32 %v3256, %v3242
  %v3258 = vadd.f32 %v3257, %v3243
  %v3259 = vsel %vm3223, %v3244, 0.0
  %v3260 = vadd.f32 %v3258, %v3259
  %3261 = vadd.xlane.f32.xlu0 %v3260
  %v3262 = vpop.xlane.xlu0 %3261
  %v3263 = vmul.f32 %v3262, %v727
  %v3264 = vmul.f32 %v3228, %v3228
  %v3265 = vsub.f32 %v3263, %v3264
  %v3266 = vsub.f32 %v3193, %v3228
  %v3267 = vsub.f32 %v3194, %v3228
  %v3268 = vsub.f32 %v3195, %v3228
  %v3269 = vsub.f32 %v3196, %v3228
  %v3270 = vsub.f32 %v3197, %v3228
  %v3271 = vsub.f32 %v3198, %v3228
  %v3272 = vsub.f32 %v3199, %v3228
  %v3273 = vsub.f32 %v3200, %v3228
  %v3274 = vsub.f32 %v3201, %v3228
  %v3275 = vsub.f32 %v3202, %v3228
  %v3276 = vsub.f32 %v3203, %v3228
  %v3277 = vsub.f32 %v3204, %v3228
  %v3278 = vsub.f32 %v3205, %v3228
  %v3279 = vsub.f32 %v3206, %v3228
  %v3280 = vsub.f32 %v3207, %v3228
  %v3281 = vsub.f32 %v3208, %v3228
  %v3282 = vadd.f32 %v3265, 0.0001
  %v3283 = vrsqrt.pop %v3282
  %v3284 = vmul.f32 %v3266, %v3283
  %v3285 = vmul.f32 %v3267, %v3283
  %v3286 = vmul.f32 %v3268, %v3283
  %v3287 = vmul.f32 %v3269, %v3283
  %v3288 = vmul.f32 %v3270, %v3283
  %v3289 = vmul.f32 %v3271, %v3283
  %v3290 = vmul.f32 %v3272, %v3283
  %v3291 = vmul.f32 %v3273, %v3283
  %v3292 = vmul.f32 %v3274, %v3283
  %v3293 = vmul.f32 %v3275, %v3283
  %v3294 = vmul.f32 %v3276, %v3283
  %v3295 = vmul.f32 %v3277, %v3283
  %v3296 = vmul.f32 %v3278, %v3283
  %v3297 = vmul.f32 %v3279, %v3283
  %v3298 = vmul.f32 %v3280, %v3283
  %v3299 = vmul.f32 %v3281, %v3283
  %v3300 = vld [vmem:[%s7] sm:$0xff]
  %3302 = vset.pattern.permute.xlu0 0
  %3303 = vperm.xlu0 %3302, %v3300
  %v3304 = vpop.permute.xlu0 %3303
  %v3306 = vmul.f32 %v3284, %v3304
  %v3307 = vmul.f32 %v3285, %v3304
  %v3308 = vmul.f32 %v3286, %v3304
  %v3309 = vmul.f32 %v3287, %v3304
  %v3310 = vmul.f32 %v3288, %v3304
  %v3311 = vmul.f32 %v3289, %v3304
  %v3312 = vmul.f32 %v3290, %v3304
  %v3313 = vmul.f32 %v3291, %v3304
  %v3314 = vmul.f32 %v3292, %v3304
  %v3315 = vmul.f32 %v3293, %v3304
  %v3316 = vmul.f32 %v3294, %v3304
  %v3317 = vmul.f32 %v3295, %v3304
  %v3318 = vmul.f32 %v3296, %v3304
  %v3319 = vmul.f32 %v3297, %v3304
  %v3320 = vmul.f32 %v3298, %v3304
  %v3321 = vmul.f32 %v3299, %v3304
  %v3322 = vld [vmem:[%s8] sm:$0xff]
  %3324 = vset.pattern.permute.xlu0 0
  %3325 = vperm.xlu0 %3324, %v3322
  %v3326 = vpop.permute.xlu0 %3325
  %v3328 = vadd.f32 %v3306, %v3326
  %v3329 = vadd.f32 %v3307, %v3326
  %v3330 = vadd.f32 %v3308, %v3326
  %v3331 = vadd.f32 %v3309, %v3326
  %v3332 = vadd.f32 %v3310, %v3326
  %v3333 = vadd.f32 %v3311, %v3326
  %v3334 = vadd.f32 %v3312, %v3326
  %v3335 = vadd.f32 %v3313, %v3326
  %v3336 = vadd.f32 %v3314, %v3326
  %v3337 = vadd.f32 %v3315, %v3326
  %v3338 = vadd.f32 %v3316, %v3326
  %v3339 = vadd.f32 %v3317, %v3326
  %v3340 = vadd.f32 %v3318, %v3326
  %v3341 = vadd.f32 %v3319, %v3326
  %v3342 = vadd.f32 %v3320, %v3326
  %v3343 = vadd.f32 %v3321, %v3326
  %vm3344 = vcmp.gt.f32.partialorder %v3328, 0.0
  %vm3345 = vcmp.gt.f32.partialorder %v3329, 0.0
  %vm3346 = vcmp.gt.f32.partialorder %v3330, 0.0
  %vm3347 = vcmp.gt.f32.partialorder %v3331, 0.0
  %vm3348 = vcmp.gt.f32.partialorder %v3332, 0.0
  %vm3349 = vcmp.gt.f32.partialorder %v3333, 0.0
  %vm3350 = vcmp.gt.f32.partialorder %v3334, 0.0
  %vm3351 = vcmp.gt.f32.partialorder %v3335, 0.0
  %vm3352 = vcmp.gt.f32.partialorder %v3336, 0.0
  %vm3353 = vcmp.gt.f32.partialorder %v3337, 0.0
  %vm3354 = vcmp.gt.f32.partialorder %v3338, 0.0
  %vm3355 = vcmp.gt.f32.partialorder %v3339, 0.0
  %vm3356 = vcmp.gt.f32.partialorder %v3340, 0.0
  %vm3357 = vcmp.gt.f32.partialorder %v3341, 0.0
  %vm3358 = vcmp.gt.f32.partialorder %v3342, 0.0
  %vm3359 = vcmp.gt.f32.partialorder %v3343, 0.0
  %v3360 = vmin.f32 %v3328, 0.0
  %v3361 = vmin.f32 %v3329, 0.0
  %v3362 = vmin.f32 %v3330, 0.0
  %v3363 = vmin.f32 %v3331, 0.0
  %v3364 = vmin.f32 %v3332, 0.0
  %v3365 = vmin.f32 %v3333, 0.0
  %v3366 = vmin.f32 %v3334, 0.0
  %v3367 = vmin.f32 %v3335, 0.0
  %v3368 = vmin.f32 %v3336, 0.0
  %v3369 = vmin.f32 %v3337, 0.0
  %v3370 = vmin.f32 %v3338, 0.0
  %v3371 = vmin.f32 %v3339, 0.0
  %v3372 = vmin.f32 %v3340, 0.0
  %v3373 = vmin.f32 %v3341, 0.0
  %v3374 = vmin.f32 %v3342, 0.0
  %v3375 = vmin.f32 %v3343, 0.0
  %v3376 = vmul.f32 %v3360, 1.442695
  %v3377 = vpow.pop %v3376
  %v3378 = vmul.f32 %v3361, 1.442695
  %v3379 = vpow.pop %v3378
  %v3380 = vmul.f32 %v3362, 1.442695
  %v3381 = vpow.pop %v3380
  %v3382 = vmul.f32 %v3363, 1.442695
  %v3383 = vpow.pop %v3382
  %v3384 = vmul.f32 %v3364, 1.442695
  %v3385 = vpow.pop %v3384
  %v3386 = vmul.f32 %v3365, 1.442695
  %v3387 = vpow.pop %v3386
  %v3388 = vmul.f32 %v3366, 1.442695
  %v3389 = vpow.pop %v3388
  %v3390 = vmul.f32 %v3367, 1.442695
  %v3391 = vpow.pop %v3390
  %v3392 = vmul.f32 %v3368, 1.442695
  %v3393 = vpow.pop %v3392
  %v3394 = vmul.f32 %v3369, 1.442695
  %v3395 = vpow.pop %v3394
  %v3396 = vmul.f32 %v3370, 1.442695
  %v3397 = vpow.pop %v3396
  %v3398 = vmul.f32 %v3371, 1.442695
  %v3399 = vpow.pop %v3398
  %v3400 = vmul.f32 %v3372, 1.442695
  %v3401 = vpow.pop %v3400
  %v3402 = vmul.f32 %v3373, 1.442695
  %v3403 = vpow.pop %v3402
  %v3404 = vmul.f32 %v3374, 1.442695
  %v3405 = vpow.pop %v3404
  %v3406 = vmul.f32 %v3375, 1.442695
  %v3407 = vpow.pop %v3406
  %v3408 = vsub.f32 %v3377, 1.0
  %v3409 = vsub.f32 %v3379, 1.0
  %v3410 = vsub.f32 %v3381, 1.0
  %v3411 = vsub.f32 %v3383, 1.0
  %v3412 = vsub.f32 %v3385, 1.0
  %v3413 = vsub.f32 %v3387, 1.0
  %v3414 = vsub.f32 %v3389, 1.0
  %v3415 = vsub.f32 %v3391, 1.0
  %v3416 = vsub.f32 %v3393, 1.0
  %v3417 = vsub.f32 %v3395, 1.0
  %v3418 = vsub.f32 %v3397, 1.0
  %v3419 = vsub.f32 %v3399, 1.0
  %v3420 = vsub.f32 %v3401, 1.0
  %v3421 = vsub.f32 %v3403, 1.0
  %v3422 = vsub.f32 %v3405, 1.0
  %v3423 = vsub.f32 %v3407, 1.0
  %v3424 = vsel %vm3344, %v3328, %v3408
  %v3425 = vsel %vm3345, %v3329, %v3409
  %v3426 = vsel %vm3346, %v3330, %v3410
  %v3427 = vsel %vm3347, %v3331, %v3411
  %v3428 = vsel %vm3348, %v3332, %v3412
  %v3429 = vsel %vm3349, %v3333, %v3413
  %v3430 = vsel %vm3350, %v3334, %v3414
  %v3431 = vsel %vm3351, %v3335, %v3415
  %v3432 = vsel %vm3352, %v3336, %v3416
  %v3433 = vsel %vm3353, %v3337, %v3417
  %v3434 = vsel %vm3354, %v3338, %v3418
  %v3435 = vsel %vm3355, %v3339, %v3419
  %v3436 = vsel %vm3356, %v3340, %v3420
  %v3437 = vsel %vm3357, %v3341, %v3421
  %v3438 = vsel %vm3358, %v3342, %v3422
  %v3439 = vsel %vm3359, %v3343, %v3423
  %3440 = vst [vmem:[%s10] sm:$0xff] %v3424
  %3441 = vst [vmem:[%s10 + $0x8] sm:$0xff] %v3425
  %3442 = vst [vmem:[%s10 + $0x10] sm:$0xff] %v3426
  %3443 = vst [vmem:[%s10 + $0x18] sm:$0xff] %v3427
  %3444 = vst [vmem:[%s10 + $0x20] sm:$0xff] %v3428
  %3445 = vst [vmem:[%s10 + $0x28] sm:$0xff] %v3429
  %3446 = vst [vmem:[%s10 + $0x30] sm:$0xff] %v3430
  %3447 = vst [vmem:[%s10 + $0x38] sm:$0xff] %v3431
  %3448 = vst [vmem:[%s10 + $0x40] sm:$0xff] %v3432
  %3449 = vst [vmem:[%s10 + $0x48] sm:$0xff] %v3433
  %3450 = vst [vmem:[%s10 + $0x50] sm:$0xff] %v3434
  %3451 = vst [vmem:[%s10 + $0x58] sm:$0xff] %v3435
  %3452 = vst [vmem:[%s10 + $0x60] sm:$0xff] %v3436
  %3453 = vst [vmem:[%s10 + $0x68] sm:$0xff] %v3437
  %3454 = vst [vmem:[%s10 + $0x70] sm:$0xff] %v3438
  %3455 = vst.msk [vmem:[%s10 + $0x78] sm:$0xff] %vm3223, %v3439
  // Predicated region
  $region42: #{res_up_forward.1} parent=0 // pred_check
    _
  $region43: #{res_up_forward.1} parent=0 // pred_check_branch
    %3457 = sbr.rel (0) target = $region45
  $region44: #{res_up_forward.1} parent=0 // pred_region
    _
  $region45: #{res_up_forward.1} parent=0 // pred_fallthru
    _
  // Predicated region
  $region46: #{res_up_forward.1} parent=0 // pred_check
    _
  $region47: #{res_up_forward.1} parent=0 // pred_check_branch
    %3459 = sbr.rel (0) target = $region49
  $region48: #{res_up_forward.1} parent=0 // pred_region
    _
  $region49: #{res_up_forward.1} parent=0 // pred_fallthru
    _

</llo_original>
